<compile_context>
chip_gen: v7x
topology: tpu7x:2x2x1
jax: 0.10.0
libtpu: 0.0.40
codegen_flags: <defaults>
</compile_context>

<pallas_src>
import jax
import jax.numpy as jnp
from jax.experimental import pallas as pl
from jax.experimental.pallas import tpu as pltpu

LANES = 128                       # lane width: pad every matmul N/K to this
MM_DTYPE = jnp.bfloat16           # MXU input dtype (f32 accumulate/epilogue)
VMEM_LIMIT = 32 * 1024 * 1024     # explicit scoped-VMEM cap (portable to v7x)


def _round_up(n, m):
    return (n + m - 1) // m * m


def _tile_m(m, cap):
    """Row-tile size (multiple of 64, <= cap) and padded row count."""
    t = min(cap, _round_up(m, 64))
    return t, _round_up(m, t)


# ---------------------------------------------------------------------------
# Kernel 1: fused (conv-as-matmul) + bias + ReLU + 2x2 max-pool
#   p_ref : [4, TM, Kp]  bf16   (4 pool taps of im2col patches)
#   w_ref : [Kp, 128]    bf16
#   b_ref : [1, 128]     f32
#   o_ref : [TM, 128]    bf16
# pool(relu(y + b)) == relu(max_t(y_t) + b) since bias-add/ReLU are monotone.
# ---------------------------------------------------------------------------
def _conv_relu_pool_kernel(p_ref, w_ref, b_ref, o_ref):
    w = w_ref[...]
    y = jnp.dot(p_ref[0], w, preferred_element_type=jnp.float32)
    for t in range(1, 4):
        y = jnp.maximum(y, jnp.dot(p_ref[t], w,
                                   preferred_element_type=jnp.float32))
    o_ref[...] = jnp.maximum(y + b_ref[...], 0.0).astype(o_ref.dtype)


def conv_relu_pool(x, w_pad, b_pad, *, tile_cap=256):
    """x: [B,H,W,Cin] NHWC; w_pad: [Kp,128]; b_pad: [1,128] -> [B,PH,PW,128]."""
    B, H, W, C = x.shape
    k = 5
    OH, OW = H - k + 1, W - k + 1
    PH, PW = OH // 2, OW // 2
    # im2col (plain-JAX glue), column order (kh, kw, cin) to match w_pad.
    # NOTE: could be moved fully in-kernel with per-tap accumulation to cut
    # the patches HBM traffic further; at these sizes the fused pool + dense
    # lanes dominate the win.
    cols = [x[:, i:i + OH, j:j + OW, :] for i in range(k) for j in range(k)]
    p = jnp.concatenate(cols, axis=-1)                        # [B,OH,OW,25*C]
    KK = k * k * C
    # Group the 4 taps of each 2x2 pool window into a leading dim.
    p = p.reshape(B, PH, 2, PW, 2, KK)
    p = jnp.transpose(p, (2, 4, 0, 1, 3, 5)).reshape(4, B * PH * PW, KK)
    M = B * PH * PW
    Kp = w_pad.shape[0]
    tm, Mp = _tile_m(M, tile_cap)
    p = jnp.pad(p, ((0, 0), (0, Mp - M), (0, Kp - KK))).astype(MM_DTYPE)

    out = pl.pallas_call(
        _conv_relu_pool_kernel,
        out_shape=jax.ShapeDtypeStruct((Mp, LANES), MM_DTYPE),
        grid=(Mp // tm,),
        in_specs=[
            pl.BlockSpec((4, tm, Kp), lambda m: (0, m, 0)),
            pl.BlockSpec((Kp, LANES), lambda m: (0, 0)),
            pl.BlockSpec((1, LANES), lambda m: (0, 0)),
        ],
        out_specs=pl.BlockSpec((tm, LANES), lambda m: (m, 0)),
        compiler_params=pltpu.CompilerParams(
            dimension_semantics=("parallel",),
            vmem_limit_bytes=VMEM_LIMIT),
    )(p, w_pad, b_pad)
    return out[:M].reshape(B, PH, PW, LANES)


# ---------------------------------------------------------------------------
# Kernel 2: fused FC stack  fc1 -> ReLU -> fc2 -> ReLU -> fc3
#   z_ref : [TB, 3200] bf16 ; weights [K,128]/[128,128] bf16 ; biases f32
#   o_ref : [TB, 128] f32  (real logits in lanes 0..9)
# ---------------------------------------------------------------------------
def _fc_stack_kernel(z_ref, w1_ref, b1_ref, w2_ref, b2_ref, w3_ref, b3_ref,
                     o_ref):
    h = jnp.dot(z_ref[...], w1_ref[...], preferred_element_type=jnp.float32)
    h = jnp.maximum(h + b1_ref[...], 0.0).astype(w2_ref.dtype)
    h = jnp.dot(h, w2_ref[...], preferred_element_type=jnp.float32)
    h = jnp.maximum(h + b2_ref[...], 0.0).astype(w3_ref.dtype)
    h = jnp.dot(h, w3_ref[...], preferred_element_type=jnp.float32)
    o_ref[...] = (h + b3_ref[...]).astype(o_ref.dtype)


def fc_stack(z, w1, b1, w2, b2, w3, b3, *, tile_cap=256):
    B, K = z.shape
    assert w1.shape[0] == K
    tb, Bp = _tile_m(B, tile_cap)
    z = jnp.pad(z, ((0, Bp - B), (0, 0))).astype(MM_DTYPE)
    out = pl.pallas_call(
        _fc_stack_kernel,
        out_shape=jax.ShapeDtypeStruct((Bp, LANES), jnp.float32),
        grid=(Bp // tb,),
        in_specs=[
            pl.BlockSpec((tb, K), lambda m: (m, 0)),
            pl.BlockSpec((K, LANES), lambda m: (0, 0)),
            pl.BlockSpec((1, LANES), lambda m: (0, 0)),
            pl.BlockSpec((LANES, LANES), lambda m: (0, 0)),
            pl.BlockSpec((1, LANES), lambda m: (0, 0)),
            pl.BlockSpec((LANES, LANES), lambda m: (0, 0)),
            pl.BlockSpec((1, LANES), lambda m: (0, 0)),
        ],
        out_specs=pl.BlockSpec((tb, LANES), lambda m: (m, 0)),
        compiler_params=pltpu.CompilerParams(
            dimension_semantics=("parallel",),
            vmem_limit_bytes=VMEM_LIMIT),
    )(z, w1, b1, w2, b2, w3, b3)
    return out[:B, :10]


# ---------------------------------------------------------------------------
# Parameters: PyTorch-style init, then one-time packing (pad/permute/bf16).
# ---------------------------------------------------------------------------
def init_params(key):
    def uniform(k, shape, fan_in):
        bound = 1.0 / (fan_in ** 0.5)
        return jax.random.uniform(k, shape, jnp.float32, -bound, bound)

    ks = jax.random.split(key, 10)
    return {
        "conv1_w": uniform(ks[0], (6, 3, 5, 5), 3 * 25),
        "conv1_b": uniform(ks[1], (6,), 3 * 25),
        "conv2_w": uniform(ks[2], (16, 6, 5, 5), 6 * 25),
        "conv2_b": uniform(ks[3], (16,), 6 * 25),
        "fc1_w": uniform(ks[4], (120, 400), 400),
        "fc1_b": uniform(ks[5], (120,), 400),
        "fc2_w": uniform(ks[6], (84, 120), 120),
        "fc2_b": uniform(ks[7], (84,), 120),
        "fc3_w": uniform(ks[8], (10, 84), 84),
        "fc3_b": uniform(ks[9], (10,), 84),
    }


def _pad_to(a, shape):
    return jnp.pad(a, [(0, s - d) for d, s in zip(a.shape, shape)])


def pack_params(p):
    """One-time: pad K/N to 128 multiples, fold flatten perm into fc1, bf16."""
    def conv_w(w):                       # torch [Cout,Cin,KH,KW] -> [Kp,128]
        co, ci, kh, kw = w.shape
        m = jnp.transpose(w, (2, 3, 1, 0)).reshape(kh * kw * ci, co)
        return _pad_to(m, (_round_up(m.shape[0], LANES), LANES)).astype(MM_DTYPE)

    def vec_b(b):
        return _pad_to(b, (LANES,)).reshape(1, LANES).astype(jnp.float32)

    def fc_w(w):                         # torch [out,in] -> [in_pad, 128]
        wt = w.T
        return _pad_to(wt, (_round_up(wt.shape[0], LANES), LANES)).astype(MM_DTYPE)

    # fc1: inputs arrive flattened from our [B,5,5,128] NHWC(-padded) tensor,
    # i.e. index (h*5+w)*128+c, while torch.flatten expects c*25+h*5+w.
    # Permute + pad fc1's columns once here so the forward pass needs no
    # per-step transpose.
    w1 = p["fc1_w"].T.reshape(16, 5, 5, 120)          # [c,h,w,n]
    w1 = jnp.transpose(w1, (1, 2, 0, 3))              # [h,w,c,n]
    w1 = _pad_to(w1, (5, 5, LANES, LANES)).reshape(5 * 5 * LANES, LANES)

    return {
        "c1_w": conv_w(p["conv1_w"]), "c1_b": vec_b(p["conv1_b"]),
        "c2_w": conv_w(p["conv2_w"]), "c2_b": vec_b(p["conv2_b"]),
        "fc1_w": w1.astype(MM_DTYPE), "fc1_b": vec_b(p["fc1_b"]),
        "fc2_w": fc_w(p["fc2_w"]), "fc2_b": vec_b(p["fc2_b"]),
        "fc3_w": fc_w(p["fc3_w"]), "fc3_b": vec_b(p["fc3_b"]),
    }


# ---------------------------------------------------------------------------
# Forward pass (matches Net.forward semantics)
# ---------------------------------------------------------------------------
@jax.jit
def net_forward(packed, x_nchw):
    # x_nchw: [B, 3, 32, 32]
    x = jnp.transpose(x_nchw, (0, 2, 3, 1))                      # NHWC, once
    x = conv_relu_pool(x, packed["c1_w"], packed["c1_b"])        # [B,14,14,128]
    # channels >= 6 are exact zeros; drop them so conv2's K stays small.
    x = conv_relu_pool(x[..., :6], packed["c2_w"], packed["c2_b"])  # [B,5,5,128]
    z = x.reshape(x.shape[0], -1)                                # [B, 3200]
    return fc_stack(z, packed["fc1_w"], packed["fc1_b"],
                    packed["fc2_w"], packed["fc2_b"],
                    packed["fc3_w"], packed["fc3_b"])            # [B, 10]


if __name__ == "__main__":
    key = jax.random.PRNGKey(0)
    pkey, xkey = jax.random.split(key)
    params = init_params(pkey)
    packed = pack_params(params)
    # 32x32 spatial is required by the module (fc1 expects 16*5*5 features).
    x = jax.random.normal(xkey, (2, 3, 32, 32), jnp.float32)
    out = jax.block_until_ready(net_forward(packed, x))
    assert out.shape == (2, 10), out.shape
    print("KERNEL_OK")
</pallas_src>

<mosaic_0001>
module attributes {stable_mosaic.version = 11 : i64} {
  func.func @_conv_relu_pool_kernel(%arg0: i32, %arg1: memref<4x256x128xbf16, #tpu.memory_space<vmem>>, %arg2: memref<128x128xbf16, #tpu.memory_space<vmem>>, %arg3: memref<1x128xf32, #tpu.memory_space<vmem>>, %arg4: memref<256x128xbf16, #tpu.memory_space<vmem>>) attributes {dimension_semantics = [#tpu.dimension_semantics<parallel>], iteration_bounds = array<i64: 2>, scalar_prefetch = 0 : i64, scratch_operands = 0 : i64, tpu.core_type = #tpu.core_type<tc>, window_params = [{transform_indices = @transform_0, window_bounds = array<i64: 4, 256, 128>}, {pipeline_mode = #tpu.pipeline_mode<synchronous>, transform_indices = @transform_1, window_bounds = array<i64: 128, 128>}, {pipeline_mode = #tpu.pipeline_mode<synchronous>, transform_indices = @transform_2, window_bounds = array<i64: 1, 128>}, {transform_indices = @transform_3, window_bounds = array<i64: 256, 128>}]} {
    %c0 = arith.constant 0 : index
    %c0_0 = arith.constant 0 : index
    %0 = vector.load %arg2[%c0, %c0_0] : memref<128x128xbf16, #tpu.memory_space<vmem>>, vector<128x128xbf16>
    %c0_1 = arith.constant 0 : index
    %c0_2 = arith.constant 0 : index
    %c0_3 = arith.constant 0 : index
    %1 = vector.load %arg1[%c0_1, %c0_2, %c0_3] : memref<4x256x128xbf16, #tpu.memory_space<vmem>>, vector<1x256x128xbf16>
    %2 = vector.shape_cast %1 : vector<1x256x128xbf16> to vector<256x128xbf16>
    %cst = arith.constant dense<0.000000e+00> : vector<256x128xf32>
    %3 = tpu.matmul %2, %0, %cst {dimension_numbers = #tpu.dot_dimension_numbers<[1], [0], [0], [1], [0, 0, 1, 1], [], []>} : vector<256x128xbf16>, vector<128x128xbf16>, vector<256x128xf32> -> vector<256x128xf32>
    %c1 = arith.constant 1 : index
    %c0_4 = arith.constant 0 : index
    %c0_5 = arith.constant 0 : index
    %4 = vector.load %arg1[%c1, %c0_4, %c0_5] : memref<4x256x128xbf16, #tpu.memory_space<vmem>>, vector<1x256x128xbf16>
    %5 = vector.shape_cast %4 : vector<1x256x128xbf16> to vector<256x128xbf16>
    %cst_6 = arith.constant dense<0.000000e+00> : vector<256x128xf32>
    %6 = tpu.matmul %5, %0, %cst_6 {dimension_numbers = #tpu.dot_dimension_numbers<[1], [0], [0], [1], [0, 0, 1, 1], [], []>} : vector<256x128xbf16>, vector<128x128xbf16>, vector<256x128xf32> -> vector<256x128xf32>
    %7 = arith.maximumf %3, %6 : vector<256x128xf32>
    %c2 = arith.constant 2 : index
    %c0_7 = arith.constant 0 : index
    %c0_8 = arith.constant 0 : index
    %8 = vector.load %arg1[%c2, %c0_7, %c0_8] : memref<4x256x128xbf16, #tpu.memory_space<vmem>>, vector<1x256x128xbf16>
    %9 = vector.shape_cast %8 : vector<1x256x128xbf16> to vector<256x128xbf16>
    %cst_9 = arith.constant dense<0.000000e+00> : vector<256x128xf32>
    %10 = tpu.matmul %9, %0, %cst_9 {dimension_numbers = #tpu.dot_dimension_numbers<[1], [0], [0], [1], [0, 0, 1, 1], [], []>} : vector<256x128xbf16>, vector<128x128xbf16>, vector<256x128xf32> -> vector<256x128xf32>
    %11 = arith.maximumf %7, %10 : vector<256x128xf32>
    %c3 = arith.constant 3 : index
    %c0_10 = arith.constant 0 : index
    %c0_11 = arith.constant 0 : index
    %12 = vector.load %arg1[%c3, %c0_10, %c0_11] : memref<4x256x128xbf16, #tpu.memory_space<vmem>>, vector<1x256x128xbf16>
    %13 = vector.shape_cast %12 : vector<1x256x128xbf16> to vector<256x128xbf16>
    %cst_12 = arith.constant dense<0.000000e+00> : vector<256x128xf32>
    %14 = tpu.matmul %13, %0, %cst_12 {dimension_numbers = #tpu.dot_dimension_numbers<[1], [0], [0], [1], [0, 0, 1, 1], [], []>} : vector<256x128xbf16>, vector<128x128xbf16>, vector<256x128xf32> -> vector<256x128xf32>
    %15 = arith.maximumf %11, %14 : vector<256x128xf32>
    %c0_13 = arith.constant 0 : index
    %c0_14 = arith.constant 0 : index
    %16 = vector.load %arg3[%c0_13, %c0_14] : memref<1x128xf32, #tpu.memory_space<vmem>>, vector<1x128xf32>
    %17 = vector.broadcast %16 : vector<1x128xf32> to vector<256x128xf32>
    %18 = arith.addf %15, %17 : vector<256x128xf32>
    %cst_15 = arith.constant 0.000000e+00 : f32
    %19 = vector.broadcast %cst_15 : f32 to vector<256x128xf32>
    %20 = arith.maximumf %18, %19 : vector<256x128xf32>
    %21 = arith.truncf %20 : vector<256x128xf32> to vector<256x128xbf16>
    %c0_16 = arith.constant 0 : index
    %c0_17 = arith.constant 0 : index
    %22 = vector.load %arg4[%c0_16, %c0_17] : memref<256x128xbf16, #tpu.memory_space<vmem>>, vector<256x128xbf16>
    tpu.vector_store %arg4[%c0_16, %c0_17], %21 {strides = array<i32>} : memref<256x128xbf16, #tpu.memory_space<vmem>>, vector<256x128xbf16>,
    return
  }
  func.func @transform_0(%arg0: i32) -> (i32, i32, i32) {
    %c0_i32 = arith.constant 0 : i32
    %c0_i32_0 = arith.constant 0 : i32
    %c0_i32_1 = arith.constant 0 : i32
    return %c0_i32, %arg0, %c0_i32_0 : i32, i32, i32
  }
  func.func @transform_1(%arg0: i32) -> (i32, i32) {
    %c0_i32 = arith.constant 0 : i32
    %c0_i32_0 = arith.constant 0 : i32
    %c0_i32_1 = arith.constant 0 : i32
    return %c0_i32, %c0_i32_0 : i32, i32
  }
  func.func @transform_2(%arg0: i32) -> (i32, i32) {
    %c0_i32 = arith.constant 0 : i32
    %c0_i32_0 = arith.constant 0 : i32
    %c0_i32_1 = arith.constant 0 : i32
    return %c0_i32, %c0_i32_0 : i32, i32
  }
  func.func @transform_3(%arg0: i32) -> (i32, i32) {
    %c0_i32 = arith.constant 0 : i32
    %c0_i32_0 = arith.constant 0 : i32
    return %arg0, %c0_i32 : i32, i32
  }
}

module attributes {stable_mosaic.version = 11 : i64} {
  func.func @_conv_relu_pool_kernel(%arg0: i32, %arg1: memref<4x64x256xbf16, #tpu.memory_space<vmem>>, %arg2: memref<256x128xbf16, #tpu.memory_space<vmem>>, %arg3: memref<1x128xf32, #tpu.memory_space<vmem>>, %arg4: memref<64x128xbf16, #tpu.memory_space<vmem>>) attributes {dimension_semantics = [#tpu.dimension_semantics<parallel>], iteration_bounds = array<i64: 1>, scalar_prefetch = 0 : i64, scratch_operands = 0 : i64, tpu.core_type = #tpu.core_type<tc>, window_params = [{transform_indices = @transform_0, window_bounds = array<i64: 4, 64, 256>}, {pipeline_mode = #tpu.pipeline_mode<synchronous>, transform_indices = @transform_1, window_bounds = array<i64: 256, 128>}, {pipeline_mode = #tpu.pipeline_mode<synchronous>, transform_indices = @transform_2, window_bounds = array<i64: 1, 128>}, {transform_indices = @transform_3, window_bounds = array<i64: 64, 128>}]} {
    %c0 = arith.constant 0 : index
    %c0_0 = arith.constant 0 : index
    %0 = vector.load %arg2[%c0, %c0_0] : memref<256x128xbf16, #tpu.memory_space<vmem>>, vector<256x128xbf16>
    %c0_1 = arith.constant 0 : index
    %c0_2 = arith.constant 0 : index
    %c0_3 = arith.constant 0 : index
    %1 = vector.load %arg1[%c0_1, %c0_2, %c0_3] : memref<4x64x256xbf16, #tpu.memory_space<vmem>>, vector<1x64x256xbf16>
    %2 = vector.shape_cast %1 : vector<1x64x256xbf16> to vector<64x256xbf16>
    %cst = arith.constant dense<0.000000e+00> : vector<64x128xf32>
    %3 = tpu.matmul %2, %0, %cst {dimension_numbers = #tpu.dot_dimension_numbers<[1], [0], [0], [1], [0, 0, 1, 1], [], []>} : vector<64x256xbf16>, vector<256x128xbf16>, vector<64x128xf32> -> vector<64x128xf32>
    %c1 = arith.constant 1 : index
    %c0_4 = arith.constant 0 : index
    %c0_5 = arith.constant 0 : index
    %4 = vector.load %arg1[%c1, %c0_4, %c0_5] : memref<4x64x256xbf16, #tpu.memory_space<vmem>>, vector<1x64x256xbf16>
    %5 = vector.shape_cast %4 : vector<1x64x256xbf16> to vector<64x256xbf16>
    %cst_6 = arith.constant dense<0.000000e+00> : vector<64x128xf32>
    %6 = tpu.matmul %5, %0, %cst_6 {dimension_numbers = #tpu.dot_dimension_numbers<[1], [0], [0], [1], [0, 0, 1, 1], [], []>} : vector<64x256xbf16>, vector<256x128xbf16>, vector<64x128xf32> -> vector<64x128xf32>
    %7 = arith.maximumf %3, %6 : vector<64x128xf32>
    %c2 = arith.constant 2 : index
    %c0_7 = arith.constant 0 : index
    %c0_8 = arith.constant 0 : index
    %8 = vector.load %arg1[%c2, %c0_7, %c0_8] : memref<4x64x256xbf16, #tpu.memory_space<vmem>>, vector<1x64x256xbf16>
    %9 = vector.shape_cast %8 : vector<1x64x256xbf16> to vector<64x256xbf16>
    %cst_9 = arith.constant dense<0.000000e+00> : vector<64x128xf32>
    %10 = tpu.matmul %9, %0, %cst_9 {dimension_numbers = #tpu.dot_dimension_numbers<[1], [0], [0], [1], [0, 0, 1, 1], [], []>} : vector<64x256xbf16>, vector<256x128xbf16>, vector<64x128xf32> -> vector<64x128xf32>
    %11 = arith.maximumf %7, %10 : vector<64x128xf32>
    %c3 = arith.constant 3 : index
    %c0_10 = arith.constant 0 : index
    %c0_11 = arith.constant 0 : index
    %12 = vector.load %arg1[%c3, %c0_10, %c0_11] : memref<4x64x256xbf16, #tpu.memory_space<vmem>>, vector<1x64x256xbf16>
    %13 = vector.shape_cast %12 : vector<1x64x256xbf16> to vector<64x256xbf16>
    %cst_12 = arith.constant dense<0.000000e+00> : vector<64x128xf32>
    %14 = tpu.matmul %13, %0, %cst_12 {dimension_numbers = #tpu.dot_dimension_numbers<[1], [0], [0], [1], [0, 0, 1, 1], [], []>} : vector<64x256xbf16>, vector<256x128xbf16>, vector<64x128xf32> -> vector<64x128xf32>
    %15 = arith.maximumf %11, %14 : vector<64x128xf32>
    %c0_13 = arith.constant 0 : index
    %c0_14 = arith.constant 0 : index
    %16 = vector.load %arg3[%c0_13, %c0_14] : memref<1x128xf32, #tpu.memory_space<vmem>>, vector<1x128xf32>
    %17 = vector.broadcast %16 : vector<1x128xf32> to vector<64x128xf32>
    %18 = arith.addf %15, %17 : vector<64x128xf32>
    %cst_15 = arith.constant 0.000000e+00 : f32
    %19 = vector.broadcast %cst_15 : f32 to vector<64x128xf32>
    %20 = arith.maximumf %18, %19 : vector<64x128xf32>
    %21 = arith.truncf %20 : vector<64x128xf32> to vector<64x128xbf16>
    %c0_16 = arith.constant 0 : index
    %c0_17 = arith.constant 0 : index
    %22 = vector.load %arg4[%c0_16, %c0_17] : memref<64x128xbf16, #tpu.memory_space<vmem>>, vector<64x128xbf16>
    tpu.vector_store %arg4[%c0_16, %c0_17], %21 {strides = array<i32>} : memref<64x128xbf16, #tpu.memory_space<vmem>>, vector<64x128xbf16>,
    return
  }
  func.func @transform_0(%arg0: i32) -> (i32, i32, i32) {
    %c0_i32 = arith.constant 0 : i32
    %c0_i32_0 = arith.constant 0 : i32
    %c0_i32_1 = arith.constant 0 : i32
    return %c0_i32, %arg0, %c0_i32_0 : i32, i32, i32
  }
  func.func @transform_1(%arg0: i32) -> (i32, i32) {
    %c0_i32 = arith.constant 0 : i32
    %c0_i32_0 = arith.constant 0 : i32
    %c0_i32_1 = arith.constant 0 : i32
    return %c0_i32, %c0_i32_0 : i32, i32
  }
  func.func @transform_2(%arg0: i32) -> (i32, i32) {
    %c0_i32 = arith.constant 0 : i32
    %c0_i32_0 = arith.constant 0 : i32
    %c0_i32_1 = arith.constant 0 : i32
    return %c0_i32, %c0_i32_0 : i32, i32
  }
  func.func @transform_3(%arg0: i32) -> (i32, i32) {
    %c0_i32 = arith.constant 0 : i32
    %c0_i32_0 = arith.constant 0 : i32
    return %arg0, %c0_i32 : i32, i32
  }
}

module attributes {stable_mosaic.version = 11 : i64} {
  func.func @_fc_stack_kernel(%arg0: i32, %arg1: memref<64x3200xbf16, #tpu.memory_space<vmem>>, %arg2: memref<3200x128xbf16, #tpu.memory_space<vmem>>, %arg3: memref<1x128xf32, #tpu.memory_space<vmem>>, %arg4: memref<128x128xbf16, #tpu.memory_space<vmem>>, %arg5: memref<1x128xf32, #tpu.memory_space<vmem>>, %arg6: memref<128x128xbf16, #tpu.memory_space<vmem>>, %arg7: memref<1x128xf32, #tpu.memory_space<vmem>>, %arg8: memref<64x128xf32, #tpu.memory_space<vmem>>) attributes {dimension_semantics = [#tpu.dimension_semantics<parallel>], iteration_bounds = array<i64: 1>, scalar_prefetch = 0 : i64, scratch_operands = 0 : i64, tpu.core_type = #tpu.core_type<tc>, window_params = [{transform_indices = @transform_0, window_bounds = array<i64: 64, 3200>}, {pipeline_mode = #tpu.pipeline_mode<synchronous>, transform_indices = @transform_1, window_bounds = array<i64: 3200, 128>}, {pipeline_mode = #tpu.pipeline_mode<synchronous>, transform_indices = @transform_2, window_bounds = array<i64: 1, 128>}, {pipeline_mode = #tpu.pipeline_mode<synchronous>, transform_indices = @transform_3, window_bounds = array<i64: 128, 128>}, {pipeline_mode = #tpu.pipeline_mode<synchronous>, transform_indices = @transform_4, window_bounds = array<i64: 1, 128>}, {pipeline_mode = #tpu.pipeline_mode<synchronous>, transform_indices = @transform_5, window_bounds = array<i64: 128, 128>}, {pipeline_mode = #tpu.pipeline_mode<synchronous>, transform_indices = @transform_6, window_bounds = array<i64: 1, 128>}, {transform_indices = @transform_7, window_bounds = array<i64: 64, 128>}]} {
    %c0 = arith.constant 0 : index
    %c0_0 = arith.constant 0 : index
    %0 = vector.load %arg1[%c0, %c0_0] : memref<64x3200xbf16, #tpu.memory_space<vmem>>, vector<64x3200xbf16>
    %c0_1 = arith.constant 0 : index
    %c0_2 = arith.constant 0 : index
    %1 = vector.load %arg2[%c0_1, %c0_2] : memref<3200x128xbf16, #tpu.memory_space<vmem>>, vector<3200x128xbf16>
    %cst = arith.constant dense<0.000000e+00> : vector<64x128xf32>
    %2 = tpu.matmul %0, %1, %cst {dimension_numbers = #tpu.dot_dimension_numbers<[1], [0], [0], [1], [0, 0, 1, 1], [], []>} : vector<64x3200xbf16>, vector<3200x128xbf16>, vector<64x128xf32> -> vector<64x128xf32>
    %c0_3 = arith.constant 0 : index
    %c0_4 = arith.constant 0 : index
    %3 = vector.load %arg3[%c0_3, %c0_4] : memref<1x128xf32, #tpu.memory_space<vmem>>, vector<1x128xf32>
    %4 = vector.broadcast %3 : vector<1x128xf32> to vector<64x128xf32>
    %5 = arith.addf %2, %4 : vector<64x128xf32>
    %cst_5 = arith.constant 0.000000e+00 : f32
    %6 = vector.broadcast %cst_5 : f32 to vector<64x128xf32>
    %7 = arith.maximumf %5, %6 : vector<64x128xf32>
    %8 = arith.truncf %7 : vector<64x128xf32> to vector<64x128xbf16>
    %c0_6 = arith.constant 0 : index
    %c0_7 = arith.constant 0 : index
    %9 = vector.load %arg4[%c0_6, %c0_7] : memref<128x128xbf16, #tpu.memory_space<vmem>>, vector<128x128xbf16>
    %cst_8 = arith.constant dense<0.000000e+00> : vector<64x128xf32>
    %10 = tpu.matmul %8, %9, %cst_8 {dimension_numbers = #tpu.dot_dimension_numbers<[1], [0], [0], [1], [0, 0, 1, 1], [], []>} : vector<64x128xbf16>, vector<128x128xbf16>, vector<64x128xf32> -> vector<64x128xf32>
    %c0_9 = arith.constant 0 : index
    %c0_10 = arith.constant 0 : index
    %11 = vector.load %arg5[%c0_9, %c0_10] : memref<1x128xf32, #tpu.memory_space<vmem>>, vector<1x128xf32>
    %12 = vector.broadcast %11 : vector<1x128xf32> to vector<64x128xf32>
    %13 = arith.addf %10, %12 : vector<64x128xf32>
    %cst_11 = arith.constant 0.000000e+00 : f32
    %14 = vector.broadcast %cst_11 : f32 to vector<64x128xf32>
    %15 = arith.maximumf %13, %14 : vector<64x128xf32>
    %16 = arith.truncf %15 : vector<64x128xf32> to vector<64x128xbf16>
    %c0_12 = arith.constant 0 : index
    %c0_13 = arith.constant 0 : index
    %17 = vector.load %arg6[%c0_12, %c0_13] : memref<128x128xbf16, #tpu.memory_space<vmem>>, vector<128x128xbf16>
    %cst_14 = arith.constant dense<0.000000e+00> : vector<64x128xf32>
    %18 = tpu.matmul %16, %17, %cst_14 {dimension_numbers = #tpu.dot_dimension_numbers<[1], [0], [0], [1], [0, 0, 1, 1], [], []>} : vector<64x128xbf16>, vector<128x128xbf16>, vector<64x128xf32> -> vector<64x128xf32>
    %c0_15 = arith.constant 0 : index
    %c0_16 = arith.constant 0 : index
    %19 = vector.load %arg7[%c0_15, %c0_16] : memref<1x128xf32, #tpu.memory_space<vmem>>, vector<1x128xf32>
    %20 = vector.broadcast %19 : vector<1x128xf32> to vector<64x128xf32>
    %21 = arith.addf %18, %20 : vector<64x128xf32>
    %c0_17 = arith.constant 0 : index
    %c0_18 = arith.constant 0 : index
    %22 = vector.load %arg8[%c0_17, %c0_18] : memref<64x128xf32, #tpu.memory_space<vmem>>, vector<64x128xf32>
    tpu.vector_store %arg8[%c0_17, %c0_18], %21 {strides = array<i32>} : memref<64x128xf32, #tpu.memory_space<vmem>>, vector<64x128xf32>,
    return
  }
  func.func @transform_0(%arg0: i32) -> (i32, i32) {
    %c0_i32 = arith.constant 0 : i32
    %c0_i32_0 = arith.constant 0 : i32
    return %arg0, %c0_i32 : i32, i32
  }
  func.func @transform_1(%arg0: i32) -> (i32, i32) {
    %c0_i32 = arith.constant 0 : i32
    %c0_i32_0 = arith.constant 0 : i32
    %c0_i32_1 = arith.constant 0 : i32
    return %c0_i32, %c0_i32_0 : i32, i32
  }
  func.func @transform_2(%arg0: i32) -> (i32, i32) {
    %c0_i32 = arith.constant 0 : i32
    %c0_i32_0 = arith.constant 0 : i32
    %c0_i32_1 = arith.constant 0 : i32
    return %c0_i32, %c0_i32_0 : i32, i32
  }
  func.func @transform_3(%arg0: i32) -> (i32, i32) {
    %c0_i32 = arith.constant 0 : i32
    %c0_i32_0 = arith.constant 0 : i32
    %c0_i32_1 = arith.constant 0 : i32
    return %c0_i32, %c0_i32_0 : i32, i32
  }
  func.func @transform_4(%arg0: i32) -> (i32, i32) {
    %c0_i32 = arith.constant 0 : i32
    %c0_i32_0 = arith.constant 0 : i32
    %c0_i32_1 = arith.constant 0 : i32
    return %c0_i32, %c0_i32_0 : i32, i32
  }
  func.func @transform_5(%arg0: i32) -> (i32, i32) {
    %c0_i32 = arith.constant 0 : i32
    %c0_i32_0 = arith.constant 0 : i32
    %c0_i32_1 = arith.constant 0 : i32
    return %c0_i32, %c0_i32_0 : i32, i32
  }
  func.func @transform_6(%arg0: i32) -> (i32, i32) {
    %c0_i32 = arith.constant 0 : i32
    %c0_i32_0 = arith.constant 0 : i32
    %c0_i32_1 = arith.constant 0 : i32
    return %c0_i32, %c0_i32_0 : i32, i32
  }
  func.func @transform_7(%arg0: i32) -> (i32, i32) {
    %c0_i32 = arith.constant 0 : i32
    %c0_i32_0 = arith.constant 0 : i32
    return %arg0, %c0_i32 : i32, i32
  }
}

</mosaic_0001>

<llo_original>
// kernel: net_forward.3
$region0: #{net_forward.3}
  #allocation0 [shape = 'u32[]', space=smem, size = 0x4, offset = 0x4, fixed_abs, tag = 'smem constant byte address 0x4 - core index']
  #allocation1 [shape = 'u32[144,128]{1,0:T(1,128)}', space=vmem, size = 0x12000, scoped, tag = 'internal scratch']
  %s0 = inlined_call_operand.vmem [shape: bf16[4,512,128], index: 0, kind: input, shape index: {}]
  %s1 = inlined_call_operand.vmem [shape: bf16[128,128], index: 1, kind: input, shape index: {}]
  %s2 = inlined_call_operand.vmem [shape: f32[1,128], index: 2, kind: input, shape index: {}]
  %s3 = inlined_call_operand.vmem [shape: bf16[512,128], index: 3, kind: output, shape index: {}]
  %s4 = sld [smem:[#allocation0]]
  $region86: #{net_forward.3} parent=0
    _
  %s6 = ssub.s32 1, %s4
  %s7 = scalar_select 0, %s6, %s4
  $region1: #{net_forward.3} parent=0
    #allocation2 [shape = 'u8[524288]{0}', space=vmem, size = 0x80000, scoped, tag = 'input window, operand 0']
    loop: start=0, step=1, limit=4
    $region2: #{net_forward.3} parent=1 // loop_pre_header
      _
    $region3: #{net_forward.3} parent=1 // loop_header
      %s9 = sphi 0, %s13
      %p10 = scmp.ge.s32.totalorder %s9, 4
      %s19 = sphi 0, %s21
      %s22 = sphi 0, %s19
      %s23 = sphi 0, %s22
      %s39 = sphi 0, %s23
      %s43 = sphi 0, %s43
      %s45 = sphi 0, %s43
      %s46 = sphi 0, %s45
      %s60 = sphi 0, %s46
      %s64 = sphi 0, %s64
      %s66 = sphi 0, %s64
      %s67 = sphi 0, %s66
      %s81 = sphi 0, %s67
      %s87 = sphi 0, %s89
      %s90 = sphi 0, %s87
      %s91 = sphi 0, %s90
      %s107 = sphi 0, %s91
    $region4: #{net_forward.3} parent=1 // loop_header_branch
      %12 = sbr.rel (%p10) target = $region8
    $region5: #{net_forward.3} parent=1 // loop_body
      %s14 = ssub.s32 %s9, 1
      %s15 = ssub.s32 %s9, 2
      %s16 = sadd.s32 %s9, 1
      %s17 = ssub.s32 %s9, %s16
      %p18 = scmp.eq.s32.totalorder %s17, 0
      %s20 = sadd.s32 %s19, 1
      %s21 = scalar_select %p18, %s19, %s20
      %p24 = pneg %p18
      %p25 = scmp.eq.s32.totalorder %s9, 1
      %p26 = por %p24, %p25
      %p27 = scmp.ne.s32.totalorder %s19, %s22
      %p28 = scmp.eq.s32.totalorder %s9, 0
      %p29 = por %p27, %p28
      %p30 = scmp.ne.s32.totalorder %s19, %s22
      %p31 = scmp.eq.s32.totalorder %s14, 1
      %p32 = por %p30, %p31
      %p33 = scmp.ne.s32.totalorder %s22, %s23
      %p34 = scmp.eq.s32.totalorder %s14, 0
      %p35 = por %p33, %p34
      %p36 = scmp.ne.s32.totalorder %s22, %s23
      %p37 = scmp.eq.s32.totalorder %s15, 1
      %p38 = por %p36, %p37
      %p40 = scmp.ne.s32.totalorder %s23, %s39
      %p41 = scmp.eq.s32.totalorder %s15, 0
      %p42 = por %p40, %p41
      %s44 = sadd.s32 %s43, 1
      %p47 = scmp.eq.s32.totalorder %s9, 1
      %p48 = scmp.ne.s32.totalorder %s43, %s45
      %p49 = scmp.eq.s32.totalorder %s9, 0
      %p50 = por %p48, %p49
      %p51 = scmp.ne.s32.totalorder %s43, %s45
      %p52 = scmp.eq.s32.totalorder %s14, 1
      %p53 = por %p51, %p52
      %p54 = scmp.ne.s32.totalorder %s45, %s46
      %p55 = scmp.eq.s32.totalorder %s14, 0
      %p56 = por %p54, %p55
      %p57 = scmp.ne.s32.totalorder %s45, %s46
      %p58 = scmp.eq.s32.totalorder %s15, 1
      %p59 = por %p57, %p58
      %p61 = scmp.ne.s32.totalorder %s46, %s60
      %p62 = scmp.eq.s32.totalorder %s15, 0
      %p63 = por %p61, %p62
      %s65 = sadd.s32 %s64, 1
      %p68 = scmp.eq.s32.totalorder %s9, 1
      %p69 = scmp.ne.s32.totalorder %s64, %s66
      %p70 = scmp.eq.s32.totalorder %s9, 0
      %p71 = por %p69, %p70
      %p72 = scmp.ne.s32.totalorder %s64, %s66
      %p73 = scmp.eq.s32.totalorder %s14, 1
      %p74 = por %p72, %p73
      %p75 = scmp.ne.s32.totalorder %s66, %s67
      %p76 = scmp.eq.s32.totalorder %s14, 0
      %p77 = por %p75, %p76
      %p78 = scmp.ne.s32.totalorder %s66, %s67
      %p79 = scmp.eq.s32.totalorder %s15, 1
      %p80 = por %p78, %p79
      %p82 = scmp.ne.s32.totalorder %s67, %s81
      %p83 = scmp.eq.s32.totalorder %s15, 0
      %p84 = por %p82, %p83
      %s85 = ssub.s32 %s9, %s16
      %p86 = scmp.eq.s32.totalorder %s85, 0
      %s88 = sadd.s32 %s87, 1
      %s89 = scalar_select %p86, %s87, %s88
      %p92 = pneg %p86
      %p93 = scmp.eq.s32.totalorder %s9, 1
      %p94 = por %p92, %p93
      %p95 = scmp.ne.s32.totalorder %s87, %s90
      %p96 = scmp.eq.s32.totalorder %s9, 0
      %p97 = por %p95, %p96
      %p98 = scmp.ne.s32.totalorder %s87, %s90
      %p99 = scmp.eq.s32.totalorder %s14, 1
      %p100 = por %p98, %p99
      %p101 = scmp.ne.s32.totalorder %s90, %s91
      %p102 = scmp.eq.s32.totalorder %s14, 0
      %p103 = por %p101, %p102
      %p104 = scmp.ne.s32.totalorder %s90, %s91
      %p105 = scmp.eq.s32.totalorder %s15, 1
      %p106 = por %p104, %p105
      %p108 = scmp.ne.s32.totalorder %s91, %s107
      %p109 = scmp.eq.s32.totalorder %s15, 0
      %p110 = por %p108, %p109
      %p111 = scmp.le.s32.totalorder 1, %s9
      %p112 = scmp.lt.s32.totalorder %s9, 3
      %p113 = pnand %p111, %p112
      %p114 = pneg %p113
      // Predicated region
      $region9: #{net_forward.3} parent=5 // pred_check
        _
      $region10: #{net_forward.3} parent=5 // pred_check_branch
        %116 = sbr.rel (%p113) target = $region12
      $region11: #{net_forward.3} parent=5 // pred_region
        %s117 = ssub.s32 %s9, 1
        // Predicated region
        $region13: #{net_forward.3} parent=11 // pred_check
          %p118 = pneg %p56
        $region14: #{net_forward.3} parent=11 // pred_check_branch
          %120 = sbr.rel (%p118) target = $region16
        $region15: #{net_forward.3} parent=11 // pred_region
          _
        $region16: #{net_forward.3} parent=11 // pred_fallthru
          _
        // Predicated region
        $region17: #{net_forward.3} parent=11 // pred_check
          %p121 = pneg %p77
        $region18: #{net_forward.3} parent=11 // pred_check_branch
          %123 = sbr.rel (%p121) target = $region20
        $region19: #{net_forward.3} parent=11 // pred_region
          _
        $region20: #{net_forward.3} parent=11 // pred_fallthru
          _
      $region12: #{net_forward.3} parent=5 // pred_fallthru
        _
      %p124 = scmp.lt.s32.totalorder %s9, 2
      // Predicated region
      $region21: #{net_forward.3} parent=5 // pred_check
        %p125 = pneg %p124
      $region22: #{net_forward.3} parent=5 // pred_check_branch
        %127 = sbr.rel (%p125) target = $region24
      $region23: #{net_forward.3} parent=5 // pred_region
        // Predicated region
        $region25: #{net_forward.3} parent=23 // pred_check
          %p128 = pneg %p29
        $region26: #{net_forward.3} parent=23 // pred_check_branch
          %130 = sbr.rel (%p128) target = $region28
        $region27: #{net_forward.3} parent=23 // pred_region
          %s131 = sand.u32 %s19, 1
          %s132 = sand.u32 %s19, 1
          %s133 = smul.addr %s132, 512
          %s134 = scalar_lea.vmem [#allocation2], %s133
          %s135 = smul.u32 32, %s9
          %s136 = smul.addr %s135, 4
          %s137 = scalar_lea.vmem %s0, %s136
          // Predicated region
          $region29: #{net_forward.3} parent=27 // pred_check
            _
          $region30: #{net_forward.3} parent=27 // pred_check_branch
            %139 = sbr.rel (0) target = $region32
          $region31: #{net_forward.3} parent=27 // pred_region
            // Predicated region
            $region33: #{net_forward.3} parent=31 // pred_check
              _
            $region34: #{net_forward.3} parent=31 // pred_check_branch
              %141 = sbr.rel target = $region36
            $region35: #{net_forward.3} parent=31 // pred_region
              // Predicated region
              $region48: #{net_forward.3} parent=35 // pred_check
                _
              $region49: #{net_forward.3} parent=35 // pred_check_branch
                %410 = sbr.rel (0) target = $region51
              $region50: #{net_forward.3} parent=35 // pred_region
                loop: start=0, step=1, limit=1
                $region52: #{net_forward.3} parent=50 // loop_pre_header
                  _
                $region53: #{net_forward.3} parent=50 // loop_header
                  %s412 = sphi 0, %s416
                  %p413 = scmp.ge.s32.totalorder %s412, 1
                  %s417 = sphi %s137, %s137
                  %s418 = sphi %s134, %s134
                $region54: #{net_forward.3} parent=50 // loop_header_branch
                  %415 = sbr.rel (%p413) target = $region58
                $region55: #{net_forward.3} parent=50 // loop_body
                  _
                $region56: #{net_forward.3} parent=50 // loop_footer
                  %s416 = sadd.s32 1, %s412
                $region57: #{net_forward.3} parent=50 // loop_footer_branch
                  %411 = sbr.rel target = $region53
                $region58: #{net_forward.3} parent=50 // loop_exit
                  _
                loop: start=0, step=1, limit=1
                $region59: #{net_forward.3} parent=50 // loop_pre_header
                  _
                $region60: #{net_forward.3} parent=50 // loop_header
                  %s421 = sphi 0, %s425
                  %p422 = scmp.ge.s32.totalorder %s421, 1
                  %s426 = sphi %s137, %s137
                  %s427 = sphi %s134, %s134
                $region61: #{net_forward.3} parent=50 // loop_header_branch
                  %424 = sbr.rel (%p422) target = $region65
                $region62: #{net_forward.3} parent=50 // loop_body
                  %v428 = vld [vmem:[%s426] sm:$0xf]
                  %429 = vst [vmem:[%s427] sm:$0xf] %v428
                  %v430 = vld [vmem:[%s426 + $0x4] sm:$0xf]
                  %431 = vst [vmem:[%s427 + $0x4] sm:$0xf] %v430
                  %v432 = vld [vmem:[%s426 + $0x8] sm:$0xf]
                  %433 = vst [vmem:[%s427 + $0x8] sm:$0xf] %v432
                  %v434 = vld [vmem:[%s426 + $0xc] sm:$0xf]
                  %435 = vst [vmem:[%s427 + $0xc] sm:$0xf] %v434
                  %v436 = vld [vmem:[%s426 + $0x10] sm:$0xf]
                  %437 = vst [vmem:[%s427 + $0x10] sm:$0xf] %v436
                  %v438 = vld [vmem:[%s426 + $0x14] sm:$0xf]
                  %439 = vst [vmem:[%s427 + $0x14] sm:$0xf] %v438
                  %v440 = vld [vmem:[%s426 + $0x18] sm:$0xf]
                  %441 = vst [vmem:[%s427 + $0x18] sm:$0xf] %v440
                  %v442 = vld [vmem:[%s426 + $0x1c] sm:$0xf]
                  %443 = vst [vmem:[%s427 + $0x1c] sm:$0xf] %v442
                  %v444 = vld [vmem:[%s426 + $0x20] sm:$0xf]
                  %445 = vst [vmem:[%s427 + $0x20] sm:$0xf] %v444
                  %v446 = vld [vmem:[%s426 + $0x24] sm:$0xf]
                  %447 = vst [vmem:[%s427 + $0x24] sm:$0xf] %v446
                  %v448 = vld [vmem:[%s426 + $0x28] sm:$0xf]
                  %449 = vst [vmem:[%s427 + $0x28] sm:$0xf] %v448
                  %v450 = vld [vmem:[%s426 + $0x2c] sm:$0xf]
                  %451 = vst [vmem:[%s427 + $0x2c] sm:$0xf] %v450
                  %v452 = vld [vmem:[%s426 + $0x30] sm:$0xf]
                  %453 = vst [vmem:[%s427 + $0x30] sm:$0xf] %v452
                  %v454 = vld [vmem:[%s426 + $0x34] sm:$0xf]
                  %455 = vst [vmem:[%s427 + $0x34] sm:$0xf] %v454
                  %v456 = vld [vmem:[%s426 + $0x38] sm:$0xf]
                  %457 = vst [vmem:[%s427 + $0x38] sm:$0xf] %v456
                  %v458 = vld [vmem:[%s426 + $0x3c] sm:$0xf]
                  %459 = vst [vmem:[%s427 + $0x3c] sm:$0xf] %v458
                  %v460 = vld [vmem:[%s426 + $0x40] sm:$0xf]
                  %461 = vst [vmem:[%s427 + $0x40] sm:$0xf] %v460
                  %v462 = vld [vmem:[%s426 + $0x44] sm:$0xf]
                  %463 = vst [vmem:[%s427 + $0x44] sm:$0xf] %v462
                  %v464 = vld [vmem:[%s426 + $0x48] sm:$0xf]
                  %465 = vst [vmem:[%s427 + $0x48] sm:$0xf] %v464
                  %v466 = vld [vmem:[%s426 + $0x4c] sm:$0xf]
                  %467 = vst [vmem:[%s427 + $0x4c] sm:$0xf] %v466
                  %v468 = vld [vmem:[%s426 + $0x50] sm:$0xf]
                  %469 = vst [vmem:[%s427 + $0x50] sm:$0xf] %v468
                  %v470 = vld [vmem:[%s426 + $0x54] sm:$0xf]
                  %471 = vst [vmem:[%s427 + $0x54] sm:$0xf] %v470
                  %v472 = vld [vmem:[%s426 + $0x58] sm:$0xf]
                  %473 = vst [vmem:[%s427 + $0x58] sm:$0xf] %v472
                  %v474 = vld [vmem:[%s426 + $0x5c] sm:$0xf]
                  %475 = vst [vmem:[%s427 + $0x5c] sm:$0xf] %v474
                  %v476 = vld [vmem:[%s426 + $0x60] sm:$0xf]
                  %477 = vst [vmem:[%s427 + $0x60] sm:$0xf] %v476
                  %v478 = vld [vmem:[%s426 + $0x64] sm:$0xf]
                  %479 = vst [vmem:[%s427 + $0x64] sm:$0xf] %v478
                  %v480 = vld [vmem:[%s426 + $0x68] sm:$0xf]
                  %481 = vst [vmem:[%s427 + $0x68] sm:$0xf] %v480
                  %v482 = vld [vmem:[%s426 + $0x6c] sm:$0xf]
                  %483 = vst [vmem:[%s427 + $0x6c] sm:$0xf] %v482
                  %v484 = vld [vmem:[%s426 + $0x70] sm:$0xf]
                  %485 = vst [vmem:[%s427 + $0x70] sm:$0xf] %v484
                  %v486 = vld [vmem:[%s426 + $0x74] sm:$0xf]
                  %487 = vst [vmem:[%s427 + $0x74] sm:$0xf] %v486
                  %v488 = vld [vmem:[%s426 + $0x78] sm:$0xf]
                  %489 = vst [vmem:[%s427 + $0x78] sm:$0xf] %v488
                  %v490 = vld [vmem:[%s426 + $0x7c] sm:$0xf]
                  %491 = vst [vmem:[%s427 + $0x7c] sm:$0xf] %v490
                  %v492 = vld [vmem:[%s426 + $0x100] sm:$0xf]
                  %493 = vst [vmem:[%s427 + $0x80] sm:$0xf] %v492
                  %v494 = vld [vmem:[%s426 + $0x104] sm:$0xf]
                  %495 = vst [vmem:[%s427 + $0x84] sm:$0xf] %v494
                  %v496 = vld [vmem:[%s426 + $0x108] sm:$0xf]
                  %497 = vst [vmem:[%s427 + $0x88] sm:$0xf] %v496
                  %v498 = vld [vmem:[%s426 + $0x10c] sm:$0xf]
                  %499 = vst [vmem:[%s427 + $0x8c] sm:$0xf] %v498
                  %v500 = vld [vmem:[%s426 + $0x110] sm:$0xf]
                  %501 = vst [vmem:[%s427 + $0x90] sm:$0xf] %v500
                  %v502 = vld [vmem:[%s426 + $0x114] sm:$0xf]
                  %503 = vst [vmem:[%s427 + $0x94] sm:$0xf] %v502
                  %v504 = vld [vmem:[%s426 + $0x118] sm:$0xf]
                  %505 = vst [vmem:[%s427 + $0x98] sm:$0xf] %v504
                  %v506 = vld [vmem:[%s426 + $0x11c] sm:$0xf]
                  %507 = vst [vmem:[%s427 + $0x9c] sm:$0xf] %v506
                  %v508 = vld [vmem:[%s426 + $0x120] sm:$0xf]
                  %509 = vst [vmem:[%s427 + $0xa0] sm:$0xf] %v508
                  %v510 = vld [vmem:[%s426 + $0x124] sm:$0xf]
                  %511 = vst [vmem:[%s427 + $0xa4] sm:$0xf] %v510
                  %v512 = vld [vmem:[%s426 + $0x128] sm:$0xf]
                  %513 = vst [vmem:[%s427 + $0xa8] sm:$0xf] %v512
                  %v514 = vld [vmem:[%s426 + $0x12c] sm:$0xf]
                  %515 = vst [vmem:[%s427 + $0xac] sm:$0xf] %v514
                  %v516 = vld [vmem:[%s426 + $0x130] sm:$0xf]
                  %517 = vst [vmem:[%s427 + $0xb0] sm:$0xf] %v516
                  %v518 = vld [vmem:[%s426 + $0x134] sm:$0xf]
                  %519 = vst [vmem:[%s427 + $0xb4] sm:$0xf] %v518
                  %v520 = vld [vmem:[%s426 + $0x138] sm:$0xf]
                  %521 = vst [vmem:[%s427 + $0xb8] sm:$0xf] %v520
                  %v522 = vld [vmem:[%s426 + $0x13c] sm:$0xf]
                  %523 = vst [vmem:[%s427 + $0xbc] sm:$0xf] %v522
                  %v524 = vld [vmem:[%s426 + $0x140] sm:$0xf]
                  %525 = vst [vmem:[%s427 + $0xc0] sm:$0xf] %v524
                  %v526 = vld [vmem:[%s426 + $0x144] sm:$0xf]
                  %527 = vst [vmem:[%s427 + $0xc4] sm:$0xf] %v526
                  %v528 = vld [vmem:[%s426 + $0x148] sm:$0xf]
                  %529 = vst [vmem:[%s427 + $0xc8] sm:$0xf] %v528
                  %v530 = vld [vmem:[%s426 + $0x14c] sm:$0xf]
                  %531 = vst [vmem:[%s427 + $0xcc] sm:$0xf] %v530
                  %v532 = vld [vmem:[%s426 + $0x150] sm:$0xf]
                  %533 = vst [vmem:[%s427 + $0xd0] sm:$0xf] %v532
                  %v534 = vld [vmem:[%s426 + $0x154] sm:$0xf]
                  %535 = vst [vmem:[%s427 + $0xd4] sm:$0xf] %v534
                  %v536 = vld [vmem:[%s426 + $0x158] sm:$0xf]
                  %537 = vst [vmem:[%s427 + $0xd8] sm:$0xf] %v536
                  %v538 = vld [vmem:[%s426 + $0x15c] sm:$0xf]
                  %539 = vst [vmem:[%s427 + $0xdc] sm:$0xf] %v538
                  %v540 = vld [vmem:[%s426 + $0x160] sm:$0xf]
                  %541 = vst [vmem:[%s427 + $0xe0] sm:$0xf] %v540
                  %v542 = vld [vmem:[%s426 + $0x164] sm:$0xf]
                  %543 = vst [vmem:[%s427 + $0xe4] sm:$0xf] %v542
                  %v544 = vld [vmem:[%s426 + $0x168] sm:$0xf]
                  %545 = vst [vmem:[%s427 + $0xe8] sm:$0xf] %v544
                  %v546 = vld [vmem:[%s426 + $0x16c] sm:$0xf]
                  %547 = vst [vmem:[%s427 + $0xec] sm:$0xf] %v546
                  %v548 = vld [vmem:[%s426 + $0x170] sm:$0xf]
                  %549 = vst [vmem:[%s427 + $0xf0] sm:$0xf] %v548
                  %v550 = vld [vmem:[%s426 + $0x174] sm:$0xf]
                  %551 = vst [vmem:[%s427 + $0xf4] sm:$0xf] %v550
                  %v552 = vld [vmem:[%s426 + $0x178] sm:$0xf]
                  %553 = vst [vmem:[%s427 + $0xf8] sm:$0xf] %v552
                  %v554 = vld [vmem:[%s426 + $0x17c] sm:$0xf]
                  %555 = vst [vmem:[%s427 + $0xfc] sm:$0xf] %v554
                  %v556 = vld [vmem:[%s426 + $0x200] sm:$0xf]
                  %557 = vst [vmem:[%s427 + $0x100] sm:$0xf] %v556
                  %v558 = vld [vmem:[%s426 + $0x204] sm:$0xf]
                  %559 = vst [vmem:[%s427 + $0x104] sm:$0xf] %v558
                  %v560 = vld [vmem:[%s426 + $0x208] sm:$0xf]
                  %561 = vst [vmem:[%s427 + $0x108] sm:$0xf] %v560
                  %v562 = vld [vmem:[%s426 + $0x20c] sm:$0xf]
                  %563 = vst [vmem:[%s427 + $0x10c] sm:$0xf] %v562
                  %v564 = vld [vmem:[%s426 + $0x210] sm:$0xf]
                  %565 = vst [vmem:[%s427 + $0x110] sm:$0xf] %v564
                  %v566 = vld [vmem:[%s426 + $0x214] sm:$0xf]
                  %567 = vst [vmem:[%s427 + $0x114] sm:$0xf] %v566
                  %v568 = vld [vmem:[%s426 + $0x218] sm:$0xf]
                  %569 = vst [vmem:[%s427 + $0x118] sm:$0xf] %v568
                  %v570 = vld [vmem:[%s426 + $0x21c] sm:$0xf]
                  %571 = vst [vmem:[%s427 + $0x11c] sm:$0xf] %v570
                  %v572 = vld [vmem:[%s426 + $0x220] sm:$0xf]
                  %573 = vst [vmem:[%s427 + $0x120] sm:$0xf] %v572
                  %v574 = vld [vmem:[%s426 + $0x224] sm:$0xf]
                  %575 = vst [vmem:[%s427 + $0x124] sm:$0xf] %v574
                  %v576 = vld [vmem:[%s426 + $0x228] sm:$0xf]
                  %577 = vst [vmem:[%s427 + $0x128] sm:$0xf] %v576
                  %v578 = vld [vmem:[%s426 + $0x22c] sm:$0xf]
                  %579 = vst [vmem:[%s427 + $0x12c] sm:$0xf] %v578
                  %v580 = vld [vmem:[%s426 + $0x230] sm:$0xf]
                  %581 = vst [vmem:[%s427 + $0x130] sm:$0xf] %v580
                  %v582 = vld [vmem:[%s426 + $0x234] sm:$0xf]
                  %583 = vst [vmem:[%s427 + $0x134] sm:$0xf] %v582
                  %v584 = vld [vmem:[%s426 + $0x238] sm:$0xf]
                  %585 = vst [vmem:[%s427 + $0x138] sm:$0xf] %v584
                  %v586 = vld [vmem:[%s426 + $0x23c] sm:$0xf]
                  %587 = vst [vmem:[%s427 + $0x13c] sm:$0xf] %v586
                  %v588 = vld [vmem:[%s426 + $0x240] sm:$0xf]
                  %589 = vst [vmem:[%s427 + $0x140] sm:$0xf] %v588
                  %v590 = vld [vmem:[%s426 + $0x244] sm:$0xf]
                  %591 = vst [vmem:[%s427 + $0x144] sm:$0xf] %v590
                  %v592 = vld [vmem:[%s426 + $0x248] sm:$0xf]
                  %593 = vst [vmem:[%s427 + $0x148] sm:$0xf] %v592
                  %v594 = vld [vmem:[%s426 + $0x24c] sm:$0xf]
                  %595 = vst [vmem:[%s427 + $0x14c] sm:$0xf] %v594
                  %v596 = vld [vmem:[%s426 + $0x250] sm:$0xf]
                  %597 = vst [vmem:[%s427 + $0x150] sm:$0xf] %v596
                  %v598 = vld [vmem:[%s426 + $0x254] sm:$0xf]
                  %599 = vst [vmem:[%s427 + $0x154] sm:$0xf] %v598
                  %v600 = vld [vmem:[%s426 + $0x258] sm:$0xf]
                  %601 = vst [vmem:[%s427 + $0x158] sm:$0xf] %v600
                  %v602 = vld [vmem:[%s426 + $0x25c] sm:$0xf]
                  %603 = vst [vmem:[%s427 + $0x15c] sm:$0xf] %v602
                  %v604 = vld [vmem:[%s426 + $0x260] sm:$0xf]
                  %605 = vst [vmem:[%s427 + $0x160] sm:$0xf] %v604
                  %v606 = vld [vmem:[%s426 + $0x264] sm:$0xf]
                  %607 = vst [vmem:[%s427 + $0x164] sm:$0xf] %v606
                  %v608 = vld [vmem:[%s426 + $0x268] sm:$0xf]
                  %609 = vst [vmem:[%s427 + $0x168] sm:$0xf] %v608
                  %v610 = vld [vmem:[%s426 + $0x26c] sm:$0xf]
                  %611 = vst [vmem:[%s427 + $0x16c] sm:$0xf] %v610
                  %v612 = vld [vmem:[%s426 + $0x270] sm:$0xf]
                  %613 = vst [vmem:[%s427 + $0x170] sm:$0xf] %v612
                  %v614 = vld [vmem:[%s426 + $0x274] sm:$0xf]
                  %615 = vst [vmem:[%s427 + $0x174] sm:$0xf] %v614
                  %v616 = vld [vmem:[%s426 + $0x278] sm:$0xf]
                  %617 = vst [vmem:[%s427 + $0x178] sm:$0xf] %v616
                  %v618 = vld [vmem:[%s426 + $0x27c] sm:$0xf]
                  %619 = vst [vmem:[%s427 + $0x17c] sm:$0xf] %v618
                  %v620 = vld [vmem:[%s426 + $0x300] sm:$0xf]
                  %621 = vst [vmem:[%s427 + $0x180] sm:$0xf] %v620
                  %v622 = vld [vmem:[%s426 + $0x304] sm:$0xf]
                  %623 = vst [vmem:[%s427 + $0x184] sm:$0xf] %v622
                  %v624 = vld [vmem:[%s426 + $0x308] sm:$0xf]
                  %625 = vst [vmem:[%s427 + $0x188] sm:$0xf] %v624
                  %v626 = vld [vmem:[%s426 + $0x30c] sm:$0xf]
                  %627 = vst [vmem:[%s427 + $0x18c] sm:$0xf] %v626
                  %v628 = vld [vmem:[%s426 + $0x310] sm:$0xf]
                  %629 = vst [vmem:[%s427 + $0x190] sm:$0xf] %v628
                  %v630 = vld [vmem:[%s426 + $0x314] sm:$0xf]
                  %631 = vst [vmem:[%s427 + $0x194] sm:$0xf] %v630
                  %v632 = vld [vmem:[%s426 + $0x318] sm:$0xf]
                  %633 = vst [vmem:[%s427 + $0x198] sm:$0xf] %v632
                  %v634 = vld [vmem:[%s426 + $0x31c] sm:$0xf]
                  %635 = vst [vmem:[%s427 + $0x19c] sm:$0xf] %v634
                  %v636 = vld [vmem:[%s426 + $0x320] sm:$0xf]
                  %637 = vst [vmem:[%s427 + $0x1a0] sm:$0xf] %v636
                  %v638 = vld [vmem:[%s426 + $0x324] sm:$0xf]
                  %639 = vst [vmem:[%s427 + $0x1a4] sm:$0xf] %v638
                  %v640 = vld [vmem:[%s426 + $0x328] sm:$0xf]
                  %641 = vst [vmem:[%s427 + $0x1a8] sm:$0xf] %v640
                  %v642 = vld [vmem:[%s426 + $0x32c] sm:$0xf]
                  %643 = vst [vmem:[%s427 + $0x1ac] sm:$0xf] %v642
                  %v644 = vld [vmem:[%s426 + $0x330] sm:$0xf]
                  %645 = vst [vmem:[%s427 + $0x1b0] sm:$0xf] %v644
                  %v646 = vld [vmem:[%s426 + $0x334] sm:$0xf]
                  %647 = vst [vmem:[%s427 + $0x1b4] sm:$0xf] %v646
                  %v648 = vld [vmem:[%s426 + $0x338] sm:$0xf]
                  %649 = vst [vmem:[%s427 + $0x1b8] sm:$0xf] %v648
                  %v650 = vld [vmem:[%s426 + $0x33c] sm:$0xf]
                  %651 = vst [vmem:[%s427 + $0x1bc] sm:$0xf] %v650
                  %v652 = vld [vmem:[%s426 + $0x340] sm:$0xf]
                  %653 = vst [vmem:[%s427 + $0x1c0] sm:$0xf] %v652
                  %v654 = vld [vmem:[%s426 + $0x344] sm:$0xf]
                  %655 = vst [vmem:[%s427 + $0x1c4] sm:$0xf] %v654
                  %v656 = vld [vmem:[%s426 + $0x348] sm:$0xf]
                  %657 = vst [vmem:[%s427 + $0x1c8] sm:$0xf] %v656
                  %v658 = vld [vmem:[%s426 + $0x34c] sm:$0xf]
                  %659 = vst [vmem:[%s427 + $0x1cc] sm:$0xf] %v658
                  %v660 = vld [vmem:[%s426 + $0x350] sm:$0xf]
                  %661 = vst [vmem:[%s427 + $0x1d0] sm:$0xf] %v660
                  %v662 = vld [vmem:[%s426 + $0x354] sm:$0xf]
                  %663 = vst [vmem:[%s427 + $0x1d4] sm:$0xf] %v662
                  %v664 = vld [vmem:[%s426 + $0x358] sm:$0xf]
                  %665 = vst [vmem:[%s427 + $0x1d8] sm:$0xf] %v664
                  %v666 = vld [vmem:[%s426 + $0x35c] sm:$0xf]
                  %667 = vst [vmem:[%s427 + $0x1dc] sm:$0xf] %v666
                  %v668 = vld [vmem:[%s426 + $0x360] sm:$0xf]
                  %669 = vst [vmem:[%s427 + $0x1e0] sm:$0xf] %v668
                  %v670 = vld [vmem:[%s426 + $0x364] sm:$0xf]
                  %671 = vst [vmem:[%s427 + $0x1e4] sm:$0xf] %v670
                  %v672 = vld [vmem:[%s426 + $0x368] sm:$0xf]
                  %673 = vst [vmem:[%s427 + $0x1e8] sm:$0xf] %v672
                  %v674 = vld [vmem:[%s426 + $0x36c] sm:$0xf]
                  %675 = vst [vmem:[%s427 + $0x1ec] sm:$0xf] %v674
                  %v676 = vld [vmem:[%s426 + $0x370] sm:$0xf]
                  %677 = vst [vmem:[%s427 + $0x1f0] sm:$0xf] %v676
                  %v678 = vld [vmem:[%s426 + $0x374] sm:$0xf]
                  %679 = vst [vmem:[%s427 + $0x1f4] sm:$0xf] %v678
                  %v680 = vld [vmem:[%s426 + $0x378] sm:$0xf]
                  %681 = vst [vmem:[%s427 + $0x1f8] sm:$0xf] %v680
                  %v682 = vld [vmem:[%s426 + $0x37c] sm:$0xf]
                  %683 = vst [vmem:[%s427 + $0x1fc] sm:$0xf] %v682
                $region63: #{net_forward.3} parent=50 // loop_footer
                  %s425 = sadd.s32 1, %s421
                $region64: #{net_forward.3} parent=50 // loop_footer_branch
                  %420 = sbr.rel target = $region60
                $region65: #{net_forward.3} parent=50 // loop_exit
                  _
              $region51: #{net_forward.3} parent=35 // pred_fallthru
                _
            $region36: #{net_forward.3} parent=31 // pred_fallthru
              _
            // Predicated region
            $region37: #{net_forward.3} parent=31 // pred_check
              _
            $region38: #{net_forward.3} parent=31 // pred_check_branch
              %143 = sbr.rel (0) target = $region40
            $region39: #{net_forward.3} parent=31 // pred_region
              loop: start=0, step=1, limit=1
              $region41: #{net_forward.3} parent=39 // loop_pre_header
                _
              $region42: #{net_forward.3} parent=39 // loop_header
                %s146 = sphi 0, %s150
                %p147 = scmp.ge.s32.totalorder %s146, 1
                %s151 = sphi %s137, %s137
                %s152 = sphi %s134, %s134
              $region43: #{net_forward.3} parent=39 // loop_header_branch
                %149 = sbr.rel (%p147) target = $region47
              $region44: #{net_forward.3} parent=39 // loop_body
                %v153 = vld [vmem:[%s151] sm:$0xf]
                %154 = vst [vmem:[%s152] sm:$0xf] %v153
                %v155 = vld [vmem:[%s151 + $0x4] sm:$0xf]
                %156 = vst [vmem:[%s152 + $0x4] sm:$0xf] %v155
                %v157 = vld [vmem:[%s151 + $0x8] sm:$0xf]
                %158 = vst [vmem:[%s152 + $0x8] sm:$0xf] %v157
                %v159 = vld [vmem:[%s151 + $0xc] sm:$0xf]
                %160 = vst [vmem:[%s152 + $0xc] sm:$0xf] %v159
                %v161 = vld [vmem:[%s151 + $0x10] sm:$0xf]
                %162 = vst [vmem:[%s152 + $0x10] sm:$0xf] %v161
                %v163 = vld [vmem:[%s151 + $0x14] sm:$0xf]
                %164 = vst [vmem:[%s152 + $0x14] sm:$0xf] %v163
                %v165 = vld [vmem:[%s151 + $0x18] sm:$0xf]
                %166 = vst [vmem:[%s152 + $0x18] sm:$0xf] %v165
                %v167 = vld [vmem:[%s151 + $0x1c] sm:$0xf]
                %168 = vst [vmem:[%s152 + $0x1c] sm:$0xf] %v167
                %v169 = vld [vmem:[%s151 + $0x20] sm:$0xf]
                %170 = vst [vmem:[%s152 + $0x20] sm:$0xf] %v169
                %v171 = vld [vmem:[%s151 + $0x24] sm:$0xf]
                %172 = vst [vmem:[%s152 + $0x24] sm:$0xf] %v171
                %v173 = vld [vmem:[%s151 + $0x28] sm:$0xf]
                %174 = vst [vmem:[%s152 + $0x28] sm:$0xf] %v173
                %v175 = vld [vmem:[%s151 + $0x2c] sm:$0xf]
                %176 = vst [vmem:[%s152 + $0x2c] sm:$0xf] %v175
                %v177 = vld [vmem:[%s151 + $0x30] sm:$0xf]
                %178 = vst [vmem:[%s152 + $0x30] sm:$0xf] %v177
                %v179 = vld [vmem:[%s151 + $0x34] sm:$0xf]
                %180 = vst [vmem:[%s152 + $0x34] sm:$0xf] %v179
                %v181 = vld [vmem:[%s151 + $0x38] sm:$0xf]
                %182 = vst [vmem:[%s152 + $0x38] sm:$0xf] %v181
                %v183 = vld [vmem:[%s151 + $0x3c] sm:$0xf]
                %184 = vst [vmem:[%s152 + $0x3c] sm:$0xf] %v183
                %v185 = vld [vmem:[%s151 + $0x40] sm:$0xf]
                %186 = vst [vmem:[%s152 + $0x40] sm:$0xf] %v185
                %v187 = vld [vmem:[%s151 + $0x44] sm:$0xf]
                %188 = vst [vmem:[%s152 + $0x44] sm:$0xf] %v187
                %v189 = vld [vmem:[%s151 + $0x48] sm:$0xf]
                %190 = vst [vmem:[%s152 + $0x48] sm:$0xf] %v189
                %v191 = vld [vmem:[%s151 + $0x4c] sm:$0xf]
                %192 = vst [vmem:[%s152 + $0x4c] sm:$0xf] %v191
                %v193 = vld [vmem:[%s151 + $0x50] sm:$0xf]
                %194 = vst [vmem:[%s152 + $0x50] sm:$0xf] %v193
                %v195 = vld [vmem:[%s151 + $0x54] sm:$0xf]
                %196 = vst [vmem:[%s152 + $0x54] sm:$0xf] %v195
                %v197 = vld [vmem:[%s151 + $0x58] sm:$0xf]
                %198 = vst [vmem:[%s152 + $0x58] sm:$0xf] %v197
                %v199 = vld [vmem:[%s151 + $0x5c] sm:$0xf]
                %200 = vst [vmem:[%s152 + $0x5c] sm:$0xf] %v199
                %v201 = vld [vmem:[%s151 + $0x60] sm:$0xf]
                %202 = vst [vmem:[%s152 + $0x60] sm:$0xf] %v201
                %v203 = vld [vmem:[%s151 + $0x64] sm:$0xf]
                %204 = vst [vmem:[%s152 + $0x64] sm:$0xf] %v203
                %v205 = vld [vmem:[%s151 + $0x68] sm:$0xf]
                %206 = vst [vmem:[%s152 + $0x68] sm:$0xf] %v205
                %v207 = vld [vmem:[%s151 + $0x6c] sm:$0xf]
                %208 = vst [vmem:[%s152 + $0x6c] sm:$0xf] %v207
                %v209 = vld [vmem:[%s151 + $0x70] sm:$0xf]
                %210 = vst [vmem:[%s152 + $0x70] sm:$0xf] %v209
                %v211 = vld [vmem:[%s151 + $0x74] sm:$0xf]
                %212 = vst [vmem:[%s152 + $0x74] sm:$0xf] %v211
                %v213 = vld [vmem:[%s151 + $0x78] sm:$0xf]
                %214 = vst [vmem:[%s152 + $0x78] sm:$0xf] %v213
                %v215 = vld [vmem:[%s151 + $0x7c] sm:$0xf]
                %216 = vst [vmem:[%s152 + $0x7c] sm:$0xf] %v215
                %v217 = vld [vmem:[%s151 + $0x100] sm:$0xf]
                %218 = vst [vmem:[%s152 + $0x80] sm:$0xf] %v217
                %v219 = vld [vmem:[%s151 + $0x104] sm:$0xf]
                %220 = vst [vmem:[%s152 + $0x84] sm:$0xf] %v219
                %v221 = vld [vmem:[%s151 + $0x108] sm:$0xf]
                %222 = vst [vmem:[%s152 + $0x88] sm:$0xf] %v221
                %v223 = vld [vmem:[%s151 + $0x10c] sm:$0xf]
                %224 = vst [vmem:[%s152 + $0x8c] sm:$0xf] %v223
                %v225 = vld [vmem:[%s151 + $0x110] sm:$0xf]
                %226 = vst [vmem:[%s152 + $0x90] sm:$0xf] %v225
                %v227 = vld [vmem:[%s151 + $0x114] sm:$0xf]
                %228 = vst [vmem:[%s152 + $0x94] sm:$0xf] %v227
                %v229 = vld [vmem:[%s151 + $0x118] sm:$0xf]
                %230 = vst [vmem:[%s152 + $0x98] sm:$0xf] %v229
                %v231 = vld [vmem:[%s151 + $0x11c] sm:$0xf]
                %232 = vst [vmem:[%s152 + $0x9c] sm:$0xf] %v231
                %v233 = vld [vmem:[%s151 + $0x120] sm:$0xf]
                %234 = vst [vmem:[%s152 + $0xa0] sm:$0xf] %v233
                %v235 = vld [vmem:[%s151 + $0x124] sm:$0xf]
                %236 = vst [vmem:[%s152 + $0xa4] sm:$0xf] %v235
                %v237 = vld [vmem:[%s151 + $0x128] sm:$0xf]
                %238 = vst [vmem:[%s152 + $0xa8] sm:$0xf] %v237
                %v239 = vld [vmem:[%s151 + $0x12c] sm:$0xf]
                %240 = vst [vmem:[%s152 + $0xac] sm:$0xf] %v239
                %v241 = vld [vmem:[%s151 + $0x130] sm:$0xf]
                %242 = vst [vmem:[%s152 + $0xb0] sm:$0xf] %v241
                %v243 = vld [vmem:[%s151 + $0x134] sm:$0xf]
                %244 = vst [vmem:[%s152 + $0xb4] sm:$0xf] %v243
                %v245 = vld [vmem:[%s151 + $0x138] sm:$0xf]
                %246 = vst [vmem:[%s152 + $0xb8] sm:$0xf] %v245
                %v247 = vld [vmem:[%s151 + $0x13c] sm:$0xf]
                %248 = vst [vmem:[%s152 + $0xbc] sm:$0xf] %v247
                %v249 = vld [vmem:[%s151 + $0x140] sm:$0xf]
                %250 = vst [vmem:[%s152 + $0xc0] sm:$0xf] %v249
                %v251 = vld [vmem:[%s151 + $0x144] sm:$0xf]
                %252 = vst [vmem:[%s152 + $0xc4] sm:$0xf] %v251
                %v253 = vld [vmem:[%s151 + $0x148] sm:$0xf]
                %254 = vst [vmem:[%s152 + $0xc8] sm:$0xf] %v253
                %v255 = vld [vmem:[%s151 + $0x14c] sm:$0xf]
                %256 = vst [vmem:[%s152 + $0xcc] sm:$0xf] %v255
                %v257 = vld [vmem:[%s151 + $0x150] sm:$0xf]
                %258 = vst [vmem:[%s152 + $0xd0] sm:$0xf] %v257
                %v259 = vld [vmem:[%s151 + $0x154] sm:$0xf]
                %260 = vst [vmem:[%s152 + $0xd4] sm:$0xf] %v259
                %v261 = vld [vmem:[%s151 + $0x158] sm:$0xf]
                %262 = vst [vmem:[%s152 + $0xd8] sm:$0xf] %v261
                %v263 = vld [vmem:[%s151 + $0x15c] sm:$0xf]
                %264 = vst [vmem:[%s152 + $0xdc] sm:$0xf] %v263
                %v265 = vld [vmem:[%s151 + $0x160] sm:$0xf]
                %266 = vst [vmem:[%s152 + $0xe0] sm:$0xf] %v265
                %v267 = vld [vmem:[%s151 + $0x164] sm:$0xf]
                %268 = vst [vmem:[%s152 + $0xe4] sm:$0xf] %v267
                %v269 = vld [vmem:[%s151 + $0x168] sm:$0xf]
                %270 = vst [vmem:[%s152 + $0xe8] sm:$0xf] %v269
                %v271 = vld [vmem:[%s151 + $0x16c] sm:$0xf]
                %272 = vst [vmem:[%s152 + $0xec] sm:$0xf] %v271
                %v273 = vld [vmem:[%s151 + $0x170] sm:$0xf]
                %274 = vst [vmem:[%s152 + $0xf0] sm:$0xf] %v273
                %v275 = vld [vmem:[%s151 + $0x174] sm:$0xf]
                %276 = vst [vmem:[%s152 + $0xf4] sm:$0xf] %v275
                %v277 = vld [vmem:[%s151 + $0x178] sm:$0xf]
                %278 = vst [vmem:[%s152 + $0xf8] sm:$0xf] %v277
                %v279 = vld [vmem:[%s151 + $0x17c] sm:$0xf]
                %280 = vst [vmem:[%s152 + $0xfc] sm:$0xf] %v279
                %v281 = vld [vmem:[%s151 + $0x200] sm:$0xf]
                %282 = vst [vmem:[%s152 + $0x100] sm:$0xf] %v281
                %v283 = vld [vmem:[%s151 + $0x204] sm:$0xf]
                %284 = vst [vmem:[%s152 + $0x104] sm:$0xf] %v283
                %v285 = vld [vmem:[%s151 + $0x208] sm:$0xf]
                %286 = vst [vmem:[%s152 + $0x108] sm:$0xf] %v285
                %v287 = vld [vmem:[%s151 + $0x20c] sm:$0xf]
                %288 = vst [vmem:[%s152 + $0x10c] sm:$0xf] %v287
                %v289 = vld [vmem:[%s151 + $0x210] sm:$0xf]
                %290 = vst [vmem:[%s152 + $0x110] sm:$0xf] %v289
                %v291 = vld [vmem:[%s151 + $0x214] sm:$0xf]
                %292 = vst [vmem:[%s152 + $0x114] sm:$0xf] %v291
                %v293 = vld [vmem:[%s151 + $0x218] sm:$0xf]
                %294 = vst [vmem:[%s152 + $0x118] sm:$0xf] %v293
                %v295 = vld [vmem:[%s151 + $0x21c] sm:$0xf]
                %296 = vst [vmem:[%s152 + $0x11c] sm:$0xf] %v295
                %v297 = vld [vmem:[%s151 + $0x220] sm:$0xf]
                %298 = vst [vmem:[%s152 + $0x120] sm:$0xf] %v297
                %v299 = vld [vmem:[%s151 + $0x224] sm:$0xf]
                %300 = vst [vmem:[%s152 + $0x124] sm:$0xf] %v299
                %v301 = vld [vmem:[%s151 + $0x228] sm:$0xf]
                %302 = vst [vmem:[%s152 + $0x128] sm:$0xf] %v301
                %v303 = vld [vmem:[%s151 + $0x22c] sm:$0xf]
                %304 = vst [vmem:[%s152 + $0x12c] sm:$0xf] %v303
                %v305 = vld [vmem:[%s151 + $0x230] sm:$0xf]
                %306 = vst [vmem:[%s152 + $0x130] sm:$0xf] %v305
                %v307 = vld [vmem:[%s151 + $0x234] sm:$0xf]
                %308 = vst [vmem:[%s152 + $0x134] sm:$0xf] %v307
                %v309 = vld [vmem:[%s151 + $0x238] sm:$0xf]
                %310 = vst [vmem:[%s152 + $0x138] sm:$0xf] %v309
                %v311 = vld [vmem:[%s151 + $0x23c] sm:$0xf]
                %312 = vst [vmem:[%s152 + $0x13c] sm:$0xf] %v311
                %v313 = vld [vmem:[%s151 + $0x240] sm:$0xf]
                %314 = vst [vmem:[%s152 + $0x140] sm:$0xf] %v313
                %v315 = vld [vmem:[%s151 + $0x244] sm:$0xf]
                %316 = vst [vmem:[%s152 + $0x144] sm:$0xf] %v315
                %v317 = vld [vmem:[%s151 + $0x248] sm:$0xf]
                %318 = vst [vmem:[%s152 + $0x148] sm:$0xf] %v317
                %v319 = vld [vmem:[%s151 + $0x24c] sm:$0xf]
                %320 = vst [vmem:[%s152 + $0x14c] sm:$0xf] %v319
                %v321 = vld [vmem:[%s151 + $0x250] sm:$0xf]
                %322 = vst [vmem:[%s152 + $0x150] sm:$0xf] %v321
                %v323 = vld [vmem:[%s151 + $0x254] sm:$0xf]
                %324 = vst [vmem:[%s152 + $0x154] sm:$0xf] %v323
                %v325 = vld [vmem:[%s151 + $0x258] sm:$0xf]
                %326 = vst [vmem:[%s152 + $0x158] sm:$0xf] %v325
                %v327 = vld [vmem:[%s151 + $0x25c] sm:$0xf]
                %328 = vst [vmem:[%s152 + $0x15c] sm:$0xf] %v327
                %v329 = vld [vmem:[%s151 + $0x260] sm:$0xf]
                %330 = vst [vmem:[%s152 + $0x160] sm:$0xf] %v329
                %v331 = vld [vmem:[%s151 + $0x264] sm:$0xf]
                %332 = vst [vmem:[%s152 + $0x164] sm:$0xf] %v331
                %v333 = vld [vmem:[%s151 + $0x268] sm:$0xf]
                %334 = vst [vmem:[%s152 + $0x168] sm:$0xf] %v333
                %v335 = vld [vmem:[%s151 + $0x26c] sm:$0xf]
                %336 = vst [vmem:[%s152 + $0x16c] sm:$0xf] %v335
                %v337 = vld [vmem:[%s151 + $0x270] sm:$0xf]
                %338 = vst [vmem:[%s152 + $0x170] sm:$0xf] %v337
                %v339 = vld [vmem:[%s151 + $0x274] sm:$0xf]
                %340 = vst [vmem:[%s152 + $0x174] sm:$0xf] %v339
                %v341 = vld [vmem:[%s151 + $0x278] sm:$0xf]
                %342 = vst [vmem:[%s152 + $0x178] sm:$0xf] %v341
                %v343 = vld [vmem:[%s151 + $0x27c] sm:$0xf]
                %344 = vst [vmem:[%s152 + $0x17c] sm:$0xf] %v343
                %v345 = vld [vmem:[%s151 + $0x300] sm:$0xf]
                %346 = vst [vmem:[%s152 + $0x180] sm:$0xf] %v345
                %v347 = vld [vmem:[%s151 + $0x304] sm:$0xf]
                %348 = vst [vmem:[%s152 + $0x184] sm:$0xf] %v347
                %v349 = vld [vmem:[%s151 + $0x308] sm:$0xf]
                %350 = vst [vmem:[%s152 + $0x188] sm:$0xf] %v349
                %v351 = vld [vmem:[%s151 + $0x30c] sm:$0xf]
                %352 = vst [vmem:[%s152 + $0x18c] sm:$0xf] %v351
                %v353 = vld [vmem:[%s151 + $0x310] sm:$0xf]
                %354 = vst [vmem:[%s152 + $0x190] sm:$0xf] %v353
                %v355 = vld [vmem:[%s151 + $0x314] sm:$0xf]
                %356 = vst [vmem:[%s152 + $0x194] sm:$0xf] %v355
                %v357 = vld [vmem:[%s151 + $0x318] sm:$0xf]
                %358 = vst [vmem:[%s152 + $0x198] sm:$0xf] %v357
                %v359 = vld [vmem:[%s151 + $0x31c] sm:$0xf]
                %360 = vst [vmem:[%s152 + $0x19c] sm:$0xf] %v359
                %v361 = vld [vmem:[%s151 + $0x320] sm:$0xf]
                %362 = vst [vmem:[%s152 + $0x1a0] sm:$0xf] %v361
                %v363 = vld [vmem:[%s151 + $0x324] sm:$0xf]
                %364 = vst [vmem:[%s152 + $0x1a4] sm:$0xf] %v363
                %v365 = vld [vmem:[%s151 + $0x328] sm:$0xf]
                %366 = vst [vmem:[%s152 + $0x1a8] sm:$0xf] %v365
                %v367 = vld [vmem:[%s151 + $0x32c] sm:$0xf]
                %368 = vst [vmem:[%s152 + $0x1ac] sm:$0xf] %v367
                %v369 = vld [vmem:[%s151 + $0x330] sm:$0xf]
                %370 = vst [vmem:[%s152 + $0x1b0] sm:$0xf] %v369
                %v371 = vld [vmem:[%s151 + $0x334] sm:$0xf]
                %372 = vst [vmem:[%s152 + $0x1b4] sm:$0xf] %v371
                %v373 = vld [vmem:[%s151 + $0x338] sm:$0xf]
                %374 = vst [vmem:[%s152 + $0x1b8] sm:$0xf] %v373
                %v375 = vld [vmem:[%s151 + $0x33c] sm:$0xf]
                %376 = vst [vmem:[%s152 + $0x1bc] sm:$0xf] %v375
                %v377 = vld [vmem:[%s151 + $0x340] sm:$0xf]
                %378 = vst [vmem:[%s152 + $0x1c0] sm:$0xf] %v377
                %v379 = vld [vmem:[%s151 + $0x344] sm:$0xf]
                %380 = vst [vmem:[%s152 + $0x1c4] sm:$0xf] %v379
                %v381 = vld [vmem:[%s151 + $0x348] sm:$0xf]
                %382 = vst [vmem:[%s152 + $0x1c8] sm:$0xf] %v381
                %v383 = vld [vmem:[%s151 + $0x34c] sm:$0xf]
                %384 = vst [vmem:[%s152 + $0x1cc] sm:$0xf] %v383
                %v385 = vld [vmem:[%s151 + $0x350] sm:$0xf]
                %386 = vst [vmem:[%s152 + $0x1d0] sm:$0xf] %v385
                %v387 = vld [vmem:[%s151 + $0x354] sm:$0xf]
                %388 = vst [vmem:[%s152 + $0x1d4] sm:$0xf] %v387
                %v389 = vld [vmem:[%s151 + $0x358] sm:$0xf]
                %390 = vst [vmem:[%s152 + $0x1d8] sm:$0xf] %v389
                %v391 = vld [vmem:[%s151 + $0x35c] sm:$0xf]
                %392 = vst [vmem:[%s152 + $0x1dc] sm:$0xf] %v391
                %v393 = vld [vmem:[%s151 + $0x360] sm:$0xf]
                %394 = vst [vmem:[%s152 + $0x1e0] sm:$0xf] %v393
                %v395 = vld [vmem:[%s151 + $0x364] sm:$0xf]
                %396 = vst [vmem:[%s152 + $0x1e4] sm:$0xf] %v395
                %v397 = vld [vmem:[%s151 + $0x368] sm:$0xf]
                %398 = vst [vmem:[%s152 + $0x1e8] sm:$0xf] %v397
                %v399 = vld [vmem:[%s151 + $0x36c] sm:$0xf]
                %400 = vst [vmem:[%s152 + $0x1ec] sm:$0xf] %v399
                %v401 = vld [vmem:[%s151 + $0x370] sm:$0xf]
                %402 = vst [vmem:[%s152 + $0x1f0] sm:$0xf] %v401
                %v403 = vld [vmem:[%s151 + $0x374] sm:$0xf]
                %404 = vst [vmem:[%s152 + $0x1f4] sm:$0xf] %v403
                %v405 = vld [vmem:[%s151 + $0x378] sm:$0xf]
                %406 = vst [vmem:[%s152 + $0x1f8] sm:$0xf] %v405
                %v407 = vld [vmem:[%s151 + $0x37c] sm:$0xf]
                %408 = vst [vmem:[%s152 + $0x1fc] sm:$0xf] %v407
              $region45: #{net_forward.3} parent=39 // loop_footer
                %s150 = sadd.s32 1, %s146
              $region46: #{net_forward.3} parent=39 // loop_footer_branch
                %145 = sbr.rel target = $region42
              $region47: #{net_forward.3} parent=39 // loop_exit
                _
            $region40: #{net_forward.3} parent=31 // pred_fallthru
              _
          $region32: #{net_forward.3} parent=27 // pred_fallthru
            _
          %684 = vnop
        $region28: #{net_forward.3} parent=23 // pred_fallthru
          _
      $region24: #{net_forward.3} parent=5 // pred_fallthru
        _
      %p685 = scmp.le.s32.totalorder 1, %s9
      %p686 = scmp.lt.s32.totalorder %s9, 3
      %p687 = pnand %p685, %p686
      %p688 = pneg %p687
      // Predicated region
      $region66: #{net_forward.3} parent=5 // pred_check
        _
      $region67: #{net_forward.3} parent=5 // pred_check_branch
        %690 = sbr.rel (%p687) target = $region69
      $region68: #{net_forward.3} parent=5 // pred_region
        %s691 = ssub.s32 %s9, 1
        %s692 = sand.u32 %s22, 1
        %s693 = sand.u32 %s22, 1
        %s694 = smul.addr %s693, 512
        %s695 = scalar_lea.vmem [#allocation2], %s694
        // Predicated region
        $region70: #{net_forward.3} parent=68 // pred_check
          %p696 = pneg %p35
        $region71: #{net_forward.3} parent=68 // pred_check_branch
          %698 = sbr.rel (%p696) target = $region73
        $region72: #{net_forward.3} parent=68 // pred_region
          _
        $region73: #{net_forward.3} parent=68 // pred_fallthru
          _
        %s699 = sand.u32 %s22, 1
        %s700 = sand.u32 %s22, 1
        %s701 = smul.addr %s700, 512
        %s702 = scalar_lea.vmem [#allocation2], %s701
        %p703 = pneg %p35
        %p704 = pneg %p32
        %p705 = pneg %p56
        %p706 = pneg %p53
        %p707 = pneg %p77
        %p708 = pneg %p74
        %p709 = pneg %p103
        %p710 = pneg %p100
        %s711 = smul.u32 32, %s14
        %p712 = scmp.lt.s32.totalorder %s711, 63
        %s713 = scalar_select %p712, %s711, 63
        %s714 = smul.addr %s713, 4
        %s715 = scalar_lea.vmem %s3, %s714
        %s716 = smul.u32 32, %s14
        %s717 = smul.u32 32, %s14
        %p718 = scmp.lt.s32.totalorder %s717, 63
        %s719 = scalar_select %p718, %s717, 63
        %s720 = smul.addr %s719, 4
        %s721 = scalar_lea.vmem %s3, %s720
        %s722 = smul.u32 32, %s14
        %v724 = vld [vmem:[%s1] sm:$0xf]
        %v725 = vld [vmem:[%s1 + $0x4] sm:$0xf]
        %v726 = vld [vmem:[%s1 + $0x8] sm:$0xf]
        %v727 = vld [vmem:[%s1 + $0xc] sm:$0xf]
        %v728 = vld [vmem:[%s1 + $0x10] sm:$0xf]
        %v729 = vld [vmem:[%s1 + $0x14] sm:$0xf]
        %v730 = vld [vmem:[%s1 + $0x18] sm:$0xf]
        %v731 = vld [vmem:[%s1 + $0x1c] sm:$0xf]
        %v732 = vld [vmem:[%s1 + $0x20] sm:$0xf]
        %v733 = vld [vmem:[%s1 + $0x24] sm:$0xf]
        %v734 = vld [vmem:[%s1 + $0x28] sm:$0xf]
        %v735 = vld [vmem:[%s1 + $0x2c] sm:$0xf]
        %v736 = vld [vmem:[%s1 + $0x30] sm:$0xf]
        %v737 = vld [vmem:[%s1 + $0x34] sm:$0xf]
        %v738 = vld [vmem:[%s1 + $0x38] sm:$0xf]
        %v739 = vld [vmem:[%s1 + $0x3c] sm:$0xf]
        %v740 = vld [vmem:[%s695] sm:$0xf]
        %v741 = vld [vmem:[%s695 + $0x4] sm:$0xf]
        %v742 = vld [vmem:[%s695 + $0x8] sm:$0xf]
        %v743 = vld [vmem:[%s695 + $0xc] sm:$0xf]
        %v744 = vld [vmem:[%s695 + $0x10] sm:$0xf]
        %v745 = vld [vmem:[%s695 + $0x14] sm:$0xf]
        %v746 = vld [vmem:[%s695 + $0x18] sm:$0xf]
        %v747 = vld [vmem:[%s695 + $0x1c] sm:$0xf]
        %v748 = vld [vmem:[%s695 + $0x20] sm:$0xf]
        %v749 = vld [vmem:[%s695 + $0x24] sm:$0xf]
        %v750 = vld [vmem:[%s695 + $0x28] sm:$0xf]
        %v751 = vld [vmem:[%s695 + $0x2c] sm:$0xf]
        %v752 = vld [vmem:[%s695 + $0x30] sm:$0xf]
        %v753 = vld [vmem:[%s695 + $0x34] sm:$0xf]
        %v754 = vld [vmem:[%s695 + $0x38] sm:$0xf]
        %v755 = vld [vmem:[%s695 + $0x3c] sm:$0xf]
        %v756 = vld [vmem:[%s695 + $0x40] sm:$0xf]
        %v757 = vld [vmem:[%s695 + $0x44] sm:$0xf]
        %v758 = vld [vmem:[%s695 + $0x48] sm:$0xf]
        %v759 = vld [vmem:[%s695 + $0x4c] sm:$0xf]
        %v760 = vld [vmem:[%s695 + $0x50] sm:$0xf]
        %v761 = vld [vmem:[%s695 + $0x54] sm:$0xf]
        %v762 = vld [vmem:[%s695 + $0x58] sm:$0xf]
        %v763 = vld [vmem:[%s695 + $0x5c] sm:$0xf]
        %v764 = vld [vmem:[%s695 + $0x60] sm:$0xf]
        %v765 = vld [vmem:[%s695 + $0x64] sm:$0xf]
        %v766 = vld [vmem:[%s695 + $0x68] sm:$0xf]
        %v767 = vld [vmem:[%s695 + $0x6c] sm:$0xf]
        %v768 = vld [vmem:[%s695 + $0x70] sm:$0xf]
        %v769 = vld [vmem:[%s695 + $0x74] sm:$0xf]
        %v770 = vld [vmem:[%s695 + $0x78] sm:$0xf]
        %v771 = vld [vmem:[%s695 + $0x7c] sm:$0xf]
        %v804 = vunpack.c.l.b16 %v740
        %v805 = vunpack.c.l.b16 %v741
        %v806 = vunpack.c.l.b16 %v742
        %v807 = vunpack.c.l.b16 %v743
        %v808 = vunpack.c.l.b16 %v744
        %v809 = vunpack.c.l.b16 %v745
        %v810 = vunpack.c.l.b16 %v746
        %v811 = vunpack.c.l.b16 %v747
        %v812 = vunpack.c.l.b16 %v748
        %v813 = vunpack.c.l.b16 %v749
        %v814 = vunpack.c.l.b16 %v750
        %v815 = vunpack.c.l.b16 %v751
        %v816 = vunpack.c.l.b16 %v752
        %v817 = vunpack.c.l.b16 %v753
        %v818 = vunpack.c.l.b16 %v754
        %v819 = vunpack.c.l.b16 %v755
        %v820 = vunpack.c.l.b16 %v756
        %v821 = vunpack.c.l.b16 %v757
        %v822 = vunpack.c.l.b16 %v758
        %v823 = vunpack.c.l.b16 %v759
        %v824 = vunpack.c.l.b16 %v760
        %v825 = vunpack.c.l.b16 %v761
        %v826 = vunpack.c.l.b16 %v762
        %v827 = vunpack.c.l.b16 %v763
        %v828 = vunpack.c.l.b16 %v764
        %v829 = vunpack.c.l.b16 %v765
        %v830 = vunpack.c.l.b16 %v766
        %v831 = vunpack.c.l.b16 %v767
        %v832 = vunpack.c.l.b16 %v768
        %v833 = vunpack.c.l.b16 %v769
        %v834 = vunpack.c.l.b16 %v770
        %v835 = vunpack.c.l.b16 %v771
        %v836 = vpack.c.b16 %v805, %v804
        %v837 = vpack.c.b16 %v807, %v806
        %v838 = vpack.c.b16 %v809, %v808
        %v839 = vpack.c.b16 %v811, %v810
        %v840 = vpack.c.b16 %v813, %v812
        %v841 = vpack.c.b16 %v815, %v814
        %v842 = vpack.c.b16 %v817, %v816
        %v843 = vpack.c.b16 %v819, %v818
        %v844 = vpack.c.b16 %v821, %v820
        %v845 = vpack.c.b16 %v823, %v822
        %v846 = vpack.c.b16 %v825, %v824
        %v847 = vpack.c.b16 %v827, %v826
        %v848 = vpack.c.b16 %v829, %v828
        %v849 = vpack.c.b16 %v831, %v830
        %v850 = vpack.c.b16 %v833, %v832
        %v851 = vpack.c.b16 %v835, %v834
        %v884 = vunpack.c.l.b16 %v724
        %v885 = vunpack.c.l.b16 %v725
        %v886 = vunpack.c.l.b16 %v726
        %v887 = vunpack.c.l.b16 %v727
        %v888 = vunpack.c.l.b16 %v728
        %v889 = vunpack.c.l.b16 %v729
        %v890 = vunpack.c.l.b16 %v730
        %v891 = vunpack.c.l.b16 %v731
        %v892 = vunpack.c.l.b16 %v732
        %v893 = vunpack.c.l.b16 %v733
        %v894 = vunpack.c.l.b16 %v734
        %v895 = vunpack.c.l.b16 %v735
        %v896 = vunpack.c.l.b16 %v736
        %v897 = vunpack.c.l.b16 %v737
        %v898 = vunpack.c.l.b16 %v738
        %v899 = vunpack.c.l.b16 %v739
        %v900 = vpack.c.b16 %v885, %v884
        %v901 = vpack.c.b16 %v887, %v886
        %v902 = vpack.c.b16 %v889, %v888
        %v903 = vpack.c.b16 %v891, %v890
        %v904 = vpack.c.b16 %v893, %v892
        %v905 = vpack.c.b16 %v895, %v894
        %v906 = vpack.c.b16 %v897, %v896
        %v907 = vpack.c.b16 %v899, %v898
        %916 = vmatprep.subr.bf16.mxu0 0
        %917 = vmatpush1.bf16.msra.mxu0 %v900
        %918 = vmatprep.subr.bf16.mxu0 0
        %919 = vmatpush1.bf16.msra.mxu0 %v901
        %920 = vmatprep.subr.bf16.mxu0 0
        %921 = vmatpush1.bf16.msra.mxu0 %v902
        %922 = vmatprep.subr.bf16.mxu0 0
        %923 = vmatpush1.bf16.msra.mxu0 %v903
        %924 = vmatprep.subr.bf16.mxu0 0
        %925 = vmatpush1.bf16.msra.mxu0 %v904
        %926 = vmatprep.subr.bf16.mxu0 0
        %927 = vmatpush1.bf16.msra.mxu0 %v905
        %928 = vmatprep.subr.bf16.mxu0 0
        %929 = vmatpush1.bf16.msra.mxu0 %v906
        %930 = vmatprep.subr.bf16.mxu0 0
        %931 = vmatpush1.bf16.msra.mxu0 %v907
        %932 = vmatprep.subr.bf16.mxu0 0
        %933 = vmatpush1.bf16.msra.mxu0 0
        %934 = vmatprep.subr.bf16.mxu0 0
        %935 = vmatpush1.bf16.msra.mxu0 0
        %936 = vmatprep.subr.bf16.mxu0 0
        %937 = vmatpush1.bf16.msra.mxu0 0
        %938 = vmatprep.subr.bf16.mxu0 0
        %939 = vmatpush1.bf16.msra.mxu0 0
        %940 = vmatprep.subr.bf16.mxu0 0
        %941 = vmatpush1.bf16.msra.mxu0 0
        %942 = vmatprep.subr.bf16.mxu0 0
        %943 = vmatpush1.bf16.msra.mxu0 0
        %944 = vmatprep.subr.bf16.mxu0 0
        %945 = vmatpush1.bf16.msra.mxu0 0
        %946 = vmatprep.subr.bf16.mxu0 0
        %947 = vmatpush1.bf16.msra.mxu0 0
        %948 = vmatprep.mubr.bf16.mxu0 0
        %949 = vmatmul.mubr.bf16.gmra.mrb[0].mxu0 %v836
        %v950 = vpop.f32.mrb[0].mxu0
        %v951 = vadd.f32 0.0, %v950
        %v952 = vpop.f32.mrb[0].mxu0
        %v953 = vpop.f32.mrb[0].mxu0
        %v954 = vadd.f32 0.0, %v953
        %v955 = vpop.f32.mrb[0].mxu0
        %956 = vmatprep.mubr.bf16.mxu0 0
        %957 = vmatmul.mubr.bf16.gmra.mrb[0].mxu0 %v837
        %v958 = vpop.f32.mrb[0].mxu0
        %v959 = vadd.f32 0.0, %v958
        %v960 = vpop.f32.mrb[0].mxu0
        %v961 = vpop.f32.mrb[0].mxu0
        %v962 = vadd.f32 0.0, %v961
        %v963 = vpop.f32.mrb[0].mxu0
        %964 = vmatprep.mubr.bf16.mxu0 0
        %965 = vmatmul.mubr.bf16.gmra.mrb[0].mxu0 %v838
        %v966 = vpop.f32.mrb[0].mxu0
        %v967 = vadd.f32 0.0, %v966
        %v968 = vpop.f32.mrb[0].mxu0
        %v969 = vpop.f32.mrb[0].mxu0
        %v970 = vadd.f32 0.0, %v969
        %v971 = vpop.f32.mrb[0].mxu0
        %972 = vmatprep.mubr.bf16.mxu0 0
        %973 = vmatmul.mubr.bf16.gmra.mrb[0].mxu0 %v839
        %v974 = vpop.f32.mrb[0].mxu0
        %v975 = vadd.f32 0.0, %v974
        %v976 = vpop.f32.mrb[0].mxu0
        %v977 = vpop.f32.mrb[0].mxu0
        %v978 = vadd.f32 0.0, %v977
        %v979 = vpop.f32.mrb[0].mxu0
        %980 = vmatprep.mubr.bf16.mxu0 0
        %981 = vmatmul.mubr.bf16.gmra.mrb[0].mxu0 %v840
        %v982 = vpop.f32.mrb[0].mxu0
        %v983 = vadd.f32 0.0, %v982
        %v984 = vpop.f32.mrb[0].mxu0
        %v985 = vpop.f32.mrb[0].mxu0
        %v986 = vadd.f32 0.0, %v985
        %v987 = vpop.f32.mrb[0].mxu0
        %988 = vmatprep.mubr.bf16.mxu0 0
        %989 = vmatmul.mubr.bf16.gmra.mrb[0].mxu0 %v841
        %v990 = vpop.f32.mrb[0].mxu0
        %v991 = vadd.f32 0.0, %v990
        %v992 = vpop.f32.mrb[0].mxu0
        %v993 = vpop.f32.mrb[0].mxu0
        %v994 = vadd.f32 0.0, %v993
        %v995 = vpop.f32.mrb[0].mxu0
        %996 = vmatprep.mubr.bf16.mxu0 0
        %997 = vmatmul.mubr.bf16.gmra.mrb[0].mxu0 %v842
        %v998 = vpop.f32.mrb[0].mxu0
        %v999 = vadd.f32 0.0, %v998
        %v1000 = vpop.f32.mrb[0].mxu0
        %v1001 = vpop.f32.mrb[0].mxu0
        %v1002 = vadd.f32 0.0, %v1001
        %v1003 = vpop.f32.mrb[0].mxu0
        %1004 = vmatprep.mubr.bf16.mxu0 0
        %1005 = vmatmul.mubr.bf16.gmra.mrb[0].mxu0 %v843
        %v1006 = vpop.f32.mrb[0].mxu0
        %v1007 = vadd.f32 0.0, %v1006
        %v1008 = vpop.f32.mrb[0].mxu0
        %v1009 = vpop.f32.mrb[0].mxu0
        %v1010 = vadd.f32 0.0, %v1009
        %v1011 = vpop.f32.mrb[0].mxu0
        %1012 = vmatprep.mubr.bf16.mxu0 0
        %1013 = vmatmul.mubr.bf16.gmra.mrb[0].mxu0 %v844
        %v1014 = vpop.f32.mrb[0].mxu0
        %v1015 = vadd.f32 0.0, %v1014
        %v1016 = vpop.f32.mrb[0].mxu0
        %v1017 = vpop.f32.mrb[0].mxu0
        %v1018 = vadd.f32 0.0, %v1017
        %v1019 = vpop.f32.mrb[0].mxu0
        %1020 = vmatprep.mubr.bf16.mxu0 0
        %1021 = vmatmul.mubr.bf16.gmra.mrb[0].mxu0 %v845
        %v1022 = vpop.f32.mrb[0].mxu0
        %v1023 = vadd.f32 0.0, %v1022
        %v1024 = vpop.f32.mrb[0].mxu0
        %v1025 = vpop.f32.mrb[0].mxu0
        %v1026 = vadd.f32 0.0, %v1025
        %v1027 = vpop.f32.mrb[0].mxu0
        %1028 = vmatprep.mubr.bf16.mxu0 0
        %1029 = vmatmul.mubr.bf16.gmra.mrb[0].mxu0 %v846
        %v1030 = vpop.f32.mrb[0].mxu0
        %v1031 = vadd.f32 0.0, %v1030
        %v1032 = vpop.f32.mrb[0].mxu0
        %v1033 = vpop.f32.mrb[0].mxu0
        %v1034 = vadd.f32 0.0, %v1033
        %v1035 = vpop.f32.mrb[0].mxu0
        %1036 = vmatprep.mubr.bf16.mxu0 0
        %1037 = vmatmul.mubr.bf16.gmra.mrb[0].mxu0 %v847
        %v1038 = vpop.f32.mrb[0].mxu0
        %v1039 = vadd.f32 0.0, %v1038
        %v1040 = vpop.f32.mrb[0].mxu0
        %v1041 = vpop.f32.mrb[0].mxu0
        %v1042 = vadd.f32 0.0, %v1041
        %v1043 = vpop.f32.mrb[0].mxu0
        %1044 = vmatprep.mubr.bf16.mxu0 0
        %1045 = vmatmul.mubr.bf16.gmra.mrb[0].mxu0 %v848
        %v1046 = vpop.f32.mrb[0].mxu0
        %v1047 = vadd.f32 0.0, %v1046
        %v1048 = vpop.f32.mrb[0].mxu0
        %v1049 = vpop.f32.mrb[0].mxu0
        %v1050 = vadd.f32 0.0, %v1049
        %v1051 = vpop.f32.mrb[0].mxu0
        %1052 = vmatprep.mubr.bf16.mxu0 0
        %1053 = vmatmul.mubr.bf16.gmra.mrb[0].mxu0 %v849
        %v1054 = vpop.f32.mrb[0].mxu0
        %v1055 = vadd.f32 0.0, %v1054
        %v1056 = vpop.f32.mrb[0].mxu0
        %v1057 = vpop.f32.mrb[0].mxu0
        %v1058 = vadd.f32 0.0, %v1057
        %v1059 = vpop.f32.mrb[0].mxu0
        %1060 = vmatprep.mubr.bf16.mxu0 0
        %1061 = vmatmul.mubr.bf16.gmra.mrb[0].mxu0 %v850
        %v1062 = vpop.f32.mrb[0].mxu0
        %v1063 = vadd.f32 0.0, %v1062
        %v1064 = vpop.f32.mrb[0].mxu0
        %v1065 = vpop.f32.mrb[0].mxu0
        %v1066 = vadd.f32 0.0, %v1065
        %v1067 = vpop.f32.mrb[0].mxu0
        %1068 = vmatprep.mubr.bf16.mxu0 0
        %1069 = vmatmul.mubr.bf16.gmra.mrb[0].mxu0 %v851
        %v1070 = vpop.f32.mrb[0].mxu0
        %v1071 = vadd.f32 0.0, %v1070
        %v1072 = vpop.f32.mrb[0].mxu0
        %v1073 = vpop.f32.mrb[0].mxu0
        %v1074 = vadd.f32 0.0, %v1073
        %v1075 = vpop.f32.mrb[0].mxu0
        %1076 = vdwg.mxu0
        %s1077 = scalar_lea.vmem %s695, 128 [#allocation2]
        %v1078 = vld [vmem:[%s1077] sm:$0xf]
        %v1079 = vld [vmem:[%s1077 + $0x4] sm:$0xf]
        %v1080 = vld [vmem:[%s1077 + $0x8] sm:$0xf]
        %v1081 = vld [vmem:[%s1077 + $0xc] sm:$0xf]
        %v1082 = vld [vmem:[%s1077 + $0x10] sm:$0xf]
        %v1083 = vld [vmem:[%s1077 + $0x14] sm:$0xf]
        %v1084 = vld [vmem:[%s1077 + $0x18] sm:$0xf]
        %v1085 = vld [vmem:[%s1077 + $0x1c] sm:$0xf]
        %v1086 = vld [vmem:[%s1077 + $0x20] sm:$0xf]
        %v1087 = vld [vmem:[%s1077 + $0x24] sm:$0xf]
        %v1088 = vld [vmem:[%s1077 + $0x28] sm:$0xf]
        %v1089 = vld [vmem:[%s1077 + $0x2c] sm:$0xf]
        %v1090 = vld [vmem:[%s1077 + $0x30] sm:$0xf]
        %v1091 = vld [vmem:[%s1077 + $0x34] sm:$0xf]
        %v1092 = vld [vmem:[%s1077 + $0x38] sm:$0xf]
        %v1093 = vld [vmem:[%s1077 + $0x3c] sm:$0xf]
        %v1094 = vld [vmem:[%s1077 + $0x40] sm:$0xf]
        %v1095 = vld [vmem:[%s1077 + $0x44] sm:$0xf]
        %v1096 = vld [vmem:[%s1077 + $0x48] sm:$0xf]
        %v1097 = vld [vmem:[%s1077 + $0x4c] sm:$0xf]
        %v1098 = vld [vmem:[%s1077 + $0x50] sm:$0xf]
        %v1099 = vld [vmem:[%s1077 + $0x54] sm:$0xf]
        %v1100 = vld [vmem:[%s1077 + $0x58] sm:$0xf]
        %v1101 = vld [vmem:[%s1077 + $0x5c] sm:$0xf]
        %v1102 = vld [vmem:[%s1077 + $0x60] sm:$0xf]
        %v1103 = vld [vmem:[%s1077 + $0x64] sm:$0xf]
        %v1104 = vld [vmem:[%s1077 + $0x68] sm:$0xf]
        %v1105 = vld [vmem:[%s1077 + $0x6c] sm:$0xf]
        %v1106 = vld [vmem:[%s1077 + $0x70] sm:$0xf]
        %v1107 = vld [vmem:[%s1077 + $0x74] sm:$0xf]
        %v1108 = vld [vmem:[%s1077 + $0x78] sm:$0xf]
        %v1109 = vld [vmem:[%s1077 + $0x7c] sm:$0xf]
        %v1142 = vunpack.c.l.b16 %v1078
        %v1143 = vunpack.c.l.b16 %v1079
        %v1144 = vunpack.c.l.b16 %v1080
        %v1145 = vunpack.c.l.b16 %v1081
        %v1146 = vunpack.c.l.b16 %v1082
        %v1147 = vunpack.c.l.b16 %v1083
        %v1148 = vunpack.c.l.b16 %v1084
        %v1149 = vunpack.c.l.b16 %v1085
        %v1150 = vunpack.c.l.b16 %v1086
        %v1151 = vunpack.c.l.b16 %v1087
        %v1152 = vunpack.c.l.b16 %v1088
        %v1153 = vunpack.c.l.b16 %v1089
        %v1154 = vunpack.c.l.b16 %v1090
        %v1155 = vunpack.c.l.b16 %v1091
        %v1156 = vunpack.c.l.b16 %v1092
        %v1157 = vunpack.c.l.b16 %v1093
        %v1158 = vunpack.c.l.b16 %v1094
        %v1159 = vunpack.c.l.b16 %v1095
        %v1160 = vunpack.c.l.b16 %v1096
        %v1161 = vunpack.c.l.b16 %v1097
        %v1162 = vunpack.c.l.b16 %v1098
        %v1163 = vunpack.c.l.b16 %v1099
        %v1164 = vunpack.c.l.b16 %v1100
        %v1165 = vunpack.c.l.b16 %v1101
        %v1166 = vunpack.c.l.b16 %v1102
        %v1167 = vunpack.c.l.b16 %v1103
        %v1168 = vunpack.c.l.b16 %v1104
        %v1169 = vunpack.c.l.b16 %v1105
        %v1170 = vunpack.c.l.b16 %v1106
        %v1171 = vunpack.c.l.b16 %v1107
        %v1172 = vunpack.c.l.b16 %v1108
        %v1173 = vunpack.c.l.b16 %v1109
        %v1174 = vpack.c.b16 %v1143, %v1142
        %v1175 = vpack.c.b16 %v1145, %v1144
        %v1176 = vpack.c.b16 %v1147, %v1146
        %v1177 = vpack.c.b16 %v1149, %v1148
        %v1178 = vpack.c.b16 %v1151, %v1150
        %v1179 = vpack.c.b16 %v1153, %v1152
        %v1180 = vpack.c.b16 %v1155, %v1154
        %v1181 = vpack.c.b16 %v1157, %v1156
        %v1182 = vpack.c.b16 %v1159, %v1158
        %v1183 = vpack.c.b16 %v1161, %v1160
        %v1184 = vpack.c.b16 %v1163, %v1162
        %v1185 = vpack.c.b16 %v1165, %v1164
        %v1186 = vpack.c.b16 %v1167, %v1166
        %v1187 = vpack.c.b16 %v1169, %v1168
        %v1188 = vpack.c.b16 %v1171, %v1170
        %v1189 = vpack.c.b16 %v1173, %v1172
        %1206 = vmatprep.subr.bf16.mxu0 0
        %1207 = vmatpush1.bf16.msra.mxu0 %v900
        %1208 = vmatprep.subr.bf16.mxu0 0
        %1209 = vmatpush1.bf16.msra.mxu0 %v901
        %1210 = vmatprep.subr.bf16.mxu0 0
        %1211 = vmatpush1.bf16.msra.mxu0 %v902
        %1212 = vmatprep.subr.bf16.mxu0 0
        %1213 = vmatpush1.bf16.msra.mxu0 %v903
        %1214 = vmatprep.subr.bf16.mxu0 0
        %1215 = vmatpush1.bf16.msra.mxu0 %v904
        %1216 = vmatprep.subr.bf16.mxu0 0
        %1217 = vmatpush1.bf16.msra.mxu0 %v905
        %1218 = vmatprep.subr.bf16.mxu0 0
        %1219 = vmatpush1.bf16.msra.mxu0 %v906
        %1220 = vmatprep.subr.bf16.mxu0 0
        %1221 = vmatpush1.bf16.msra.mxu0 %v907
        %1222 = vmatprep.subr.bf16.mxu0 0
        %1223 = vmatpush1.bf16.msra.mxu0 0
        %1224 = vmatprep.subr.bf16.mxu0 0
        %1225 = vmatpush1.bf16.msra.mxu0 0
        %1226 = vmatprep.subr.bf16.mxu0 0
        %1227 = vmatpush1.bf16.msra.mxu0 0
        %1228 = vmatprep.subr.bf16.mxu0 0
        %1229 = vmatpush1.bf16.msra.mxu0 0
        %1230 = vmatprep.subr.bf16.mxu0 0
        %1231 = vmatpush1.bf16.msra.mxu0 0
        %1232 = vmatprep.subr.bf16.mxu0 0
        %1233 = vmatpush1.bf16.msra.mxu0 0
        %1234 = vmatprep.subr.bf16.mxu0 0
        %1235 = vmatpush1.bf16.msra.mxu0 0
        %1236 = vmatprep.subr.bf16.mxu0 0
        %1237 = vmatpush1.bf16.msra.mxu0 0
        %1238 = vmatprep.mubr.bf16.mxu0 0
        %1239 = vmatmul.mubr.bf16.gmra.mrb[0].mxu0 %v1174
        %v1240 = vpop.f32.mrb[0].mxu0
        %v1241 = vadd.f32 0.0, %v1240
        %v1242 = vpop.f32.mrb[0].mxu0
        %v1243 = vpop.f32.mrb[0].mxu0
        %v1244 = vadd.f32 0.0, %v1243
        %v1245 = vpop.f32.mrb[0].mxu0
        %1246 = vmatprep.mubr.bf16.mxu0 0
        %1247 = vmatmul.mubr.bf16.gmra.mrb[0].mxu0 %v1175
        %v1248 = vpop.f32.mrb[0].mxu0
        %v1249 = vadd.f32 0.0, %v1248
        %v1250 = vpop.f32.mrb[0].mxu0
        %v1251 = vpop.f32.mrb[0].mxu0
        %v1252 = vadd.f32 0.0, %v1251
        %v1253 = vpop.f32.mrb[0].mxu0
        %1254 = vmatprep.mubr.bf16.mxu0 0
        %1255 = vmatmul.mubr.bf16.gmra.mrb[0].mxu0 %v1176
        %v1256 = vpop.f32.mrb[0].mxu0
        %v1257 = vadd.f32 0.0, %v1256
        %v1258 = vpop.f32.mrb[0].mxu0
        %v1259 = vpop.f32.mrb[0].mxu0
        %v1260 = vadd.f32 0.0, %v1259
        %v1261 = vpop.f32.mrb[0].mxu0
        %1262 = vmatprep.mubr.bf16.mxu0 0
        %1263 = vmatmul.mubr.bf16.gmra.mrb[0].mxu0 %v1177
        %v1264 = vpop.f32.mrb[0].mxu0
        %v1265 = vadd.f32 0.0, %v1264
        %v1266 = vpop.f32.mrb[0].mxu0
        %v1267 = vpop.f32.mrb[0].mxu0
        %v1268 = vadd.f32 0.0, %v1267
        %v1269 = vpop.f32.mrb[0].mxu0
        %1270 = vmatprep.mubr.bf16.mxu0 0
        %1271 = vmatmul.mubr.bf16.gmra.mrb[0].mxu0 %v1178
        %v1272 = vpop.f32.mrb[0].mxu0
        %v1273 = vadd.f32 0.0, %v1272
        %v1274 = vpop.f32.mrb[0].mxu0
        %v1275 = vpop.f32.mrb[0].mxu0
        %v1276 = vadd.f32 0.0, %v1275
        %v1277 = vpop.f32.mrb[0].mxu0
        %1278 = vmatprep.mubr.bf16.mxu0 0
        %1279 = vmatmul.mubr.bf16.gmra.mrb[0].mxu0 %v1179
        %v1280 = vpop.f32.mrb[0].mxu0
        %v1281 = vadd.f32 0.0, %v1280
        %v1282 = vpop.f32.mrb[0].mxu0
        %v1283 = vpop.f32.mrb[0].mxu0
        %v1284 = vadd.f32 0.0, %v1283
        %v1285 = vpop.f32.mrb[0].mxu0
        %1286 = vmatprep.mubr.bf16.mxu0 0
        %1287 = vmatmul.mubr.bf16.gmra.mrb[0].mxu0 %v1180
        %v1288 = vpop.f32.mrb[0].mxu0
        %v1289 = vadd.f32 0.0, %v1288
        %v1290 = vpop.f32.mrb[0].mxu0
        %v1291 = vpop.f32.mrb[0].mxu0
        %v1292 = vadd.f32 0.0, %v1291
        %v1293 = vpop.f32.mrb[0].mxu0
        %1294 = vmatprep.mubr.bf16.mxu0 0
        %1295 = vmatmul.mubr.bf16.gmra.mrb[0].mxu0 %v1181
        %v1296 = vpop.f32.mrb[0].mxu0
        %v1297 = vadd.f32 0.0, %v1296
        %v1298 = vpop.f32.mrb[0].mxu0
        %v1299 = vpop.f32.mrb[0].mxu0
        %v1300 = vadd.f32 0.0, %v1299
        %v1301 = vpop.f32.mrb[0].mxu0
        %1302 = vmatprep.mubr.bf16.mxu0 0
        %1303 = vmatmul.mubr.bf16.gmra.mrb[0].mxu0 %v1182
        %v1304 = vpop.f32.mrb[0].mxu0
        %v1305 = vadd.f32 0.0, %v1304
        %v1306 = vpop.f32.mrb[0].mxu0
        %v1307 = vpop.f32.mrb[0].mxu0
        %v1308 = vadd.f32 0.0, %v1307
        %v1309 = vpop.f32.mrb[0].mxu0
        %1310 = vmatprep.mubr.bf16.mxu0 0
        %1311 = vmatmul.mubr.bf16.gmra.mrb[0].mxu0 %v1183
        %v1312 = vpop.f32.mrb[0].mxu0
        %v1313 = vadd.f32 0.0, %v1312
        %v1314 = vpop.f32.mrb[0].mxu0
        %v1315 = vpop.f32.mrb[0].mxu0
        %v1316 = vadd.f32 0.0, %v1315
        %v1317 = vpop.f32.mrb[0].mxu0
        %1318 = vmatprep.mubr.bf16.mxu0 0
        %1319 = vmatmul.mubr.bf16.gmra.mrb[0].mxu0 %v1184
        %v1320 = vpop.f32.mrb[0].mxu0
        %v1321 = vadd.f32 0.0, %v1320
        %v1322 = vpop.f32.mrb[0].mxu0
        %v1323 = vpop.f32.mrb[0].mxu0
        %v1324 = vadd.f32 0.0, %v1323
        %v1325 = vpop.f32.mrb[0].mxu0
        %1326 = vmatprep.mubr.bf16.mxu0 0
        %1327 = vmatmul.mubr.bf16.gmra.mrb[0].mxu0 %v1185
        %v1328 = vpop.f32.mrb[0].mxu0
        %v1329 = vadd.f32 0.0, %v1328
        %v1330 = vpop.f32.mrb[0].mxu0
        %v1331 = vpop.f32.mrb[0].mxu0
        %v1332 = vadd.f32 0.0, %v1331
        %v1333 = vpop.f32.mrb[0].mxu0
        %1334 = vmatprep.mubr.bf16.mxu0 0
        %1335 = vmatmul.mubr.bf16.gmra.mrb[0].mxu0 %v1186
        %v1336 = vpop.f32.mrb[0].mxu0
        %v1337 = vadd.f32 0.0, %v1336
        %v1338 = vpop.f32.mrb[0].mxu0
        %v1339 = vpop.f32.mrb[0].mxu0
        %v1340 = vadd.f32 0.0, %v1339
        %v1341 = vpop.f32.mrb[0].mxu0
        %1342 = vmatprep.mubr.bf16.mxu0 0
        %1343 = vmatmul.mubr.bf16.gmra.mrb[0].mxu0 %v1187
        %v1344 = vpop.f32.mrb[0].mxu0
        %v1345 = vadd.f32 0.0, %v1344
        %v1346 = vpop.f32.mrb[0].mxu0
        %v1347 = vpop.f32.mrb[0].mxu0
        %v1348 = vadd.f32 0.0, %v1347
        %v1349 = vpop.f32.mrb[0].mxu0
        %1350 = vmatprep.mubr.bf16.mxu0 0
        %1351 = vmatmul.mubr.bf16.gmra.mrb[0].mxu0 %v1188
        %v1352 = vpop.f32.mrb[0].mxu0
        %v1353 = vadd.f32 0.0, %v1352
        %v1354 = vpop.f32.mrb[0].mxu0
        %v1355 = vpop.f32.mrb[0].mxu0
        %v1356 = vadd.f32 0.0, %v1355
        %v1357 = vpop.f32.mrb[0].mxu0
        %1358 = vmatprep.mubr.bf16.mxu0 0
        %1359 = vmatmul.mubr.bf16.gmra.mrb[0].mxu0 %v1189
        %v1360 = vpop.f32.mrb[0].mxu0
        %v1361 = vadd.f32 0.0, %v1360
        %v1362 = vpop.f32.mrb[0].mxu0
        %v1363 = vpop.f32.mrb[0].mxu0
        %v1364 = vadd.f32 0.0, %v1363
        %v1365 = vpop.f32.mrb[0].mxu0
        %1366 = vdwg.mxu0
        %v1367 = vmax.f32 %v951, %v1241
        %v1368 = vmax.f32 %v954, %v1244
        %v1369 = vmax.f32 %v959, %v1249
        %v1370 = vmax.f32 %v962, %v1252
        %v1371 = vmax.f32 %v967, %v1257
        %v1372 = vmax.f32 %v970, %v1260
        %v1373 = vmax.f32 %v975, %v1265
        %v1374 = vmax.f32 %v978, %v1268
        %v1375 = vmax.f32 %v983, %v1273
        %v1376 = vmax.f32 %v986, %v1276
        %v1377 = vmax.f32 %v991, %v1281
        %v1378 = vmax.f32 %v994, %v1284
        %v1379 = vmax.f32 %v999, %v1289
        %v1380 = vmax.f32 %v1002, %v1292
        %v1381 = vmax.f32 %v1007, %v1297
        %v1382 = vmax.f32 %v1010, %v1300
        %v1383 = vmax.f32 %v1015, %v1305
        %v1384 = vmax.f32 %v1018, %v1308
        %v1385 = vmax.f32 %v1023, %v1313
        %v1386 = vmax.f32 %v1026, %v1316
        %v1387 = vmax.f32 %v1031, %v1321
        %v1388 = vmax.f32 %v1034, %v1324
        %v1389 = vmax.f32 %v1039, %v1329
        %v1390 = vmax.f32 %v1042, %v1332
        %v1391 = vmax.f32 %v1047, %v1337
        %v1392 = vmax.f32 %v1050, %v1340
        %v1393 = vmax.f32 %v1055, %v1345
        %v1394 = vmax.f32 %v1058, %v1348
        %v1395 = vmax.f32 %v1063, %v1353
        %v1396 = vmax.f32 %v1066, %v1356
        %v1397 = vmax.f32 %v1071, %v1361
        %v1398 = vmax.f32 %v1074, %v1364
        %s1399 = scalar_lea.vmem %s695, 256 [#allocation2]
        %v1400 = vld [vmem:[%s1399] sm:$0xf]
        %v1401 = vld [vmem:[%s1399 + $0x4] sm:$0xf]
        %v1402 = vld [vmem:[%s1399 + $0x8] sm:$0xf]
        %v1403 = vld [vmem:[%s1399 + $0xc] sm:$0xf]
        %v1404 = vld [vmem:[%s1399 + $0x10] sm:$0xf]
        %v1405 = vld [vmem:[%s1399 + $0x14] sm:$0xf]
        %v1406 = vld [vmem:[%s1399 + $0x18] sm:$0xf]
        %v1407 = vld [vmem:[%s1399 + $0x1c] sm:$0xf]
        %v1408 = vld [vmem:[%s1399 + $0x20] sm:$0xf]
        %v1409 = vld [vmem:[%s1399 + $0x24] sm:$0xf]
        %v1410 = vld [vmem:[%s1399 + $0x28] sm:$0xf]
        %v1411 = vld [vmem:[%s1399 + $0x2c] sm:$0xf]
        %v1412 = vld [vmem:[%s1399 + $0x30] sm:$0xf]
        %v1413 = vld [vmem:[%s1399 + $0x34] sm:$0xf]
        %v1414 = vld [vmem:[%s1399 + $0x38] sm:$0xf]
        %v1415 = vld [vmem:[%s1399 + $0x3c] sm:$0xf]
        %v1416 = vld [vmem:[%s1399 + $0x40] sm:$0xf]
        %v1417 = vld [vmem:[%s1399 + $0x44] sm:$0xf]
        %v1418 = vld [vmem:[%s1399 + $0x48] sm:$0xf]
        %v1419 = vld [vmem:[%s1399 + $0x4c] sm:$0xf]
        %v1420 = vld [vmem:[%s1399 + $0x50] sm:$0xf]
        %v1421 = vld [vmem:[%s1399 + $0x54] sm:$0xf]
        %v1422 = vld [vmem:[%s1399 + $0x58] sm:$0xf]
        %v1423 = vld [vmem:[%s1399 + $0x5c] sm:$0xf]
        %v1424 = vld [vmem:[%s1399 + $0x60] sm:$0xf]
        %v1425 = vld [vmem:[%s1399 + $0x64] sm:$0xf]
        %v1426 = vld [vmem:[%s1399 + $0x68] sm:$0xf]
        %v1427 = vld [vmem:[%s1399 + $0x6c] sm:$0xf]
        %v1428 = vld [vmem:[%s1399 + $0x70] sm:$0xf]
        %v1429 = vld [vmem:[%s1399 + $0x74] sm:$0xf]
        %v1430 = vld [vmem:[%s1399 + $0x78] sm:$0xf]
        %v1431 = vld [vmem:[%s1399 + $0x7c] sm:$0xf]
        %v1464 = vunpack.c.l.b16 %v1400
        %v1465 = vunpack.c.l.b16 %v1401
        %v1466 = vunpack.c.l.b16 %v1402
        %v1467 = vunpack.c.l.b16 %v1403
        %v1468 = vunpack.c.l.b16 %v1404
        %v1469 = vunpack.c.l.b16 %v1405
        %v1470 = vunpack.c.l.b16 %v1406
        %v1471 = vunpack.c.l.b16 %v1407
        %v1472 = vunpack.c.l.b16 %v1408
        %v1473 = vunpack.c.l.b16 %v1409
        %v1474 = vunpack.c.l.b16 %v1410
        %v1475 = vunpack.c.l.b16 %v1411
        %v1476 = vunpack.c.l.b16 %v1412
        %v1477 = vunpack.c.l.b16 %v1413
        %v1478 = vunpack.c.l.b16 %v1414
        %v1479 = vunpack.c.l.b16 %v1415
        %v1480 = vunpack.c.l.b16 %v1416
        %v1481 = vunpack.c.l.b16 %v1417
        %v1482 = vunpack.c.l.b16 %v1418
        %v1483 = vunpack.c.l.b16 %v1419
        %v1484 = vunpack.c.l.b16 %v1420
        %v1485 = vunpack.c.l.b16 %v1421
        %v1486 = vunpack.c.l.b16 %v1422
        %v1487 = vunpack.c.l.b16 %v1423
        %v1488 = vunpack.c.l.b16 %v1424
        %v1489 = vunpack.c.l.b16 %v1425
        %v1490 = vunpack.c.l.b16 %v1426
        %v1491 = vunpack.c.l.b16 %v1427
        %v1492 = vunpack.c.l.b16 %v1428
        %v1493 = vunpack.c.l.b16 %v1429
        %v1494 = vunpack.c.l.b16 %v1430
        %v1495 = vunpack.c.l.b16 %v1431
        %v1496 = vpack.c.b16 %v1465, %v1464
        %v1497 = vpack.c.b16 %v1467, %v1466
        %v1498 = vpack.c.b16 %v1469, %v1468
        %v1499 = vpack.c.b16 %v1471, %v1470
        %v1500 = vpack.c.b16 %v1473, %v1472
        %v1501 = vpack.c.b16 %v1475, %v1474
        %v1502 = vpack.c.b16 %v1477, %v1476
        %v1503 = vpack.c.b16 %v1479, %v1478
        %v1504 = vpack.c.b16 %v1481, %v1480
        %v1505 = vpack.c.b16 %v1483, %v1482
        %v1506 = vpack.c.b16 %v1485, %v1484
        %v1507 = vpack.c.b16 %v1487, %v1486
        %v1508 = vpack.c.b16 %v1489, %v1488
        %v1509 = vpack.c.b16 %v1491, %v1490
        %v1510 = vpack.c.b16 %v1493, %v1492
        %v1511 = vpack.c.b16 %v1495, %v1494
        %1528 = vmatprep.subr.bf16.mxu0 0
        %1529 = vmatpush1.bf16.msra.mxu0 %v900
        %1530 = vmatprep.subr.bf16.mxu0 0
        %1531 = vmatpush1.bf16.msra.mxu0 %v901
        %1532 = vmatprep.subr.bf16.mxu0 0
        %1533 = vmatpush1.bf16.msra.mxu0 %v902
        %1534 = vmatprep.subr.bf16.mxu0 0
        %1535 = vmatpush1.bf16.msra.mxu0 %v903
        %1536 = vmatprep.subr.bf16.mxu0 0
        %1537 = vmatpush1.bf16.msra.mxu0 %v904
        %1538 = vmatprep.subr.bf16.mxu0 0
        %1539 = vmatpush1.bf16.msra.mxu0 %v905
        %1540 = vmatprep.subr.bf16.mxu0 0
        %1541 = vmatpush1.bf16.msra.mxu0 %v906
        %1542 = vmatprep.subr.bf16.mxu0 0
        %1543 = vmatpush1.bf16.msra.mxu0 %v907
        %1544 = vmatprep.subr.bf16.mxu0 0
        %1545 = vmatpush1.bf16.msra.mxu0 0
        %1546 = vmatprep.subr.bf16.mxu0 0
        %1547 = vmatpush1.bf16.msra.mxu0 0
        %1548 = vmatprep.subr.bf16.mxu0 0
        %1549 = vmatpush1.bf16.msra.mxu0 0
        %1550 = vmatprep.subr.bf16.mxu0 0
        %1551 = vmatpush1.bf16.msra.mxu0 0
        %1552 = vmatprep.subr.bf16.mxu0 0
        %1553 = vmatpush1.bf16.msra.mxu0 0
        %1554 = vmatprep.subr.bf16.mxu0 0
        %1555 = vmatpush1.bf16.msra.mxu0 0
        %1556 = vmatprep.subr.bf16.mxu0 0
        %1557 = vmatpush1.bf16.msra.mxu0 0
        %1558 = vmatprep.subr.bf16.mxu0 0
        %1559 = vmatpush1.bf16.msra.mxu0 0
        %1560 = vmatprep.mubr.bf16.mxu0 0
        %1561 = vmatmul.mubr.bf16.gmra.mrb[0].mxu0 %v1496
        %v1562 = vpop.f32.mrb[0].mxu0
        %v1563 = vadd.f32 0.0, %v1562
        %v1564 = vpop.f32.mrb[0].mxu0
        %v1565 = vpop.f32.mrb[0].mxu0
        %v1566 = vadd.f32 0.0, %v1565
        %v1567 = vpop.f32.mrb[0].mxu0
        %1568 = vmatprep.mubr.bf16.mxu0 0
        %1569 = vmatmul.mubr.bf16.gmra.mrb[0].mxu0 %v1497
        %v1570 = vpop.f32.mrb[0].mxu0
        %v1571 = vadd.f32 0.0, %v1570
        %v1572 = vpop.f32.mrb[0].mxu0
        %v1573 = vpop.f32.mrb[0].mxu0
        %v1574 = vadd.f32 0.0, %v1573
        %v1575 = vpop.f32.mrb[0].mxu0
        %1576 = vmatprep.mubr.bf16.mxu0 0
        %1577 = vmatmul.mubr.bf16.gmra.mrb[0].mxu0 %v1498
        %v1578 = vpop.f32.mrb[0].mxu0
        %v1579 = vadd.f32 0.0, %v1578
        %v1580 = vpop.f32.mrb[0].mxu0
        %v1581 = vpop.f32.mrb[0].mxu0
        %v1582 = vadd.f32 0.0, %v1581
        %v1583 = vpop.f32.mrb[0].mxu0
        %1584 = vmatprep.mubr.bf16.mxu0 0
        %1585 = vmatmul.mubr.bf16.gmra.mrb[0].mxu0 %v1499
        %v1586 = vpop.f32.mrb[0].mxu0
        %v1587 = vadd.f32 0.0, %v1586
        %v1588 = vpop.f32.mrb[0].mxu0
        %v1589 = vpop.f32.mrb[0].mxu0
        %v1590 = vadd.f32 0.0, %v1589
        %v1591 = vpop.f32.mrb[0].mxu0
        %1592 = vmatprep.mubr.bf16.mxu0 0
        %1593 = vmatmul.mubr.bf16.gmra.mrb[0].mxu0 %v1500
        %v1594 = vpop.f32.mrb[0].mxu0
        %v1595 = vadd.f32 0.0, %v1594
        %v1596 = vpop.f32.mrb[0].mxu0
        %v1597 = vpop.f32.mrb[0].mxu0
        %v1598 = vadd.f32 0.0, %v1597
        %v1599 = vpop.f32.mrb[0].mxu0
        %1600 = vmatprep.mubr.bf16.mxu0 0
        %1601 = vmatmul.mubr.bf16.gmra.mrb[0].mxu0 %v1501
        %v1602 = vpop.f32.mrb[0].mxu0
        %v1603 = vadd.f32 0.0, %v1602
        %v1604 = vpop.f32.mrb[0].mxu0
        %v1605 = vpop.f32.mrb[0].mxu0
        %v1606 = vadd.f32 0.0, %v1605
        %v1607 = vpop.f32.mrb[0].mxu0
        %1608 = vmatprep.mubr.bf16.mxu0 0
        %1609 = vmatmul.mubr.bf16.gmra.mrb[0].mxu0 %v1502
        %v1610 = vpop.f32.mrb[0].mxu0
        %v1611 = vadd.f32 0.0, %v1610
        %v1612 = vpop.f32.mrb[0].mxu0
        %v1613 = vpop.f32.mrb[0].mxu0
        %v1614 = vadd.f32 0.0, %v1613
        %v1615 = vpop.f32.mrb[0].mxu0
        %1616 = vmatprep.mubr.bf16.mxu0 0
        %1617 = vmatmul.mubr.bf16.gmra.mrb[0].mxu0 %v1503
        %v1618 = vpop.f32.mrb[0].mxu0
        %v1619 = vadd.f32 0.0, %v1618
        %v1620 = vpop.f32.mrb[0].mxu0
        %v1621 = vpop.f32.mrb[0].mxu0
        %v1622 = vadd.f32 0.0, %v1621
        %v1623 = vpop.f32.mrb[0].mxu0
        %1624 = vmatprep.mubr.bf16.mxu0 0
        %1625 = vmatmul.mubr.bf16.gmra.mrb[0].mxu0 %v1504
        %v1626 = vpop.f32.mrb[0].mxu0
        %v1627 = vadd.f32 0.0, %v1626
        %v1628 = vpop.f32.mrb[0].mxu0
        %v1629 = vpop.f32.mrb[0].mxu0
        %v1630 = vadd.f32 0.0, %v1629
        %v1631 = vpop.f32.mrb[0].mxu0
        %1632 = vmatprep.mubr.bf16.mxu0 0
        %1633 = vmatmul.mubr.bf16.gmra.mrb[0].mxu0 %v1505
        %v1634 = vpop.f32.mrb[0].mxu0
        %v1635 = vadd.f32 0.0, %v1634
        %v1636 = vpop.f32.mrb[0].mxu0
        %v1637 = vpop.f32.mrb[0].mxu0
        %v1638 = vadd.f32 0.0, %v1637
        %v1639 = vpop.f32.mrb[0].mxu0
        %1640 = vmatprep.mubr.bf16.mxu0 0
        %1641 = vmatmul.mubr.bf16.gmra.mrb[0].mxu0 %v1506
        %v1642 = vpop.f32.mrb[0].mxu0
        %v1643 = vadd.f32 0.0, %v1642
        %v1644 = vpop.f32.mrb[0].mxu0
        %v1645 = vpop.f32.mrb[0].mxu0
        %v1646 = vadd.f32 0.0, %v1645
        %v1647 = vpop.f32.mrb[0].mxu0
        %1648 = vmatprep.mubr.bf16.mxu0 0
        %1649 = vmatmul.mubr.bf16.gmra.mrb[0].mxu0 %v1507
        %v1650 = vpop.f32.mrb[0].mxu0
        %v1651 = vadd.f32 0.0, %v1650
        %v1652 = vpop.f32.mrb[0].mxu0
        %v1653 = vpop.f32.mrb[0].mxu0
        %v1654 = vadd.f32 0.0, %v1653
        %v1655 = vpop.f32.mrb[0].mxu0
        %1656 = vmatprep.mubr.bf16.mxu0 0
        %1657 = vmatmul.mubr.bf16.gmra.mrb[0].mxu0 %v1508
        %v1658 = vpop.f32.mrb[0].mxu0
        %v1659 = vadd.f32 0.0, %v1658
        %v1660 = vpop.f32.mrb[0].mxu0
        %v1661 = vpop.f32.mrb[0].mxu0
        %v1662 = vadd.f32 0.0, %v1661
        %v1663 = vpop.f32.mrb[0].mxu0
        %1664 = vmatprep.mubr.bf16.mxu0 0
        %1665 = vmatmul.mubr.bf16.gmra.mrb[0].mxu0 %v1509
        %v1666 = vpop.f32.mrb[0].mxu0
        %v1667 = vadd.f32 0.0, %v1666
        %v1668 = vpop.f32.mrb[0].mxu0
        %v1669 = vpop.f32.mrb[0].mxu0
        %v1670 = vadd.f32 0.0, %v1669
        %v1671 = vpop.f32.mrb[0].mxu0
        %1672 = vmatprep.mubr.bf16.mxu0 0
        %1673 = vmatmul.mubr.bf16.gmra.mrb[0].mxu0 %v1510
        %v1674 = vpop.f32.mrb[0].mxu0
        %v1675 = vadd.f32 0.0, %v1674
        %v1676 = vpop.f32.mrb[0].mxu0
        %v1677 = vpop.f32.mrb[0].mxu0
        %v1678 = vadd.f32 0.0, %v1677
        %v1679 = vpop.f32.mrb[0].mxu0
        %1680 = vmatprep.mubr.bf16.mxu0 0
        %1681 = vmatmul.mubr.bf16.gmra.mrb[0].mxu0 %v1511
        %v1682 = vpop.f32.mrb[0].mxu0
        %v1683 = vadd.f32 0.0, %v1682
        %v1684 = vpop.f32.mrb[0].mxu0
        %v1685 = vpop.f32.mrb[0].mxu0
        %v1686 = vadd.f32 0.0, %v1685
        %v1687 = vpop.f32.mrb[0].mxu0
        %1688 = vdwg.mxu0
        %v1689 = vmax.f32 %v1367, %v1563
        %v1690 = vmax.f32 %v1368, %v1566
        %v1691 = vmax.f32 %v1369, %v1571
        %v1692 = vmax.f32 %v1370, %v1574
        %v1693 = vmax.f32 %v1371, %v1579
        %v1694 = vmax.f32 %v1372, %v1582
        %v1695 = vmax.f32 %v1373, %v1587
        %v1696 = vmax.f32 %v1374, %v1590
        %v1697 = vmax.f32 %v1375, %v1595
        %v1698 = vmax.f32 %v1376, %v1598
        %v1699 = vmax.f32 %v1377, %v1603
        %v1700 = vmax.f32 %v1378, %v1606
        %v1701 = vmax.f32 %v1379, %v1611
        %v1702 = vmax.f32 %v1380, %v1614
        %v1703 = vmax.f32 %v1381, %v1619
        %v1704 = vmax.f32 %v1382, %v1622
        %v1705 = vmax.f32 %v1383, %v1627
        %v1706 = vmax.f32 %v1384, %v1630
        %v1707 = vmax.f32 %v1385, %v1635
        %v1708 = vmax.f32 %v1386, %v1638
        %v1709 = vmax.f32 %v1387, %v1643
        %v1710 = vmax.f32 %v1388, %v1646
        %v1711 = vmax.f32 %v1389, %v1651
        %v1712 = vmax.f32 %v1390, %v1654
        %v1713 = vmax.f32 %v1391, %v1659
        %v1714 = vmax.f32 %v1392, %v1662
        %v1715 = vmax.f32 %v1393, %v1667
        %v1716 = vmax.f32 %v1394, %v1670
        %v1717 = vmax.f32 %v1395, %v1675
        %v1718 = vmax.f32 %v1396, %v1678
        %v1719 = vmax.f32 %v1397, %v1683
        %v1720 = vmax.f32 %v1398, %v1686
        %s1721 = scalar_lea.vmem %s695, 384 [#allocation2]
        %v1722 = vld [vmem:[%s1721] sm:$0xf]
        %v1723 = vld [vmem:[%s1721 + $0x4] sm:$0xf]
        %v1724 = vld [vmem:[%s1721 + $0x8] sm:$0xf]
        %v1725 = vld [vmem:[%s1721 + $0xc] sm:$0xf]
        %v1726 = vld [vmem:[%s1721 + $0x10] sm:$0xf]
        %v1727 = vld [vmem:[%s1721 + $0x14] sm:$0xf]
        %v1728 = vld [vmem:[%s1721 + $0x18] sm:$0xf]
        %v1729 = vld [vmem:[%s1721 + $0x1c] sm:$0xf]
        %v1730 = vld [vmem:[%s1721 + $0x20] sm:$0xf]
        %v1731 = vld [vmem:[%s1721 + $0x24] sm:$0xf]
        %v1732 = vld [vmem:[%s1721 + $0x28] sm:$0xf]
        %v1733 = vld [vmem:[%s1721 + $0x2c] sm:$0xf]
        %v1734 = vld [vmem:[%s1721 + $0x30] sm:$0xf]
        %v1735 = vld [vmem:[%s1721 + $0x34] sm:$0xf]
        %v1736 = vld [vmem:[%s1721 + $0x38] sm:$0xf]
        %v1737 = vld [vmem:[%s1721 + $0x3c] sm:$0xf]
        %v1738 = vld [vmem:[%s1721 + $0x40] sm:$0xf]
        %v1739 = vld [vmem:[%s1721 + $0x44] sm:$0xf]
        %v1740 = vld [vmem:[%s1721 + $0x48] sm:$0xf]
        %v1741 = vld [vmem:[%s1721 + $0x4c] sm:$0xf]
        %v1742 = vld [vmem:[%s1721 + $0x50] sm:$0xf]
        %v1743 = vld [vmem:[%s1721 + $0x54] sm:$0xf]
        %v1744 = vld [vmem:[%s1721 + $0x58] sm:$0xf]
        %v1745 = vld [vmem:[%s1721 + $0x5c] sm:$0xf]
        %v1746 = vld [vmem:[%s1721 + $0x60] sm:$0xf]
        %v1747 = vld [vmem:[%s1721 + $0x64] sm:$0xf]
        %v1748 = vld [vmem:[%s1721 + $0x68] sm:$0xf]
        %v1749 = vld [vmem:[%s1721 + $0x6c] sm:$0xf]
        %v1750 = vld [vmem:[%s1721 + $0x70] sm:$0xf]
        %v1751 = vld [vmem:[%s1721 + $0x74] sm:$0xf]
        %v1752 = vld [vmem:[%s1721 + $0x78] sm:$0xf]
        %v1753 = vld [vmem:[%s1721 + $0x7c] sm:$0xf]
        %v1786 = vunpack.c.l.b16 %v1722
        %v1787 = vunpack.c.l.b16 %v1723
        %v1788 = vunpack.c.l.b16 %v1724
        %v1789 = vunpack.c.l.b16 %v1725
        %v1790 = vunpack.c.l.b16 %v1726
        %v1791 = vunpack.c.l.b16 %v1727
        %v1792 = vunpack.c.l.b16 %v1728
        %v1793 = vunpack.c.l.b16 %v1729
        %v1794 = vunpack.c.l.b16 %v1730
        %v1795 = vunpack.c.l.b16 %v1731
        %v1796 = vunpack.c.l.b16 %v1732
        %v1797 = vunpack.c.l.b16 %v1733
        %v1798 = vunpack.c.l.b16 %v1734
        %v1799 = vunpack.c.l.b16 %v1735
        %v1800 = vunpack.c.l.b16 %v1736
        %v1801 = vunpack.c.l.b16 %v1737
        %v1802 = vunpack.c.l.b16 %v1738
        %v1803 = vunpack.c.l.b16 %v1739
        %v1804 = vunpack.c.l.b16 %v1740
        %v1805 = vunpack.c.l.b16 %v1741
        %v1806 = vunpack.c.l.b16 %v1742
        %v1807 = vunpack.c.l.b16 %v1743
        %v1808 = vunpack.c.l.b16 %v1744
        %v1809 = vunpack.c.l.b16 %v1745
        %v1810 = vunpack.c.l.b16 %v1746
        %v1811 = vunpack.c.l.b16 %v1747
        %v1812 = vunpack.c.l.b16 %v1748
        %v1813 = vunpack.c.l.b16 %v1749
        %v1814 = vunpack.c.l.b16 %v1750
        %v1815 = vunpack.c.l.b16 %v1751
        %v1816 = vunpack.c.l.b16 %v1752
        %v1817 = vunpack.c.l.b16 %v1753
        %v1818 = vpack.c.b16 %v1787, %v1786
        %v1819 = vpack.c.b16 %v1789, %v1788
        %v1820 = vpack.c.b16 %v1791, %v1790
        %v1821 = vpack.c.b16 %v1793, %v1792
        %v1822 = vpack.c.b16 %v1795, %v1794
        %v1823 = vpack.c.b16 %v1797, %v1796
        %v1824 = vpack.c.b16 %v1799, %v1798
        %v1825 = vpack.c.b16 %v1801, %v1800
        %v1826 = vpack.c.b16 %v1803, %v1802
        %v1827 = vpack.c.b16 %v1805, %v1804
        %v1828 = vpack.c.b16 %v1807, %v1806
        %v1829 = vpack.c.b16 %v1809, %v1808
        %v1830 = vpack.c.b16 %v1811, %v1810
        %v1831 = vpack.c.b16 %v1813, %v1812
        %v1832 = vpack.c.b16 %v1815, %v1814
        %v1833 = vpack.c.b16 %v1817, %v1816
        %1850 = vmatprep.subr.bf16.mxu0 0
        %1851 = vmatpush1.bf16.msra.mxu0 %v900
        %1852 = vmatprep.subr.bf16.mxu0 0
        %1853 = vmatpush1.bf16.msra.mxu0 %v901
        %1854 = vmatprep.subr.bf16.mxu0 0
        %1855 = vmatpush1.bf16.msra.mxu0 %v902
        %1856 = vmatprep.subr.bf16.mxu0 0
        %1857 = vmatpush1.bf16.msra.mxu0 %v903
        %1858 = vmatprep.subr.bf16.mxu0 0
        %1859 = vmatpush1.bf16.msra.mxu0 %v904
        %1860 = vmatprep.subr.bf16.mxu0 0
        %1861 = vmatpush1.bf16.msra.mxu0 %v905
        %1862 = vmatprep.subr.bf16.mxu0 0
        %1863 = vmatpush1.bf16.msra.mxu0 %v906
        %1864 = vmatprep.subr.bf16.mxu0 0
        %1865 = vmatpush1.bf16.msra.mxu0 %v907
        %1866 = vmatprep.subr.bf16.mxu0 0
        %1867 = vmatpush1.bf16.msra.mxu0 0
        %1868 = vmatprep.subr.bf16.mxu0 0
        %1869 = vmatpush1.bf16.msra.mxu0 0
        %1870 = vmatprep.subr.bf16.mxu0 0
        %1871 = vmatpush1.bf16.msra.mxu0 0
        %1872 = vmatprep.subr.bf16.mxu0 0
        %1873 = vmatpush1.bf16.msra.mxu0 0
        %1874 = vmatprep.subr.bf16.mxu0 0
        %1875 = vmatpush1.bf16.msra.mxu0 0
        %1876 = vmatprep.subr.bf16.mxu0 0
        %1877 = vmatpush1.bf16.msra.mxu0 0
        %1878 = vmatprep.subr.bf16.mxu0 0
        %1879 = vmatpush1.bf16.msra.mxu0 0
        %1880 = vmatprep.subr.bf16.mxu0 0
        %1881 = vmatpush1.bf16.msra.mxu0 0
        %1882 = vmatprep.mubr.bf16.mxu0 0
        %1883 = vmatmul.mubr.bf16.gmra.mrb[0].mxu0 %v1818
        %v1884 = vpop.f32.mrb[0].mxu0
        %v1885 = vadd.f32 0.0, %v1884
        %v1886 = vpop.f32.mrb[0].mxu0
        %v1887 = vpop.f32.mrb[0].mxu0
        %v1888 = vadd.f32 0.0, %v1887
        %v1889 = vpop.f32.mrb[0].mxu0
        %1890 = vmatprep.mubr.bf16.mxu0 0
        %1891 = vmatmul.mubr.bf16.gmra.mrb[0].mxu0 %v1819
        %v1892 = vpop.f32.mrb[0].mxu0
        %v1893 = vadd.f32 0.0, %v1892
        %v1894 = vpop.f32.mrb[0].mxu0
        %v1895 = vpop.f32.mrb[0].mxu0
        %v1896 = vadd.f32 0.0, %v1895
        %v1897 = vpop.f32.mrb[0].mxu0
        %1898 = vmatprep.mubr.bf16.mxu0 0
        %1899 = vmatmul.mubr.bf16.gmra.mrb[0].mxu0 %v1820
        %v1900 = vpop.f32.mrb[0].mxu0
        %v1901 = vadd.f32 0.0, %v1900
        %v1902 = vpop.f32.mrb[0].mxu0
        %v1903 = vpop.f32.mrb[0].mxu0
        %v1904 = vadd.f32 0.0, %v1903
        %v1905 = vpop.f32.mrb[0].mxu0
        %1906 = vmatprep.mubr.bf16.mxu0 0
        %1907 = vmatmul.mubr.bf16.gmra.mrb[0].mxu0 %v1821
        %v1908 = vpop.f32.mrb[0].mxu0
        %v1909 = vadd.f32 0.0, %v1908
        %v1910 = vpop.f32.mrb[0].mxu0
        %v1911 = vpop.f32.mrb[0].mxu0
        %v1912 = vadd.f32 0.0, %v1911
        %v1913 = vpop.f32.mrb[0].mxu0
        %1914 = vmatprep.mubr.bf16.mxu0 0
        %1915 = vmatmul.mubr.bf16.gmra.mrb[0].mxu0 %v1822
        %v1916 = vpop.f32.mrb[0].mxu0
        %v1917 = vadd.f32 0.0, %v1916
        %v1918 = vpop.f32.mrb[0].mxu0
        %v1919 = vpop.f32.mrb[0].mxu0
        %v1920 = vadd.f32 0.0, %v1919
        %v1921 = vpop.f32.mrb[0].mxu0
        %1922 = vmatprep.mubr.bf16.mxu0 0
        %1923 = vmatmul.mubr.bf16.gmra.mrb[0].mxu0 %v1823
        %v1924 = vpop.f32.mrb[0].mxu0
        %v1925 = vadd.f32 0.0, %v1924
        %v1926 = vpop.f32.mrb[0].mxu0
        %v1927 = vpop.f32.mrb[0].mxu0
        %v1928 = vadd.f32 0.0, %v1927
        %v1929 = vpop.f32.mrb[0].mxu0
        %1930 = vmatprep.mubr.bf16.mxu0 0
        %1931 = vmatmul.mubr.bf16.gmra.mrb[0].mxu0 %v1824
        %v1932 = vpop.f32.mrb[0].mxu0
        %v1933 = vadd.f32 0.0, %v1932
        %v1934 = vpop.f32.mrb[0].mxu0
        %v1935 = vpop.f32.mrb[0].mxu0
        %v1936 = vadd.f32 0.0, %v1935
        %v1937 = vpop.f32.mrb[0].mxu0
        %1938 = vmatprep.mubr.bf16.mxu0 0
        %1939 = vmatmul.mubr.bf16.gmra.mrb[0].mxu0 %v1825
        %v1940 = vpop.f32.mrb[0].mxu0
        %v1941 = vadd.f32 0.0, %v1940
        %v1942 = vpop.f32.mrb[0].mxu0
        %v1943 = vpop.f32.mrb[0].mxu0
        %v1944 = vadd.f32 0.0, %v1943
        %v1945 = vpop.f32.mrb[0].mxu0
        %1946 = vmatprep.mubr.bf16.mxu0 0
        %1947 = vmatmul.mubr.bf16.gmra.mrb[0].mxu0 %v1826
        %v1948 = vpop.f32.mrb[0].mxu0
        %v1949 = vadd.f32 0.0, %v1948
        %v1950 = vpop.f32.mrb[0].mxu0
        %v1951 = vpop.f32.mrb[0].mxu0
        %v1952 = vadd.f32 0.0, %v1951
        %v1953 = vpop.f32.mrb[0].mxu0
        %1954 = vmatprep.mubr.bf16.mxu0 0
        %1955 = vmatmul.mubr.bf16.gmra.mrb[0].mxu0 %v1827
        %v1956 = vpop.f32.mrb[0].mxu0
        %v1957 = vadd.f32 0.0, %v1956
        %v1958 = vpop.f32.mrb[0].mxu0
        %v1959 = vpop.f32.mrb[0].mxu0
        %v1960 = vadd.f32 0.0, %v1959
        %v1961 = vpop.f32.mrb[0].mxu0
        %1962 = vmatprep.mubr.bf16.mxu0 0
        %1963 = vmatmul.mubr.bf16.gmra.mrb[0].mxu0 %v1828
        %v1964 = vpop.f32.mrb[0].mxu0
        %v1965 = vadd.f32 0.0, %v1964
        %v1966 = vpop.f32.mrb[0].mxu0
        %v1967 = vpop.f32.mrb[0].mxu0
        %v1968 = vadd.f32 0.0, %v1967
        %v1969 = vpop.f32.mrb[0].mxu0
        %1970 = vmatprep.mubr.bf16.mxu0 0
        %1971 = vmatmul.mubr.bf16.gmra.mrb[0].mxu0 %v1829
        %v1972 = vpop.f32.mrb[0].mxu0
        %v1973 = vadd.f32 0.0, %v1972
        %v1974 = vpop.f32.mrb[0].mxu0
        %v1975 = vpop.f32.mrb[0].mxu0
        %v1976 = vadd.f32 0.0, %v1975
        %v1977 = vpop.f32.mrb[0].mxu0
        %1978 = vmatprep.mubr.bf16.mxu0 0
        %1979 = vmatmul.mubr.bf16.gmra.mrb[0].mxu0 %v1830
        %v1980 = vpop.f32.mrb[0].mxu0
        %v1981 = vadd.f32 0.0, %v1980
        %v1982 = vpop.f32.mrb[0].mxu0
        %v1983 = vpop.f32.mrb[0].mxu0
        %v1984 = vadd.f32 0.0, %v1983
        %v1985 = vpop.f32.mrb[0].mxu0
        %1986 = vmatprep.mubr.bf16.mxu0 0
        %1987 = vmatmul.mubr.bf16.gmra.mrb[0].mxu0 %v1831
        %v1988 = vpop.f32.mrb[0].mxu0
        %v1989 = vadd.f32 0.0, %v1988
        %v1990 = vpop.f32.mrb[0].mxu0
        %v1991 = vpop.f32.mrb[0].mxu0
        %v1992 = vadd.f32 0.0, %v1991
        %v1993 = vpop.f32.mrb[0].mxu0
        %1994 = vmatprep.mubr.bf16.mxu0 0
        %1995 = vmatmul.mubr.bf16.gmra.mrb[0].mxu0 %v1832
        %v1996 = vpop.f32.mrb[0].mxu0
        %v1997 = vadd.f32 0.0, %v1996
        %v1998 = vpop.f32.mrb[0].mxu0
        %v1999 = vpop.f32.mrb[0].mxu0
        %v2000 = vadd.f32 0.0, %v1999
        %v2001 = vpop.f32.mrb[0].mxu0
        %2002 = vmatprep.mubr.bf16.mxu0 0
        %2003 = vmatmul.mubr.bf16.gmra.mrb[0].mxu0 %v1833
        %v2004 = vpop.f32.mrb[0].mxu0
        %v2005 = vadd.f32 0.0, %v2004
        %v2006 = vpop.f32.mrb[0].mxu0
        %v2007 = vpop.f32.mrb[0].mxu0
        %v2008 = vadd.f32 0.0, %v2007
        %v2009 = vpop.f32.mrb[0].mxu0
        %2010 = vdwg.mxu0
        %v2011 = vmax.f32 %v1689, %v1885
        %v2012 = vmax.f32 %v1690, %v1888
        %v2013 = vmax.f32 %v1691, %v1893
        %v2014 = vmax.f32 %v1692, %v1896
        %v2015 = vmax.f32 %v1693, %v1901
        %v2016 = vmax.f32 %v1694, %v1904
        %v2017 = vmax.f32 %v1695, %v1909
        %v2018 = vmax.f32 %v1696, %v1912
        %v2019 = vmax.f32 %v1697, %v1917
        %v2020 = vmax.f32 %v1698, %v1920
        %v2021 = vmax.f32 %v1699, %v1925
        %v2022 = vmax.f32 %v1700, %v1928
        %v2023 = vmax.f32 %v1701, %v1933
        %v2024 = vmax.f32 %v1702, %v1936
        %v2025 = vmax.f32 %v1703, %v1941
        %v2026 = vmax.f32 %v1704, %v1944
        %v2027 = vmax.f32 %v1705, %v1949
        %v2028 = vmax.f32 %v1706, %v1952
        %v2029 = vmax.f32 %v1707, %v1957
        %v2030 = vmax.f32 %v1708, %v1960
        %v2031 = vmax.f32 %v1709, %v1965
        %v2032 = vmax.f32 %v1710, %v1968
        %v2033 = vmax.f32 %v1711, %v1973
        %v2034 = vmax.f32 %v1712, %v1976
        %v2035 = vmax.f32 %v1713, %v1981
        %v2036 = vmax.f32 %v1714, %v1984
        %v2037 = vmax.f32 %v1715, %v1989
        %v2038 = vmax.f32 %v1716, %v1992
        %v2039 = vmax.f32 %v1717, %v1997
        %v2040 = vmax.f32 %v1718, %v2000
        %v2041 = vmax.f32 %v1719, %v2005
        %v2042 = vmax.f32 %v1720, %v2008
        %v2043 = vld [vmem:[%s2] sm:$0x1]
        %v2045 = vlaneseq
        %v2046 = vshrl.u32 %v2045, 7
        %v2047 = vsub.s32 0, %v2046
        %v2048 = vrot.slane %v2043, %v2047
        %v2050 = vadd.f32 %v2011, %v2048
        %v2051 = vadd.f32 %v2012, %v2048
        %v2052 = vadd.f32 %v2013, %v2048
        %v2053 = vadd.f32 %v2014, %v2048
        %v2054 = vadd.f32 %v2015, %v2048
        %v2055 = vadd.f32 %v2016, %v2048
        %v2056 = vadd.f32 %v2017, %v2048
        %v2057 = vadd.f32 %v2018, %v2048
        %v2058 = vadd.f32 %v2019, %v2048
        %v2059 = vadd.f32 %v2020, %v2048
        %v2060 = vadd.f32 %v2021, %v2048
        %v2061 = vadd.f32 %v2022, %v2048
        %v2062 = vadd.f32 %v2023, %v2048
        %v2063 = vadd.f32 %v2024, %v2048
        %v2064 = vadd.f32 %v2025, %v2048
        %v2065 = vadd.f32 %v2026, %v2048
        %v2066 = vadd.f32 %v2027, %v2048
        %v2067 = vadd.f32 %v2028, %v2048
        %v2068 = vadd.f32 %v2029, %v2048
        %v2069 = vadd.f32 %v2030, %v2048
        %v2070 = vadd.f32 %v2031, %v2048
        %v2071 = vadd.f32 %v2032, %v2048
        %v2072 = vadd.f32 %v2033, %v2048
        %v2073 = vadd.f32 %v2034, %v2048
        %v2074 = vadd.f32 %v2035, %v2048
        %v2075 = vadd.f32 %v2036, %v2048
        %v2076 = vadd.f32 %v2037, %v2048
        %v2077 = vadd.f32 %v2038, %v2048
        %v2078 = vadd.f32 %v2039, %v2048
        %v2079 = vadd.f32 %v2040, %v2048
        %v2080 = vadd.f32 %v2041, %v2048
        %v2081 = vadd.f32 %v2042, %v2048
        %v2082 = vmax.f32 %v2050, 0.0
        %v2083 = vmax.f32 %v2051, 0.0
        %v2084 = vmax.f32 %v2052, 0.0
        %v2085 = vmax.f32 %v2053, 0.0
        %v2086 = vmax.f32 %v2054, 0.0
        %v2087 = vmax.f32 %v2055, 0.0
        %v2088 = vmax.f32 %v2056, 0.0
        %v2089 = vmax.f32 %v2057, 0.0
        %v2090 = vmax.f32 %v2058, 0.0
        %v2091 = vmax.f32 %v2059, 0.0
        %v2092 = vmax.f32 %v2060, 0.0
        %v2093 = vmax.f32 %v2061, 0.0
        %v2094 = vmax.f32 %v2062, 0.0
        %v2095 = vmax.f32 %v2063, 0.0
        %v2096 = vmax.f32 %v2064, 0.0
        %v2097 = vmax.f32 %v2065, 0.0
        %v2098 = vmax.f32 %v2066, 0.0
        %v2099 = vmax.f32 %v2067, 0.0
        %v2100 = vmax.f32 %v2068, 0.0
        %v2101 = vmax.f32 %v2069, 0.0
        %v2102 = vmax.f32 %v2070, 0.0
        %v2103 = vmax.f32 %v2071, 0.0
        %v2104 = vmax.f32 %v2072, 0.0
        %v2105 = vmax.f32 %v2073, 0.0
        %v2106 = vmax.f32 %v2074, 0.0
        %v2107 = vmax.f32 %v2075, 0.0
        %v2108 = vmax.f32 %v2076, 0.0
        %v2109 = vmax.f32 %v2077, 0.0
        %v2110 = vmax.f32 %v2078, 0.0
        %v2111 = vmax.f32 %v2079, 0.0
        %v2112 = vmax.f32 %v2080, 0.0
        %v2113 = vmax.f32 %v2081, 0.0
        %v2114 = vpack.c.bf16 %v2083, %v2082
        %v2115 = vpack.c.bf16 %v2085, %v2084
        %v2116 = vpack.c.bf16 %v2087, %v2086
        %v2117 = vpack.c.bf16 %v2089, %v2088
        %v2118 = vpack.c.bf16 %v2091, %v2090
        %v2119 = vpack.c.bf16 %v2093, %v2092
        %v2120 = vpack.c.bf16 %v2095, %v2094
        %v2121 = vpack.c.bf16 %v2097, %v2096
        %v2122 = vpack.c.bf16 %v2099, %v2098
        %v2123 = vpack.c.bf16 %v2101, %v2100
        %v2124 = vpack.c.bf16 %v2103, %v2102
        %v2125 = vpack.c.bf16 %v2105, %v2104
        %v2126 = vpack.c.bf16 %v2107, %v2106
        %v2127 = vpack.c.bf16 %v2109, %v2108
        %v2128 = vpack.c.bf16 %v2111, %v2110
        %v2129 = vpack.c.bf16 %v2113, %v2112
        %v2146 = vunpack.c.l.b16 %v2114
        %v2147 = vunpack.c.h.b16 %v2114
        %v2148 = vunpack.c.l.b16 %v2115
        %v2149 = vunpack.c.h.b16 %v2115
        %v2150 = vunpack.c.l.b16 %v2116
        %v2151 = vunpack.c.h.b16 %v2116
        %v2152 = vunpack.c.l.b16 %v2117
        %v2153 = vunpack.c.h.b16 %v2117
        %v2154 = vunpack.c.l.b16 %v2118
        %v2155 = vunpack.c.h.b16 %v2118
        %v2156 = vunpack.c.l.b16 %v2119
        %v2157 = vunpack.c.h.b16 %v2119
        %v2158 = vunpack.c.l.b16 %v2120
        %v2159 = vunpack.c.h.b16 %v2120
        %v2160 = vunpack.c.l.b16 %v2121
        %v2161 = vunpack.c.h.b16 %v2121
        %v2162 = vunpack.c.l.b16 %v2122
        %v2163 = vunpack.c.h.b16 %v2122
        %v2164 = vunpack.c.l.b16 %v2123
        %v2165 = vunpack.c.h.b16 %v2123
        %v2166 = vunpack.c.l.b16 %v2124
        %v2167 = vunpack.c.h.b16 %v2124
        %v2168 = vunpack.c.l.b16 %v2125
        %v2169 = vunpack.c.h.b16 %v2125
        %v2170 = vunpack.c.l.b16 %v2126
        %v2171 = vunpack.c.h.b16 %v2126
        %v2172 = vunpack.c.l.b16 %v2127
        %v2173 = vunpack.c.h.b16 %v2127
        %v2174 = vunpack.c.l.b16 %v2128
        %v2175 = vunpack.c.h.b16 %v2128
        %v2176 = vunpack.c.l.b16 %v2129
        %v2177 = vunpack.c.h.b16 %v2129
        %v2178 = vpack.c.b16 %v2146, %v2146
        %v2179 = vpack.c.b16 %v2147, %v2147
        %v2180 = vpack.c.b16 %v2148, %v2148
        %v2181 = vpack.c.b16 %v2149, %v2149
        %v2182 = vpack.c.b16 %v2150, %v2150
        %v2183 = vpack.c.b16 %v2151, %v2151
        %v2184 = vpack.c.b16 %v2152, %v2152
        %v2185 = vpack.c.b16 %v2153, %v2153
        %v2186 = vpack.c.b16 %v2154, %v2154
        %v2187 = vpack.c.b16 %v2155, %v2155
        %v2188 = vpack.c.b16 %v2156, %v2156
        %v2189 = vpack.c.b16 %v2157, %v2157
        %v2190 = vpack.c.b16 %v2158, %v2158
        %v2191 = vpack.c.b16 %v2159, %v2159
        %v2192 = vpack.c.b16 %v2160, %v2160
        %v2193 = vpack.c.b16 %v2161, %v2161
        %v2194 = vpack.c.b16 %v2162, %v2162
        %v2195 = vpack.c.b16 %v2163, %v2163
        %v2196 = vpack.c.b16 %v2164, %v2164
        %v2197 = vpack.c.b16 %v2165, %v2165
        %v2198 = vpack.c.b16 %v2166, %v2166
        %v2199 = vpack.c.b16 %v2167, %v2167
        %v2200 = vpack.c.b16 %v2168, %v2168
        %v2201 = vpack.c.b16 %v2169, %v2169
        %v2202 = vpack.c.b16 %v2170, %v2170
        %v2203 = vpack.c.b16 %v2171, %v2171
        %v2204 = vpack.c.b16 %v2172, %v2172
        %v2205 = vpack.c.b16 %v2173, %v2173
        %v2206 = vpack.c.b16 %v2174, %v2174
        %v2207 = vpack.c.b16 %v2175, %v2175
        %v2208 = vpack.c.b16 %v2176, %v2176
        %v2209 = vpack.c.b16 %v2177, %v2177
        %2242 = vst [vmem:[%s721] sm:$0xf] %v2178
        %2243 = vst [vmem:[%s721 + $0x4] sm:$0xf] %v2179
        %2244 = vst [vmem:[%s721 + $0x8] sm:$0xf] %v2180
        %2245 = vst [vmem:[%s721 + $0xc] sm:$0xf] %v2181
        %2246 = vst [vmem:[%s721 + $0x10] sm:$0xf] %v2182
        %2247 = vst [vmem:[%s721 + $0x14] sm:$0xf] %v2183
        %2248 = vst [vmem:[%s721 + $0x18] sm:$0xf] %v2184
        %2249 = vst [vmem:[%s721 + $0x1c] sm:$0xf] %v2185
        %2250 = vst [vmem:[%s721 + $0x20] sm:$0xf] %v2186
        %2251 = vst [vmem:[%s721 + $0x24] sm:$0xf] %v2187
        %2252 = vst [vmem:[%s721 + $0x28] sm:$0xf] %v2188
        %2253 = vst [vmem:[%s721 + $0x2c] sm:$0xf] %v2189
        %2254 = vst [vmem:[%s721 + $0x30] sm:$0xf] %v2190
        %2255 = vst [vmem:[%s721 + $0x34] sm:$0xf] %v2191
        %2256 = vst [vmem:[%s721 + $0x38] sm:$0xf] %v2192
        %2257 = vst [vmem:[%s721 + $0x3c] sm:$0xf] %v2193
        %2258 = vst [vmem:[%s721 + $0x40] sm:$0xf] %v2194
        %2259 = vst [vmem:[%s721 + $0x44] sm:$0xf] %v2195
        %2260 = vst [vmem:[%s721 + $0x48] sm:$0xf] %v2196
        %2261 = vst [vmem:[%s721 + $0x4c] sm:$0xf] %v2197
        %2262 = vst [vmem:[%s721 + $0x50] sm:$0xf] %v2198
        %2263 = vst [vmem:[%s721 + $0x54] sm:$0xf] %v2199
        %2264 = vst [vmem:[%s721 + $0x58] sm:$0xf] %v2200
        %2265 = vst [vmem:[%s721 + $0x5c] sm:$0xf] %v2201
        %2266 = vst [vmem:[%s721 + $0x60] sm:$0xf] %v2202
        %2267 = vst [vmem:[%s721 + $0x64] sm:$0xf] %v2203
        %2268 = vst [vmem:[%s721 + $0x68] sm:$0xf] %v2204
        %2269 = vst [vmem:[%s721 + $0x6c] sm:$0xf] %v2205
        %2270 = vst [vmem:[%s721 + $0x70] sm:$0xf] %v2206
        %2271 = vst [vmem:[%s721 + $0x74] sm:$0xf] %v2207
        %2272 = vst [vmem:[%s721 + $0x78] sm:$0xf] %v2208
        %2273 = vst [vmem:[%s721 + $0x7c] sm:$0xf] %v2209
        %s2274 = smul.u32 32, %s14
        %p2275 = scmp.lt.s32.totalorder %s2274, 63
        %s2276 = scalar_select %p2275, %s2274, 63
        %s2277 = smul.addr %s2276, 4
        %s2278 = scalar_lea.vmem %s3, %s2277
        // Predicated region
        $region74: #{net_forward.3} parent=68 // pred_check
          %p2279 = pneg %p100
        $region75: #{net_forward.3} parent=68 // pred_check_branch
          %2281 = sbr.rel (%p2279) target = $region77
        $region76: #{net_forward.3} parent=68 // pred_region
          %s2282 = smul.u32 32, %s14
        $region77: #{net_forward.3} parent=68 // pred_fallthru
          _
      $region69: #{net_forward.3} parent=5 // pred_fallthru
        _
      %p2283 = scmp.le.s32.totalorder 2, %s9
      // Predicated region
      $region78: #{net_forward.3} parent=5 // pred_check
        %p2284 = pneg %p2283
      $region79: #{net_forward.3} parent=5 // pred_check_branch
        %2286 = sbr.rel (%p2284) target = $region81
      $region80: #{net_forward.3} parent=5 // pred_region
        %s2287 = ssub.s32 %s9, 2
        // Predicated region
        $region82: #{net_forward.3} parent=80 // pred_check
          %p2288 = pneg %p106
        $region83: #{net_forward.3} parent=80 // pred_check_branch
          %2290 = sbr.rel (%p2288) target = $region85
        $region84: #{net_forward.3} parent=80 // pred_region
          %s2291 = smul.u32 32, %s15
          %p2292 = scmp.lt.s32.totalorder %s2291, 63
          %s2293 = scalar_select %p2292, %s2291, 63
          %s2294 = smul.addr %s2293, 4
          %s2295 = scalar_lea.vmem %s3, %s2294
        $region85: #{net_forward.3} parent=80 // pred_fallthru
          _
      $region81: #{net_forward.3} parent=5 // pred_fallthru
        _
    $region6: #{net_forward.3} parent=1 // loop_footer
      %s13 = sadd.s32 1, %s9
    $region7: #{net_forward.3} parent=1 // loop_footer_branch
      %8 = sbr.rel target = $region3
    $region8: #{net_forward.3} parent=1 // loop_exit
      _

// kernel: net_forward.4
$region0: #{net_forward.4}
  #allocation0 [shape = 'u32[]', space=smem, size = 0x4, offset = 0x4, fixed_abs, tag = 'smem constant byte address 0x4 - core index']
  #allocation1 [shape = 'u32[144,128]{1,0:T(1,128)}', space=vmem, size = 0x12000, scoped, tag = 'internal scratch']
  %s0 = inlined_call_operand.vmem [shape: bf16[4,64,256], index: 0, kind: input, shape index: {}]
  %s1 = inlined_call_operand.vmem [shape: bf16[256,128], index: 1, kind: input, shape index: {}]
  %s2 = inlined_call_operand.vmem [shape: f32[1,128], index: 2, kind: input, shape index: {}]
  %s3 = inlined_call_operand.vmem [shape: bf16[64,128], index: 3, kind: output, shape index: {}]
  %s4 = sld [smem:[#allocation0]]
  $region22: #{net_forward.4} parent=0
    _
  %s6 = ssub.s32 1, %s4
  %s7 = scalar_select 0, %s6, %s4
  // Predicated region
  $region2: #{net_forward.4} parent=0 // pred_check
    _
  $region3: #{net_forward.4} parent=0 // pred_check_branch
    %9 = sbr.rel (0) target = $region5
  $region4: #{net_forward.4} parent=0 // pred_region
    _
  $region5: #{net_forward.4} parent=0 // pred_fallthru
    _
  // Predicated region
  $region6: #{net_forward.4} parent=0 // pred_check
    _
  $region7: #{net_forward.4} parent=0 // pred_check_branch
    %11 = sbr.rel (0) target = $region9
  $region8: #{net_forward.4} parent=0 // pred_region
    _
  $region9: #{net_forward.4} parent=0 // pred_fallthru
    _
  // Predicated region
  $region10: #{net_forward.4} parent=0 // pred_check
    _
  $region11: #{net_forward.4} parent=0 // pred_check_branch
    %13 = sbr.rel (0) target = $region13
  $region12: #{net_forward.4} parent=0 // pred_region
    _
  $region13: #{net_forward.4} parent=0 // pred_fallthru
    _
  %v15 = vld [vmem:[%s1] sm:$0xf]
  %v16 = vld [vmem:[%s1 + $0x4] sm:$0xf]
  %v17 = vld [vmem:[%s1 + $0x8] sm:$0xf]
  %v18 = vld [vmem:[%s1 + $0xc] sm:$0xf]
  %v19 = vld [vmem:[%s1 + $0x10] sm:$0xf]
  %v20 = vld [vmem:[%s1 + $0x14] sm:$0xf]
  %v21 = vld [vmem:[%s1 + $0x18] sm:$0xf]
  %v22 = vld [vmem:[%s1 + $0x1c] sm:$0xf]
  %v23 = vld [vmem:[%s1 + $0x20] sm:$0xf]
  %v24 = vld [vmem:[%s1 + $0x24] sm:$0xf]
  %v25 = vld [vmem:[%s1 + $0x28] sm:$0xf]
  %v26 = vld [vmem:[%s1 + $0x2c] sm:$0xf]
  %v27 = vld [vmem:[%s1 + $0x30] sm:$0xf]
  %v28 = vld [vmem:[%s1 + $0x34] sm:$0xf]
  %v29 = vld [vmem:[%s1 + $0x38] sm:$0xf]
  %v30 = vld [vmem:[%s1 + $0x3c] sm:$0xf]
  %v31 = vld [vmem:[%s1 + $0x40] sm:$0xf]
  %v32 = vld [vmem:[%s1 + $0x44] sm:$0xf]
  %v33 = vld [vmem:[%s1 + $0x48] sm:$0xf]
  %v34 = vld [vmem:[%s1 + $0x4c] sm:$0xf]
  %v35 = vld [vmem:[%s1 + $0x50] sm:$0xf]
  %v36 = vld [vmem:[%s1 + $0x54] sm:$0xf]
  %v37 = vld [vmem:[%s1 + $0x58] sm:$0xf]
  %v38 = vld [vmem:[%s1 + $0x5c] sm:$0xf]
  %v39 = vld [vmem:[%s1 + $0x60] sm:$0xf]
  %v40 = vld [vmem:[%s1 + $0x64] sm:$0xf]
  %v41 = vld [vmem:[%s1 + $0x68] sm:$0xf]
  %v42 = vld [vmem:[%s1 + $0x6c] sm:$0xf]
  %v43 = vld [vmem:[%s1 + $0x70] sm:$0xf]
  %v44 = vld [vmem:[%s1 + $0x74] sm:$0xf]
  %v45 = vld [vmem:[%s1 + $0x78] sm:$0xf]
  %v46 = vld [vmem:[%s1 + $0x7c] sm:$0xf]
  %v47 = vld [vmem:[%s0] sm:$0xff]
  %v48 = vld [vmem:[%s0 + $0x8] sm:$0xff]
  %v49 = vld [vmem:[%s0 + $0x10] sm:$0xff]
  %v50 = vld [vmem:[%s0 + $0x18] sm:$0xff]
  %v51 = vld [vmem:[%s0 + $0x20] sm:$0xff]
  %v52 = vld [vmem:[%s0 + $0x28] sm:$0xff]
  %v53 = vld [vmem:[%s0 + $0x30] sm:$0xff]
  %v54 = vld [vmem:[%s0 + $0x38] sm:$0xff]
  %v63 = vunpack.c.l.b16 %v47
  %v64 = vunpack.c.h.b16 %v47
  %v65 = vunpack.c.l.b16 %v48
  %v66 = vunpack.c.h.b16 %v48
  %v67 = vunpack.c.l.b16 %v49
  %v68 = vunpack.c.h.b16 %v49
  %v69 = vunpack.c.l.b16 %v50
  %v70 = vunpack.c.h.b16 %v50
  %v71 = vunpack.c.l.b16 %v51
  %v72 = vunpack.c.h.b16 %v51
  %v73 = vunpack.c.l.b16 %v52
  %v74 = vunpack.c.h.b16 %v52
  %v75 = vunpack.c.l.b16 %v53
  %v76 = vunpack.c.h.b16 %v53
  %v77 = vunpack.c.l.b16 %v54
  %v78 = vunpack.c.h.b16 %v54
  %v79 = vpack.c.b16 %v65, %v63
  %v80 = vpack.c.b16 %v66, %v64
  %v81 = vpack.c.b16 %v69, %v67
  %v82 = vpack.c.b16 %v70, %v68
  %v83 = vpack.c.b16 %v73, %v71
  %v84 = vpack.c.b16 %v74, %v72
  %v85 = vpack.c.b16 %v77, %v75
  %v86 = vpack.c.b16 %v78, %v76
  %v127 = vunpack.c.l.b16 %v15
  %v128 = vunpack.c.l.b16 %v16
  %v129 = vunpack.c.l.b16 %v17
  %v130 = vunpack.c.l.b16 %v18
  %v131 = vunpack.c.l.b16 %v19
  %v132 = vunpack.c.l.b16 %v20
  %v133 = vunpack.c.l.b16 %v21
  %v134 = vunpack.c.l.b16 %v22
  %v135 = vunpack.c.l.b16 %v23
  %v136 = vunpack.c.l.b16 %v24
  %v137 = vunpack.c.l.b16 %v25
  %v138 = vunpack.c.l.b16 %v26
  %v139 = vunpack.c.l.b16 %v27
  %v140 = vunpack.c.l.b16 %v28
  %v141 = vunpack.c.l.b16 %v29
  %v142 = vunpack.c.l.b16 %v30
  %v143 = vunpack.c.l.b16 %v31
  %v144 = vunpack.c.l.b16 %v32
  %v145 = vunpack.c.l.b16 %v33
  %v146 = vunpack.c.l.b16 %v34
  %v147 = vunpack.c.l.b16 %v35
  %v148 = vunpack.c.l.b16 %v36
  %v149 = vunpack.c.l.b16 %v37
  %v150 = vunpack.c.l.b16 %v38
  %v151 = vunpack.c.l.b16 %v39
  %v152 = vunpack.c.l.b16 %v40
  %v153 = vunpack.c.l.b16 %v41
  %v154 = vunpack.c.l.b16 %v42
  %v155 = vunpack.c.l.b16 %v43
  %v156 = vunpack.c.l.b16 %v44
  %v157 = vunpack.c.l.b16 %v45
  %v158 = vunpack.c.l.b16 %v46
  %v159 = vpack.c.b16 %v128, %v127
  %v160 = vpack.c.b16 %v130, %v129
  %v161 = vpack.c.b16 %v132, %v131
  %v162 = vpack.c.b16 %v134, %v133
  %v163 = vpack.c.b16 %v136, %v135
  %v164 = vpack.c.b16 %v138, %v137
  %v165 = vpack.c.b16 %v140, %v139
  %v166 = vpack.c.b16 %v142, %v141
  %v167 = vpack.c.b16 %v144, %v143
  %v168 = vpack.c.b16 %v146, %v145
  %v169 = vpack.c.b16 %v148, %v147
  %v170 = vpack.c.b16 %v150, %v149
  %v171 = vpack.c.b16 %v152, %v151
  %v172 = vpack.c.b16 %v154, %v153
  %v173 = vpack.c.b16 %v156, %v155
  %v174 = vpack.c.b16 %v158, %v157
  %191 = vmatprep.subr.bf16.mxu0 0
  %192 = vmatpush1.bf16.msra.mxu0 %v159
  %193 = vmatprep.subr.bf16.mxu0 0
  %194 = vmatpush1.bf16.msra.mxu0 %v160
  %195 = vmatprep.subr.bf16.mxu0 0
  %196 = vmatpush1.bf16.msra.mxu0 %v161
  %197 = vmatprep.subr.bf16.mxu0 0
  %198 = vmatpush1.bf16.msra.mxu0 %v162
  %199 = vmatprep.subr.bf16.mxu0 0
  %200 = vmatpush1.bf16.msra.mxu0 %v163
  %201 = vmatprep.subr.bf16.mxu0 0
  %202 = vmatpush1.bf16.msra.mxu0 %v164
  %203 = vmatprep.subr.bf16.mxu0 0
  %204 = vmatpush1.bf16.msra.mxu0 %v165
  %205 = vmatprep.subr.bf16.mxu0 0
  %206 = vmatpush1.bf16.msra.mxu0 %v166
  %207 = vmatprep.subr.bf16.mxu0 0
  %208 = vmatpush1.bf16.msra.mxu0 %v167
  %209 = vmatprep.subr.bf16.mxu0 0
  %210 = vmatpush1.bf16.msra.mxu0 %v168
  %211 = vmatprep.subr.bf16.mxu0 0
  %212 = vmatpush1.bf16.msra.mxu0 %v169
  %213 = vmatprep.subr.bf16.mxu0 0
  %214 = vmatpush1.bf16.msra.mxu0 %v170
  %215 = vmatprep.subr.bf16.mxu0 0
  %216 = vmatpush1.bf16.msra.mxu0 %v171
  %217 = vmatprep.subr.bf16.mxu0 0
  %218 = vmatpush1.bf16.msra.mxu0 %v172
  %219 = vmatprep.subr.bf16.mxu0 0
  %220 = vmatpush1.bf16.msra.mxu0 %v173
  %221 = vmatprep.subr.bf16.mxu0 0
  %222 = vmatpush1.bf16.msra.mxu0 %v174
  %223 = vmatprep.mubr.bf16.mxu0 %v80
  %224 = vmatmul.mubr.bf16.gmra.mrb[0].mxu0 %v79
  %v225 = vpop.f32.mrb[0].mxu0
  %v226 = vadd.f32 0.0, %v225
  %v227 = vpop.f32.mrb[0].mxu0
  %v228 = vpop.f32.mrb[0].mxu0
  %v229 = vadd.f32 0.0, %v228
  %v230 = vpop.f32.mrb[0].mxu0
  %231 = vmatprep.mubr.bf16.mxu0 %v82
  %232 = vmatmul.mubr.bf16.gmra.mrb[0].mxu0 %v81
  %v233 = vpop.f32.mrb[0].mxu0
  %v234 = vadd.f32 0.0, %v233
  %v235 = vpop.f32.mrb[0].mxu0
  %v236 = vpop.f32.mrb[0].mxu0
  %v237 = vadd.f32 0.0, %v236
  %v238 = vpop.f32.mrb[0].mxu0
  %239 = vmatprep.mubr.bf16.mxu0 %v84
  %240 = vmatmul.mubr.bf16.gmra.mrb[0].mxu0 %v83
  %v241 = vpop.f32.mrb[0].mxu0
  %v242 = vadd.f32 0.0, %v241
  %v243 = vpop.f32.mrb[0].mxu0
  %v244 = vpop.f32.mrb[0].mxu0
  %v245 = vadd.f32 0.0, %v244
  %v246 = vpop.f32.mrb[0].mxu0
  %247 = vmatprep.mubr.bf16.mxu0 %v86
  %248 = vmatmul.mubr.bf16.gmra.mrb[0].mxu0 %v85
  %v249 = vpop.f32.mrb[0].mxu0
  %v250 = vadd.f32 0.0, %v249
  %v251 = vpop.f32.mrb[0].mxu0
  %v252 = vpop.f32.mrb[0].mxu0
  %v253 = vadd.f32 0.0, %v252
  %v254 = vpop.f32.mrb[0].mxu0
  %255 = vdwg.mxu0
  %s256 = scalar_lea.vmem %s0, 64
  %v257 = vld [vmem:[%s256] sm:$0xff]
  %v258 = vld [vmem:[%s256 + $0x8] sm:$0xff]
  %v259 = vld [vmem:[%s256 + $0x10] sm:$0xff]
  %v260 = vld [vmem:[%s256 + $0x18] sm:$0xff]
  %v261 = vld [vmem:[%s256 + $0x20] sm:$0xff]
  %v262 = vld [vmem:[%s256 + $0x28] sm:$0xff]
  %v263 = vld [vmem:[%s256 + $0x30] sm:$0xff]
  %v264 = vld [vmem:[%s256 + $0x38] sm:$0xff]
  %v273 = vunpack.c.l.b16 %v257
  %v274 = vunpack.c.h.b16 %v257
  %v275 = vunpack.c.l.b16 %v258
  %v276 = vunpack.c.h.b16 %v258
  %v277 = vunpack.c.l.b16 %v259
  %v278 = vunpack.c.h.b16 %v259
  %v279 = vunpack.c.l.b16 %v260
  %v280 = vunpack.c.h.b16 %v260
  %v281 = vunpack.c.l.b16 %v261
  %v282 = vunpack.c.h.b16 %v261
  %v283 = vunpack.c.l.b16 %v262
  %v284 = vunpack.c.h.b16 %v262
  %v285 = vunpack.c.l.b16 %v263
  %v286 = vunpack.c.h.b16 %v263
  %v287 = vunpack.c.l.b16 %v264
  %v288 = vunpack.c.h.b16 %v264
  %v289 = vpack.c.b16 %v275, %v273
  %v290 = vpack.c.b16 %v276, %v274
  %v291 = vpack.c.b16 %v279, %v277
  %v292 = vpack.c.b16 %v280, %v278
  %v293 = vpack.c.b16 %v283, %v281
  %v294 = vpack.c.b16 %v284, %v282
  %v295 = vpack.c.b16 %v287, %v285
  %v296 = vpack.c.b16 %v288, %v286
  %305 = vmatprep.subr.bf16.mxu0 0
  %306 = vmatpush1.bf16.msra.mxu0 %v159
  %307 = vmatprep.subr.bf16.mxu0 0
  %308 = vmatpush1.bf16.msra.mxu0 %v160
  %309 = vmatprep.subr.bf16.mxu0 0
  %310 = vmatpush1.bf16.msra.mxu0 %v161
  %311 = vmatprep.subr.bf16.mxu0 0
  %312 = vmatpush1.bf16.msra.mxu0 %v162
  %313 = vmatprep.subr.bf16.mxu0 0
  %314 = vmatpush1.bf16.msra.mxu0 %v163
  %315 = vmatprep.subr.bf16.mxu0 0
  %316 = vmatpush1.bf16.msra.mxu0 %v164
  %317 = vmatprep.subr.bf16.mxu0 0
  %318 = vmatpush1.bf16.msra.mxu0 %v165
  %319 = vmatprep.subr.bf16.mxu0 0
  %320 = vmatpush1.bf16.msra.mxu0 %v166
  %321 = vmatprep.subr.bf16.mxu0 0
  %322 = vmatpush1.bf16.msra.mxu0 %v167
  %323 = vmatprep.subr.bf16.mxu0 0
  %324 = vmatpush1.bf16.msra.mxu0 %v168
  %325 = vmatprep.subr.bf16.mxu0 0
  %326 = vmatpush1.bf16.msra.mxu0 %v169
  %327 = vmatprep.subr.bf16.mxu0 0
  %328 = vmatpush1.bf16.msra.mxu0 %v170
  %329 = vmatprep.subr.bf16.mxu0 0
  %330 = vmatpush1.bf16.msra.mxu0 %v171
  %331 = vmatprep.subr.bf16.mxu0 0
  %332 = vmatpush1.bf16.msra.mxu0 %v172
  %333 = vmatprep.subr.bf16.mxu0 0
  %334 = vmatpush1.bf16.msra.mxu0 %v173
  %335 = vmatprep.subr.bf16.mxu0 0
  %336 = vmatpush1.bf16.msra.mxu0 %v174
  %337 = vmatprep.mubr.bf16.mxu0 %v290
  %338 = vmatmul.mubr.bf16.gmra.mrb[0].mxu0 %v289
  %v339 = vpop.f32.mrb[0].mxu0
  %v340 = vadd.f32 0.0, %v339
  %v341 = vpop.f32.mrb[0].mxu0
  %v342 = vpop.f32.mrb[0].mxu0
  %v343 = vadd.f32 0.0, %v342
  %v344 = vpop.f32.mrb[0].mxu0
  %345 = vmatprep.mubr.bf16.mxu0 %v292
  %346 = vmatmul.mubr.bf16.gmra.mrb[0].mxu0 %v291
  %v347 = vpop.f32.mrb[0].mxu0
  %v348 = vadd.f32 0.0, %v347
  %v349 = vpop.f32.mrb[0].mxu0
  %v350 = vpop.f32.mrb[0].mxu0
  %v351 = vadd.f32 0.0, %v350
  %v352 = vpop.f32.mrb[0].mxu0
  %353 = vmatprep.mubr.bf16.mxu0 %v294
  %354 = vmatmul.mubr.bf16.gmra.mrb[0].mxu0 %v293
  %v355 = vpop.f32.mrb[0].mxu0
  %v356 = vadd.f32 0.0, %v355
  %v357 = vpop.f32.mrb[0].mxu0
  %v358 = vpop.f32.mrb[0].mxu0
  %v359 = vadd.f32 0.0, %v358
  %v360 = vpop.f32.mrb[0].mxu0
  %361 = vmatprep.mubr.bf16.mxu0 %v296
  %362 = vmatmul.mubr.bf16.gmra.mrb[0].mxu0 %v295
  %v363 = vpop.f32.mrb[0].mxu0
  %v364 = vadd.f32 0.0, %v363
  %v365 = vpop.f32.mrb[0].mxu0
  %v366 = vpop.f32.mrb[0].mxu0
  %v367 = vadd.f32 0.0, %v366
  %v368 = vpop.f32.mrb[0].mxu0
  %369 = vdwg.mxu0
  %v370 = vmax.f32 %v226, %v340
  %v371 = vmax.f32 %v229, %v343
  %v372 = vmax.f32 %v234, %v348
  %v373 = vmax.f32 %v237, %v351
  %v374 = vmax.f32 %v242, %v356
  %v375 = vmax.f32 %v245, %v359
  %v376 = vmax.f32 %v250, %v364
  %v377 = vmax.f32 %v253, %v367
  %s378 = scalar_lea.vmem %s0, 128
  %v379 = vld [vmem:[%s378] sm:$0xff]
  %v380 = vld [vmem:[%s378 + $0x8] sm:$0xff]
  %v381 = vld [vmem:[%s378 + $0x10] sm:$0xff]
  %v382 = vld [vmem:[%s378 + $0x18] sm:$0xff]
  %v383 = vld [vmem:[%s378 + $0x20] sm:$0xff]
  %v384 = vld [vmem:[%s378 + $0x28] sm:$0xff]
  %v385 = vld [vmem:[%s378 + $0x30] sm:$0xff]
  %v386 = vld [vmem:[%s378 + $0x38] sm:$0xff]
  %v395 = vunpack.c.l.b16 %v379
  %v396 = vunpack.c.h.b16 %v379
  %v397 = vunpack.c.l.b16 %v380
  %v398 = vunpack.c.h.b16 %v380
  %v399 = vunpack.c.l.b16 %v381
  %v400 = vunpack.c.h.b16 %v381
  %v401 = vunpack.c.l.b16 %v382
  %v402 = vunpack.c.h.b16 %v382
  %v403 = vunpack.c.l.b16 %v383
  %v404 = vunpack.c.h.b16 %v383
  %v405 = vunpack.c.l.b16 %v384
  %v406 = vunpack.c.h.b16 %v384
  %v407 = vunpack.c.l.b16 %v385
  %v408 = vunpack.c.h.b16 %v385
  %v409 = vunpack.c.l.b16 %v386
  %v410 = vunpack.c.h.b16 %v386
  %v411 = vpack.c.b16 %v397, %v395
  %v412 = vpack.c.b16 %v398, %v396
  %v413 = vpack.c.b16 %v401, %v399
  %v414 = vpack.c.b16 %v402, %v400
  %v415 = vpack.c.b16 %v405, %v403
  %v416 = vpack.c.b16 %v406, %v404
  %v417 = vpack.c.b16 %v409, %v407
  %v418 = vpack.c.b16 %v410, %v408
  %427 = vmatprep.subr.bf16.mxu0 0
  %428 = vmatpush1.bf16.msra.mxu0 %v159
  %429 = vmatprep.subr.bf16.mxu0 0
  %430 = vmatpush1.bf16.msra.mxu0 %v160
  %431 = vmatprep.subr.bf16.mxu0 0
  %432 = vmatpush1.bf16.msra.mxu0 %v161
  %433 = vmatprep.subr.bf16.mxu0 0
  %434 = vmatpush1.bf16.msra.mxu0 %v162
  %435 = vmatprep.subr.bf16.mxu0 0
  %436 = vmatpush1.bf16.msra.mxu0 %v163
  %437 = vmatprep.subr.bf16.mxu0 0
  %438 = vmatpush1.bf16.msra.mxu0 %v164
  %439 = vmatprep.subr.bf16.mxu0 0
  %440 = vmatpush1.bf16.msra.mxu0 %v165
  %441 = vmatprep.subr.bf16.mxu0 0
  %442 = vmatpush1.bf16.msra.mxu0 %v166
  %443 = vmatprep.subr.bf16.mxu0 0
  %444 = vmatpush1.bf16.msra.mxu0 %v167
  %445 = vmatprep.subr.bf16.mxu0 0
  %446 = vmatpush1.bf16.msra.mxu0 %v168
  %447 = vmatprep.subr.bf16.mxu0 0
  %448 = vmatpush1.bf16.msra.mxu0 %v169
  %449 = vmatprep.subr.bf16.mxu0 0
  %450 = vmatpush1.bf16.msra.mxu0 %v170
  %451 = vmatprep.subr.bf16.mxu0 0
  %452 = vmatpush1.bf16.msra.mxu0 %v171
  %453 = vmatprep.subr.bf16.mxu0 0
  %454 = vmatpush1.bf16.msra.mxu0 %v172
  %455 = vmatprep.subr.bf16.mxu0 0
  %456 = vmatpush1.bf16.msra.mxu0 %v173
  %457 = vmatprep.subr.bf16.mxu0 0
  %458 = vmatpush1.bf16.msra.mxu0 %v174
  %459 = vmatprep.mubr.bf16.mxu0 %v412
  %460 = vmatmul.mubr.bf16.gmra.mrb[0].mxu0 %v411
  %v461 = vpop.f32.mrb[0].mxu0
  %v462 = vadd.f32 0.0, %v461
  %v463 = vpop.f32.mrb[0].mxu0
  %v464 = vpop.f32.mrb[0].mxu0
  %v465 = vadd.f32 0.0, %v464
  %v466 = vpop.f32.mrb[0].mxu0
  %467 = vmatprep.mubr.bf16.mxu0 %v414
  %468 = vmatmul.mubr.bf16.gmra.mrb[0].mxu0 %v413
  %v469 = vpop.f32.mrb[0].mxu0
  %v470 = vadd.f32 0.0, %v469
  %v471 = vpop.f32.mrb[0].mxu0
  %v472 = vpop.f32.mrb[0].mxu0
  %v473 = vadd.f32 0.0, %v472
  %v474 = vpop.f32.mrb[0].mxu0
  %475 = vmatprep.mubr.bf16.mxu0 %v416
  %476 = vmatmul.mubr.bf16.gmra.mrb[0].mxu0 %v415
  %v477 = vpop.f32.mrb[0].mxu0
  %v478 = vadd.f32 0.0, %v477
  %v479 = vpop.f32.mrb[0].mxu0
  %v480 = vpop.f32.mrb[0].mxu0
  %v481 = vadd.f32 0.0, %v480
  %v482 = vpop.f32.mrb[0].mxu0
  %483 = vmatprep.mubr.bf16.mxu0 %v418
  %484 = vmatmul.mubr.bf16.gmra.mrb[0].mxu0 %v417
  %v485 = vpop.f32.mrb[0].mxu0
  %v486 = vadd.f32 0.0, %v485
  %v487 = vpop.f32.mrb[0].mxu0
  %v488 = vpop.f32.mrb[0].mxu0
  %v489 = vadd.f32 0.0, %v488
  %v490 = vpop.f32.mrb[0].mxu0
  %491 = vdwg.mxu0
  %v492 = vmax.f32 %v370, %v462
  %v493 = vmax.f32 %v371, %v465
  %v494 = vmax.f32 %v372, %v470
  %v495 = vmax.f32 %v373, %v473
  %v496 = vmax.f32 %v374, %v478
  %v497 = vmax.f32 %v375, %v481
  %v498 = vmax.f32 %v376, %v486
  %v499 = vmax.f32 %v377, %v489
  %s500 = scalar_lea.vmem %s0, 192
  %v501 = vld [vmem:[%s500] sm:$0xff]
  %v502 = vld [vmem:[%s500 + $0x8] sm:$0xff]
  %v503 = vld [vmem:[%s500 + $0x10] sm:$0xff]
  %v504 = vld [vmem:[%s500 + $0x18] sm:$0xff]
  %v505 = vld [vmem:[%s500 + $0x20] sm:$0xff]
  %v506 = vld [vmem:[%s500 + $0x28] sm:$0xff]
  %v507 = vld [vmem:[%s500 + $0x30] sm:$0xff]
  %v508 = vld [vmem:[%s500 + $0x38] sm:$0xff]
  %v517 = vunpack.c.l.b16 %v501
  %v518 = vunpack.c.h.b16 %v501
  %v519 = vunpack.c.l.b16 %v502
  %v520 = vunpack.c.h.b16 %v502
  %v521 = vunpack.c.l.b16 %v503
  %v522 = vunpack.c.h.b16 %v503
  %v523 = vunpack.c.l.b16 %v504
  %v524 = vunpack.c.h.b16 %v504
  %v525 = vunpack.c.l.b16 %v505
  %v526 = vunpack.c.h.b16 %v505
  %v527 = vunpack.c.l.b16 %v506
  %v528 = vunpack.c.h.b16 %v506
  %v529 = vunpack.c.l.b16 %v507
  %v530 = vunpack.c.h.b16 %v507
  %v531 = vunpack.c.l.b16 %v508
  %v532 = vunpack.c.h.b16 %v508
  %v533 = vpack.c.b16 %v519, %v517
  %v534 = vpack.c.b16 %v520, %v518
  %v535 = vpack.c.b16 %v523, %v521
  %v536 = vpack.c.b16 %v524, %v522
  %v537 = vpack.c.b16 %v527, %v525
  %v538 = vpack.c.b16 %v528, %v526
  %v539 = vpack.c.b16 %v531, %v529
  %v540 = vpack.c.b16 %v532, %v530
  %549 = vmatprep.subr.bf16.mxu0 0
  %550 = vmatpush1.bf16.msra.mxu0 %v159
  %551 = vmatprep.subr.bf16.mxu0 0
  %552 = vmatpush1.bf16.msra.mxu0 %v160
  %553 = vmatprep.subr.bf16.mxu0 0
  %554 = vmatpush1.bf16.msra.mxu0 %v161
  %555 = vmatprep.subr.bf16.mxu0 0
  %556 = vmatpush1.bf16.msra.mxu0 %v162
  %557 = vmatprep.subr.bf16.mxu0 0
  %558 = vmatpush1.bf16.msra.mxu0 %v163
  %559 = vmatprep.subr.bf16.mxu0 0
  %560 = vmatpush1.bf16.msra.mxu0 %v164
  %561 = vmatprep.subr.bf16.mxu0 0
  %562 = vmatpush1.bf16.msra.mxu0 %v165
  %563 = vmatprep.subr.bf16.mxu0 0
  %564 = vmatpush1.bf16.msra.mxu0 %v166
  %565 = vmatprep.subr.bf16.mxu0 0
  %566 = vmatpush1.bf16.msra.mxu0 %v167
  %567 = vmatprep.subr.bf16.mxu0 0
  %568 = vmatpush1.bf16.msra.mxu0 %v168
  %569 = vmatprep.subr.bf16.mxu0 0
  %570 = vmatpush1.bf16.msra.mxu0 %v169
  %571 = vmatprep.subr.bf16.mxu0 0
  %572 = vmatpush1.bf16.msra.mxu0 %v170
  %573 = vmatprep.subr.bf16.mxu0 0
  %574 = vmatpush1.bf16.msra.mxu0 %v171
  %575 = vmatprep.subr.bf16.mxu0 0
  %576 = vmatpush1.bf16.msra.mxu0 %v172
  %577 = vmatprep.subr.bf16.mxu0 0
  %578 = vmatpush1.bf16.msra.mxu0 %v173
  %579 = vmatprep.subr.bf16.mxu0 0
  %580 = vmatpush1.bf16.msra.mxu0 %v174
  %581 = vmatprep.mubr.bf16.mxu0 %v534
  %582 = vmatmul.mubr.bf16.gmra.mrb[0].mxu0 %v533
  %v583 = vpop.f32.mrb[0].mxu0
  %v584 = vadd.f32 0.0, %v583
  %v585 = vpop.f32.mrb[0].mxu0
  %v586 = vpop.f32.mrb[0].mxu0
  %v587 = vadd.f32 0.0, %v586
  %v588 = vpop.f32.mrb[0].mxu0
  %589 = vmatprep.mubr.bf16.mxu0 %v536
  %590 = vmatmul.mubr.bf16.gmra.mrb[0].mxu0 %v535
  %v591 = vpop.f32.mrb[0].mxu0
  %v592 = vadd.f32 0.0, %v591
  %v593 = vpop.f32.mrb[0].mxu0
  %v594 = vpop.f32.mrb[0].mxu0
  %v595 = vadd.f32 0.0, %v594
  %v596 = vpop.f32.mrb[0].mxu0
  %597 = vmatprep.mubr.bf16.mxu0 %v538
  %598 = vmatmul.mubr.bf16.gmra.mrb[0].mxu0 %v537
  %v599 = vpop.f32.mrb[0].mxu0
  %v600 = vadd.f32 0.0, %v599
  %v601 = vpop.f32.mrb[0].mxu0
  %v602 = vpop.f32.mrb[0].mxu0
  %v603 = vadd.f32 0.0, %v602
  %v604 = vpop.f32.mrb[0].mxu0
  %605 = vmatprep.mubr.bf16.mxu0 %v540
  %606 = vmatmul.mubr.bf16.gmra.mrb[0].mxu0 %v539
  %v607 = vpop.f32.mrb[0].mxu0
  %v608 = vadd.f32 0.0, %v607
  %v609 = vpop.f32.mrb[0].mxu0
  %v610 = vpop.f32.mrb[0].mxu0
  %v611 = vadd.f32 0.0, %v610
  %v612 = vpop.f32.mrb[0].mxu0
  %613 = vdwg.mxu0
  %v614 = vmax.f32 %v492, %v584
  %v615 = vmax.f32 %v493, %v587
  %v616 = vmax.f32 %v494, %v592
  %v617 = vmax.f32 %v495, %v595
  %v618 = vmax.f32 %v496, %v600
  %v619 = vmax.f32 %v497, %v603
  %v620 = vmax.f32 %v498, %v608
  %v621 = vmax.f32 %v499, %v611
  %v622 = vld [vmem:[%s2] sm:$0x1]
  %v624 = vlaneseq
  %v625 = vshrl.u32 %v624, 7
  %v626 = vsub.s32 0, %v625
  %v627 = vrot.slane %v622, %v626
  %v629 = vadd.f32 %v614, %v627
  %v630 = vadd.f32 %v615, %v627
  %v631 = vadd.f32 %v616, %v627
  %v632 = vadd.f32 %v617, %v627
  %v633 = vadd.f32 %v618, %v627
  %v634 = vadd.f32 %v619, %v627
  %v635 = vadd.f32 %v620, %v627
  %v636 = vadd.f32 %v621, %v627
  %v637 = vmax.f32 %v629, 0.0
  %v638 = vmax.f32 %v630, 0.0
  %v639 = vmax.f32 %v631, 0.0
  %v640 = vmax.f32 %v632, 0.0
  %v641 = vmax.f32 %v633, 0.0
  %v642 = vmax.f32 %v634, 0.0
  %v643 = vmax.f32 %v635, 0.0
  %v644 = vmax.f32 %v636, 0.0
  %v645 = vpack.c.bf16 %v638, %v637
  %v646 = vpack.c.bf16 %v640, %v639
  %v647 = vpack.c.bf16 %v642, %v641
  %v648 = vpack.c.bf16 %v644, %v643
  %v653 = vunpack.c.l.b16 %v645
  %v654 = vunpack.c.h.b16 %v645
  %v655 = vunpack.c.l.b16 %v646
  %v656 = vunpack.c.h.b16 %v646
  %v657 = vunpack.c.l.b16 %v647
  %v658 = vunpack.c.h.b16 %v647
  %v659 = vunpack.c.l.b16 %v648
  %v660 = vunpack.c.h.b16 %v648
  %v661 = vpack.c.b16 %v653, %v653
  %v662 = vpack.c.b16 %v654, %v654
  %v663 = vpack.c.b16 %v655, %v655
  %v664 = vpack.c.b16 %v656, %v656
  %v665 = vpack.c.b16 %v657, %v657
  %v666 = vpack.c.b16 %v658, %v658
  %v667 = vpack.c.b16 %v659, %v659
  %v668 = vpack.c.b16 %v660, %v660
  %677 = vst [vmem:[%s3] sm:$0xf] %v661
  %678 = vst [vmem:[%s3 + $0x4] sm:$0xf] %v662
  %679 = vst [vmem:[%s3 + $0x8] sm:$0xf] %v663
  %680 = vst [vmem:[%s3 + $0xc] sm:$0xf] %v664
  %681 = vst [vmem:[%s3 + $0x10] sm:$0xf] %v665
  %682 = vst [vmem:[%s3 + $0x14] sm:$0xf] %v666
  %683 = vst [vmem:[%s3 + $0x18] sm:$0xf] %v667
  %684 = vst [vmem:[%s3 + $0x1c] sm:$0xf] %v668
  // Predicated region
  $region14: #{net_forward.4} parent=0 // pred_check
    _
  $region15: #{net_forward.4} parent=0 // pred_check_branch
    %686 = sbr.rel (0) target = $region17
  $region16: #{net_forward.4} parent=0 // pred_region
    _
  $region17: #{net_forward.4} parent=0 // pred_fallthru
    _
  // Predicated region
  $region18: #{net_forward.4} parent=0 // pred_check
    _
  $region19: #{net_forward.4} parent=0 // pred_check_branch
    %688 = sbr.rel (0) target = $region21
  $region20: #{net_forward.4} parent=0 // pred_region
    _
  $region21: #{net_forward.4} parent=0 // pred_fallthru
    _

// kernel: net_forward.5
$region0: #{net_forward.5}
  #allocation0 [shape = 'u32[]', space=smem, size = 0x4, offset = 0x4, fixed_abs, tag = 'smem constant byte address 0x4 - core index']
  #allocation1 [shape = 'u32[144,128]{1,0:T(1,128)}', space=vmem, size = 0x12000, scoped, tag = 'internal scratch']
  %s0 = inlined_call_operand.vmem [shape: bf16[64,3200], index: 0, kind: input, shape index: {}]
  %s1 = inlined_call_operand.vmem [shape: bf16[3200,128], index: 1, kind: input, shape index: {}]
  %s2 = inlined_call_operand.vmem [shape: f32[1,128], index: 2, kind: input, shape index: {}]
  %s3 = inlined_call_operand.vmem [shape: bf16[128,128], index: 3, kind: input, shape index: {}]
  %s4 = inlined_call_operand.vmem [shape: f32[1,128], index: 4, kind: input, shape index: {}]
  %s5 = inlined_call_operand.vmem [shape: bf16[128,128], index: 5, kind: input, shape index: {}]
  %s6 = inlined_call_operand.vmem [shape: f32[1,128], index: 6, kind: input, shape index: {}]
  %s7 = inlined_call_operand.vmem [shape: f32[64,128], index: 7, kind: output, shape index: {}]
  %s8 = sld [smem:[#allocation0]]
  $region38: #{net_forward.5} parent=0
    _
  %s10 = ssub.s32 1, %s8
  %s11 = scalar_select 0, %s10, %s8
  // Predicated region
  $region2: #{net_forward.5} parent=0 // pred_check
    _
  $region3: #{net_forward.5} parent=0 // pred_check_branch
    %13 = sbr.rel (0) target = $region5
  $region4: #{net_forward.5} parent=0 // pred_region
    _
  $region5: #{net_forward.5} parent=0 // pred_fallthru
    _
  // Predicated region
  $region6: #{net_forward.5} parent=0 // pred_check
    _
  $region7: #{net_forward.5} parent=0 // pred_check_branch
    %15 = sbr.rel (0) target = $region9
  $region8: #{net_forward.5} parent=0 // pred_region
    _
  $region9: #{net_forward.5} parent=0 // pred_fallthru
    _
  // Predicated region
  $region10: #{net_forward.5} parent=0 // pred_check
    _
  $region11: #{net_forward.5} parent=0 // pred_check_branch
    %17 = sbr.rel (0) target = $region13
  $region12: #{net_forward.5} parent=0 // pred_region
    _
  $region13: #{net_forward.5} parent=0 // pred_fallthru
    _
  // Predicated region
  $region14: #{net_forward.5} parent=0 // pred_check
    _
  $region15: #{net_forward.5} parent=0 // pred_check_branch
    %19 = sbr.rel (0) target = $region17
  $region16: #{net_forward.5} parent=0 // pred_region
    _
  $region17: #{net_forward.5} parent=0 // pred_fallthru
    _
  // Predicated region
  $region18: #{net_forward.5} parent=0 // pred_check
    _
  $region19: #{net_forward.5} parent=0 // pred_check_branch
    %21 = sbr.rel (0) target = $region21
  $region20: #{net_forward.5} parent=0 // pred_region
    _
  $region21: #{net_forward.5} parent=0 // pred_fallthru
    _
  // Predicated region
  $region22: #{net_forward.5} parent=0 // pred_check
    _
  $region23: #{net_forward.5} parent=0 // pred_check_branch
    %23 = sbr.rel (0) target = $region25
  $region24: #{net_forward.5} parent=0 // pred_region
    _
  $region25: #{net_forward.5} parent=0 // pred_fallthru
    _
  // Predicated region
  $region26: #{net_forward.5} parent=0 // pred_check
    _
  $region27: #{net_forward.5} parent=0 // pred_check_branch
    %25 = sbr.rel (0) target = $region29
  $region28: #{net_forward.5} parent=0 // pred_region
    _
  $region29: #{net_forward.5} parent=0 // pred_fallthru
    _
  %v27 = vld [vmem:[%s0] sm:$0xff]
  %v28 = vld [vmem:[%s0 + $0x8] sm:$0xff]
  %v29 = vld [vmem:[%s0 + $0x10] sm:$0xff]
  %v30 = vld [vmem:[%s0 + $0x18] sm:$0xff]
  %v31 = vld [vmem:[%s0 + $0x20] sm:$0xff]
  %v32 = vld [vmem:[%s0 + $0x28] sm:$0xff]
  %v33 = vld [vmem:[%s0 + $0x30] sm:$0xff]
  %v34 = vld [vmem:[%s0 + $0x38] sm:$0xff]
  %v35 = vld [vmem:[%s0 + $0x40] sm:$0xff]
  %v36 = vld [vmem:[%s0 + $0x48] sm:$0xff]
  %v37 = vld [vmem:[%s0 + $0x50] sm:$0xff]
  %v38 = vld [vmem:[%s0 + $0x58] sm:$0xff]
  %v39 = vld [vmem:[%s0 + $0x60] sm:$0xf]
  %v40 = vld [vmem:[%s0 + $0x64] sm:$0xff]
  %v41 = vld [vmem:[%s0 + $0x6c] sm:$0xff]
  %v42 = vld [vmem:[%s0 + $0x74] sm:$0xff]
  %v43 = vld [vmem:[%s0 + $0x7c] sm:$0xff]
  %v44 = vld [vmem:[%s0 + $0x84] sm:$0xff]
  %v45 = vld [vmem:[%s0 + $0x8c] sm:$0xff]
  %v46 = vld [vmem:[%s0 + $0x94] sm:$0xff]
  %v47 = vld [vmem:[%s0 + $0x9c] sm:$0xff]
  %v48 = vld [vmem:[%s0 + $0xa4] sm:$0xff]
  %v49 = vld [vmem:[%s0 + $0xac] sm:$0xff]
  %v50 = vld [vmem:[%s0 + $0xb4] sm:$0xff]
  %v51 = vld [vmem:[%s0 + $0xbc] sm:$0xff]
  %v52 = vld [vmem:[%s0 + $0xc4] sm:$0xf]
  %v53 = vld [vmem:[%s0 + $0xc8] sm:$0xff]
  %v54 = vld [vmem:[%s0 + $0xd0] sm:$0xff]
  %v55 = vld [vmem:[%s0 + $0xd8] sm:$0xff]
  %v56 = vld [vmem:[%s0 + $0xe0] sm:$0xff]
  %v57 = vld [vmem:[%s0 + $0xe8] sm:$0xff]
  %v58 = vld [vmem:[%s0 + $0xf0] sm:$0xff]
  %v59 = vld [vmem:[%s0 + $0xf8] sm:$0xff]
  %v60 = vld [vmem:[%s0 + $0x100] sm:$0xff]
  %v61 = vld [vmem:[%s0 + $0x108] sm:$0xff]
  %v62 = vld [vmem:[%s0 + $0x110] sm:$0xff]
  %v63 = vld [vmem:[%s0 + $0x118] sm:$0xff]
  %v64 = vld [vmem:[%s0 + $0x120] sm:$0xff]
  %v65 = vld [vmem:[%s0 + $0x128] sm:$0xf]
  %v66 = vld [vmem:[%s0 + $0x12c] sm:$0xff]
  %v67 = vld [vmem:[%s0 + $0x134] sm:$0xff]
  %v68 = vld [vmem:[%s0 + $0x13c] sm:$0xff]
  %v69 = vld [vmem:[%s0 + $0x144] sm:$0xff]
  %v70 = vld [vmem:[%s0 + $0x14c] sm:$0xff]
  %v71 = vld [vmem:[%s0 + $0x154] sm:$0xff]
  %v72 = vld [vmem:[%s0 + $0x15c] sm:$0xff]
  %v73 = vld [vmem:[%s0 + $0x164] sm:$0xff]
  %v74 = vld [vmem:[%s0 + $0x16c] sm:$0xff]
  %v75 = vld [vmem:[%s0 + $0x174] sm:$0xff]
  %v76 = vld [vmem:[%s0 + $0x17c] sm:$0xff]
  %v77 = vld [vmem:[%s0 + $0x184] sm:$0xff]
  %v78 = vld [vmem:[%s0 + $0x18c] sm:$0xf]
  %v79 = vld [vmem:[%s0 + $0x190] sm:$0xff]
  %v80 = vld [vmem:[%s0 + $0x198] sm:$0xff]
  %v81 = vld [vmem:[%s0 + $0x1a0] sm:$0xff]
  %v82 = vld [vmem:[%s0 + $0x1a8] sm:$0xff]
  %v83 = vld [vmem:[%s0 + $0x1b0] sm:$0xff]
  %v84 = vld [vmem:[%s0 + $0x1b8] sm:$0xff]
  %v85 = vld [vmem:[%s0 + $0x1c0] sm:$0xff]
  %v86 = vld [vmem:[%s0 + $0x1c8] sm:$0xff]
  %v87 = vld [vmem:[%s0 + $0x1d0] sm:$0xff]
  %v88 = vld [vmem:[%s0 + $0x1d8] sm:$0xff]
  %v89 = vld [vmem:[%s0 + $0x1e0] sm:$0xff]
  %v90 = vld [vmem:[%s0 + $0x1e8] sm:$0xff]
  %v91 = vld [vmem:[%s0 + $0x1f0] sm:$0xf]
  %v92 = vld [vmem:[%s0 + $0x1f4] sm:$0xff]
  %v93 = vld [vmem:[%s0 + $0x1fc] sm:$0xff]
  %v94 = vld [vmem:[%s0 + $0x204] sm:$0xff]
  %v95 = vld [vmem:[%s0 + $0x20c] sm:$0xff]
  %v96 = vld [vmem:[%s0 + $0x214] sm:$0xff]
  %v97 = vld [vmem:[%s0 + $0x21c] sm:$0xff]
  %v98 = vld [vmem:[%s0 + $0x224] sm:$0xff]
  %v99 = vld [vmem:[%s0 + $0x22c] sm:$0xff]
  %v100 = vld [vmem:[%s0 + $0x234] sm:$0xff]
  %v101 = vld [vmem:[%s0 + $0x23c] sm:$0xff]
  %v102 = vld [vmem:[%s0 + $0x244] sm:$0xff]
  %v103 = vld [vmem:[%s0 + $0x24c] sm:$0xff]
  %v104 = vld [vmem:[%s0 + $0x254] sm:$0xf]
  %v105 = vld [vmem:[%s0 + $0x258] sm:$0xff]
  %v106 = vld [vmem:[%s0 + $0x260] sm:$0xff]
  %v107 = vld [vmem:[%s0 + $0x268] sm:$0xff]
  %v108 = vld [vmem:[%s0 + $0x270] sm:$0xff]
  %v109 = vld [vmem:[%s0 + $0x278] sm:$0xff]
  %v110 = vld [vmem:[%s0 + $0x280] sm:$0xff]
  %v111 = vld [vmem:[%s0 + $0x288] sm:$0xff]
  %v112 = vld [vmem:[%s0 + $0x290] sm:$0xff]
  %v113 = vld [vmem:[%s0 + $0x298] sm:$0xff]
  %v114 = vld [vmem:[%s0 + $0x2a0] sm:$0xff]
  %v115 = vld [vmem:[%s0 + $0x2a8] sm:$0xff]
  %v116 = vld [vmem:[%s0 + $0x2b0] sm:$0xff]
  %v117 = vld [vmem:[%s0 + $0x2b8] sm:$0xf]
  %v118 = vld [vmem:[%s0 + $0x2bc] sm:$0xff]
  %v119 = vld [vmem:[%s0 + $0x2c4] sm:$0xff]
  %v120 = vld [vmem:[%s0 + $0x2cc] sm:$0xff]
  %v121 = vld [vmem:[%s0 + $0x2d4] sm:$0xff]
  %v122 = vld [vmem:[%s0 + $0x2dc] sm:$0xff]
  %v123 = vld [vmem:[%s0 + $0x2e4] sm:$0xff]
  %v124 = vld [vmem:[%s0 + $0x2ec] sm:$0xff]
  %v125 = vld [vmem:[%s0 + $0x2f4] sm:$0xff]
  %v126 = vld [vmem:[%s0 + $0x2fc] sm:$0xff]
  %v127 = vld [vmem:[%s0 + $0x304] sm:$0xff]
  %v128 = vld [vmem:[%s0 + $0x30c] sm:$0xff]
  %v129 = vld [vmem:[%s0 + $0x314] sm:$0xff]
  %v130 = vld [vmem:[%s0 + $0x31c] sm:$0xf]
  %v131 = vld [vmem:[%s1] sm:$0xf]
  %v132 = vld [vmem:[%s1 + $0x4] sm:$0xf]
  %v133 = vld [vmem:[%s1 + $0x8] sm:$0xf]
  %v134 = vld [vmem:[%s1 + $0xc] sm:$0xf]
  %v135 = vld [vmem:[%s1 + $0x10] sm:$0xf]
  %v136 = vld [vmem:[%s1 + $0x14] sm:$0xf]
  %v137 = vld [vmem:[%s1 + $0x18] sm:$0xf]
  %v138 = vld [vmem:[%s1 + $0x1c] sm:$0xf]
  %v139 = vld [vmem:[%s1 + $0x20] sm:$0xf]
  %v140 = vld [vmem:[%s1 + $0x24] sm:$0xf]
  %v141 = vld [vmem:[%s1 + $0x28] sm:$0xf]
  %v142 = vld [vmem:[%s1 + $0x2c] sm:$0xf]
  %v143 = vld [vmem:[%s1 + $0x30] sm:$0xf]
  %v144 = vld [vmem:[%s1 + $0x34] sm:$0xf]
  %v145 = vld [vmem:[%s1 + $0x38] sm:$0xf]
  %v146 = vld [vmem:[%s1 + $0x3c] sm:$0xf]
  %v147 = vld [vmem:[%s1 + $0x40] sm:$0xf]
  %v148 = vld [vmem:[%s1 + $0x44] sm:$0xf]
  %v149 = vld [vmem:[%s1 + $0x48] sm:$0xf]
  %v150 = vld [vmem:[%s1 + $0x4c] sm:$0xf]
  %v151 = vld [vmem:[%s1 + $0x50] sm:$0xf]
  %v152 = vld [vmem:[%s1 + $0x54] sm:$0xf]
  %v153 = vld [vmem:[%s1 + $0x58] sm:$0xf]
  %v154 = vld [vmem:[%s1 + $0x5c] sm:$0xf]
  %v155 = vld [vmem:[%s1 + $0x60] sm:$0xf]
  %v156 = vld [vmem:[%s1 + $0x64] sm:$0xf]
  %v157 = vld [vmem:[%s1 + $0x68] sm:$0xf]
  %v158 = vld [vmem:[%s1 + $0x6c] sm:$0xf]
  %v159 = vld [vmem:[%s1 + $0x70] sm:$0xf]
  %v160 = vld [vmem:[%s1 + $0x74] sm:$0xf]
  %v161 = vld [vmem:[%s1 + $0x78] sm:$0xf]
  %v162 = vld [vmem:[%s1 + $0x7c] sm:$0xf]
  %v163 = vld [vmem:[%s1 + $0x80] sm:$0xf]
  %v164 = vld [vmem:[%s1 + $0x84] sm:$0xf]
  %v165 = vld [vmem:[%s1 + $0x88] sm:$0xf]
  %v166 = vld [vmem:[%s1 + $0x8c] sm:$0xf]
  %v167 = vld [vmem:[%s1 + $0x90] sm:$0xf]
  %v168 = vld [vmem:[%s1 + $0x94] sm:$0xf]
  %v169 = vld [vmem:[%s1 + $0x98] sm:$0xf]
  %v170 = vld [vmem:[%s1 + $0x9c] sm:$0xf]
  %v171 = vld [vmem:[%s1 + $0xa0] sm:$0xf]
  %v172 = vld [vmem:[%s1 + $0xa4] sm:$0xf]
  %v173 = vld [vmem:[%s1 + $0xa8] sm:$0xf]
  %v174 = vld [vmem:[%s1 + $0xac] sm:$0xf]
  %v175 = vld [vmem:[%s1 + $0xb0] sm:$0xf]
  %v176 = vld [vmem:[%s1 + $0xb4] sm:$0xf]
  %v177 = vld [vmem:[%s1 + $0xb8] sm:$0xf]
  %v178 = vld [vmem:[%s1 + $0xbc] sm:$0xf]
  %v179 = vld [vmem:[%s1 + $0xc0] sm:$0xf]
  %v180 = vld [vmem:[%s1 + $0xc4] sm:$0xf]
  %v181 = vld [vmem:[%s1 + $0xc8] sm:$0xf]
  %v182 = vld [vmem:[%s1 + $0xcc] sm:$0xf]
  %v183 = vld [vmem:[%s1 + $0xd0] sm:$0xf]
  %v184 = vld [vmem:[%s1 + $0xd4] sm:$0xf]
  %v185 = vld [vmem:[%s1 + $0xd8] sm:$0xf]
  %v186 = vld [vmem:[%s1 + $0xdc] sm:$0xf]
  %v187 = vld [vmem:[%s1 + $0xe0] sm:$0xf]
  %v188 = vld [vmem:[%s1 + $0xe4] sm:$0xf]
  %v189 = vld [vmem:[%s1 + $0xe8] sm:$0xf]
  %v190 = vld [vmem:[%s1 + $0xec] sm:$0xf]
  %v191 = vld [vmem:[%s1 + $0xf0] sm:$0xf]
  %v192 = vld [vmem:[%s1 + $0xf4] sm:$0xf]
  %v193 = vld [vmem:[%s1 + $0xf8] sm:$0xf]
  %v194 = vld [vmem:[%s1 + $0xfc] sm:$0xf]
  %v195 = vld [vmem:[%s1 + $0x100] sm:$0xf]
  %v196 = vld [vmem:[%s1 + $0x104] sm:$0xf]
  %v197 = vld [vmem:[%s1 + $0x108] sm:$0xf]
  %v198 = vld [vmem:[%s1 + $0x10c] sm:$0xf]
  %v199 = vld [vmem:[%s1 + $0x110] sm:$0xf]
  %v200 = vld [vmem:[%s1 + $0x114] sm:$0xf]
  %v201 = vld [vmem:[%s1 + $0x118] sm:$0xf]
  %v202 = vld [vmem:[%s1 + $0x11c] sm:$0xf]
  %v203 = vld [vmem:[%s1 + $0x120] sm:$0xf]
  %v204 = vld [vmem:[%s1 + $0x124] sm:$0xf]
  %v205 = vld [vmem:[%s1 + $0x128] sm:$0xf]
  %v206 = vld [vmem:[%s1 + $0x12c] sm:$0xf]
  %v207 = vld [vmem:[%s1 + $0x130] sm:$0xf]
  %v208 = vld [vmem:[%s1 + $0x134] sm:$0xf]
  %v209 = vld [vmem:[%s1 + $0x138] sm:$0xf]
  %v210 = vld [vmem:[%s1 + $0x13c] sm:$0xf]
  %v211 = vld [vmem:[%s1 + $0x140] sm:$0xf]
  %v212 = vld [vmem:[%s1 + $0x144] sm:$0xf]
  %v213 = vld [vmem:[%s1 + $0x148] sm:$0xf]
  %v214 = vld [vmem:[%s1 + $0x14c] sm:$0xf]
  %v215 = vld [vmem:[%s1 + $0x150] sm:$0xf]
  %v216 = vld [vmem:[%s1 + $0x154] sm:$0xf]
  %v217 = vld [vmem:[%s1 + $0x158] sm:$0xf]
  %v218 = vld [vmem:[%s1 + $0x15c] sm:$0xf]
  %v219 = vld [vmem:[%s1 + $0x160] sm:$0xf]
  %v220 = vld [vmem:[%s1 + $0x164] sm:$0xf]
  %v221 = vld [vmem:[%s1 + $0x168] sm:$0xf]
  %v222 = vld [vmem:[%s1 + $0x16c] sm:$0xf]
  %v223 = vld [vmem:[%s1 + $0x170] sm:$0xf]
  %v224 = vld [vmem:[%s1 + $0x174] sm:$0xf]
  %v225 = vld [vmem:[%s1 + $0x178] sm:$0xf]
  %v226 = vld [vmem:[%s1 + $0x17c] sm:$0xf]
  %v227 = vld [vmem:[%s1 + $0x180] sm:$0xf]
  %v228 = vld [vmem:[%s1 + $0x184] sm:$0xf]
  %v229 = vld [vmem:[%s1 + $0x188] sm:$0xf]
  %v230 = vld [vmem:[%s1 + $0x18c] sm:$0xf]
  %v231 = vld [vmem:[%s1 + $0x190] sm:$0xf]
  %v232 = vld [vmem:[%s1 + $0x194] sm:$0xf]
  %v233 = vld [vmem:[%s1 + $0x198] sm:$0xf]
  %v234 = vld [vmem:[%s1 + $0x19c] sm:$0xf]
  %v235 = vld [vmem:[%s1 + $0x1a0] sm:$0xf]
  %v236 = vld [vmem:[%s1 + $0x1a4] sm:$0xf]
  %v237 = vld [vmem:[%s1 + $0x1a8] sm:$0xf]
  %v238 = vld [vmem:[%s1 + $0x1ac] sm:$0xf]
  %v239 = vld [vmem:[%s1 + $0x1b0] sm:$0xf]
  %v240 = vld [vmem:[%s1 + $0x1b4] sm:$0xf]
  %v241 = vld [vmem:[%s1 + $0x1b8] sm:$0xf]
  %v242 = vld [vmem:[%s1 + $0x1bc] sm:$0xf]
  %v243 = vld [vmem:[%s1 + $0x1c0] sm:$0xf]
  %v244 = vld [vmem:[%s1 + $0x1c4] sm:$0xf]
  %v245 = vld [vmem:[%s1 + $0x1c8] sm:$0xf]
  %v246 = vld [vmem:[%s1 + $0x1cc] sm:$0xf]
  %v247 = vld [vmem:[%s1 + $0x1d0] sm:$0xf]
  %v248 = vld [vmem:[%s1 + $0x1d4] sm:$0xf]
  %v249 = vld [vmem:[%s1 + $0x1d8] sm:$0xf]
  %v250 = vld [vmem:[%s1 + $0x1dc] sm:$0xf]
  %v251 = vld [vmem:[%s1 + $0x1e0] sm:$0xf]
  %v252 = vld [vmem:[%s1 + $0x1e4] sm:$0xf]
  %v253 = vld [vmem:[%s1 + $0x1e8] sm:$0xf]
  %v254 = vld [vmem:[%s1 + $0x1ec] sm:$0xf]
  %v255 = vld [vmem:[%s1 + $0x1f0] sm:$0xf]
  %v256 = vld [vmem:[%s1 + $0x1f4] sm:$0xf]
  %v257 = vld [vmem:[%s1 + $0x1f8] sm:$0xf]
  %v258 = vld [vmem:[%s1 + $0x1fc] sm:$0xf]
  %v259 = vld [vmem:[%s1 + $0x200] sm:$0xf]
  %v260 = vld [vmem:[%s1 + $0x204] sm:$0xf]
  %v261 = vld [vmem:[%s1 + $0x208] sm:$0xf]
  %v262 = vld [vmem:[%s1 + $0x20c] sm:$0xf]
  %v263 = vld [vmem:[%s1 + $0x210] sm:$0xf]
  %v264 = vld [vmem:[%s1 + $0x214] sm:$0xf]
  %v265 = vld [vmem:[%s1 + $0x218] sm:$0xf]
  %v266 = vld [vmem:[%s1 + $0x21c] sm:$0xf]
  %v267 = vld [vmem:[%s1 + $0x220] sm:$0xf]
  %v268 = vld [vmem:[%s1 + $0x224] sm:$0xf]
  %v269 = vld [vmem:[%s1 + $0x228] sm:$0xf]
  %v270 = vld [vmem:[%s1 + $0x22c] sm:$0xf]
  %v271 = vld [vmem:[%s1 + $0x230] sm:$0xf]
  %v272 = vld [vmem:[%s1 + $0x234] sm:$0xf]
  %v273 = vld [vmem:[%s1 + $0x238] sm:$0xf]
  %v274 = vld [vmem:[%s1 + $0x23c] sm:$0xf]
  %v275 = vld [vmem:[%s1 + $0x240] sm:$0xf]
  %v276 = vld [vmem:[%s1 + $0x244] sm:$0xf]
  %v277 = vld [vmem:[%s1 + $0x248] sm:$0xf]
  %v278 = vld [vmem:[%s1 + $0x24c] sm:$0xf]
  %v279 = vld [vmem:[%s1 + $0x250] sm:$0xf]
  %v280 = vld [vmem:[%s1 + $0x254] sm:$0xf]
  %v281 = vld [vmem:[%s1 + $0x258] sm:$0xf]
  %v282 = vld [vmem:[%s1 + $0x25c] sm:$0xf]
  %v283 = vld [vmem:[%s1 + $0x260] sm:$0xf]
  %v284 = vld [vmem:[%s1 + $0x264] sm:$0xf]
  %v285 = vld [vmem:[%s1 + $0x268] sm:$0xf]
  %v286 = vld [vmem:[%s1 + $0x26c] sm:$0xf]
  %v287 = vld [vmem:[%s1 + $0x270] sm:$0xf]
  %v288 = vld [vmem:[%s1 + $0x274] sm:$0xf]
  %v289 = vld [vmem:[%s1 + $0x278] sm:$0xf]
  %v290 = vld [vmem:[%s1 + $0x27c] sm:$0xf]
  %v291 = vld [vmem:[%s1 + $0x280] sm:$0xf]
  %v292 = vld [vmem:[%s1 + $0x284] sm:$0xf]
  %v293 = vld [vmem:[%s1 + $0x288] sm:$0xf]
  %v294 = vld [vmem:[%s1 + $0x28c] sm:$0xf]
  %v295 = vld [vmem:[%s1 + $0x290] sm:$0xf]
  %v296 = vld [vmem:[%s1 + $0x294] sm:$0xf]
  %v297 = vld [vmem:[%s1 + $0x298] sm:$0xf]
  %v298 = vld [vmem:[%s1 + $0x29c] sm:$0xf]
  %v299 = vld [vmem:[%s1 + $0x2a0] sm:$0xf]
  %v300 = vld [vmem:[%s1 + $0x2a4] sm:$0xf]
  %v301 = vld [vmem:[%s1 + $0x2a8] sm:$0xf]
  %v302 = vld [vmem:[%s1 + $0x2ac] sm:$0xf]
  %v303 = vld [vmem:[%s1 + $0x2b0] sm:$0xf]
  %v304 = vld [vmem:[%s1 + $0x2b4] sm:$0xf]
  %v305 = vld [vmem:[%s1 + $0x2b8] sm:$0xf]
  %v306 = vld [vmem:[%s1 + $0x2bc] sm:$0xf]
  %v307 = vld [vmem:[%s1 + $0x2c0] sm:$0xf]
  %v308 = vld [vmem:[%s1 + $0x2c4] sm:$0xf]
  %v309 = vld [vmem:[%s1 + $0x2c8] sm:$0xf]
  %v310 = vld [vmem:[%s1 + $0x2cc] sm:$0xf]
  %v311 = vld [vmem:[%s1 + $0x2d0] sm:$0xf]
  %v312 = vld [vmem:[%s1 + $0x2d4] sm:$0xf]
  %v313 = vld [vmem:[%s1 + $0x2d8] sm:$0xf]
  %v314 = vld [vmem:[%s1 + $0x2dc] sm:$0xf]
  %v315 = vld [vmem:[%s1 + $0x2e0] sm:$0xf]
  %v316 = vld [vmem:[%s1 + $0x2e4] sm:$0xf]
  %v317 = vld [vmem:[%s1 + $0x2e8] sm:$0xf]
  %v318 = vld [vmem:[%s1 + $0x2ec] sm:$0xf]
  %v319 = vld [vmem:[%s1 + $0x2f0] sm:$0xf]
  %v320 = vld [vmem:[%s1 + $0x2f4] sm:$0xf]
  %v321 = vld [vmem:[%s1 + $0x2f8] sm:$0xf]
  %v322 = vld [vmem:[%s1 + $0x2fc] sm:$0xf]
  %v323 = vld [vmem:[%s1 + $0x300] sm:$0xf]
  %v324 = vld [vmem:[%s1 + $0x304] sm:$0xf]
  %v325 = vld [vmem:[%s1 + $0x308] sm:$0xf]
  %v326 = vld [vmem:[%s1 + $0x30c] sm:$0xf]
  %v327 = vld [vmem:[%s1 + $0x310] sm:$0xf]
  %v328 = vld [vmem:[%s1 + $0x314] sm:$0xf]
  %v329 = vld [vmem:[%s1 + $0x318] sm:$0xf]
  %v330 = vld [vmem:[%s1 + $0x31c] sm:$0xf]
  %v331 = vld [vmem:[%s1 + $0x320] sm:$0xf]
  %v332 = vld [vmem:[%s1 + $0x324] sm:$0xf]
  %v333 = vld [vmem:[%s1 + $0x328] sm:$0xf]
  %v334 = vld [vmem:[%s1 + $0x32c] sm:$0xf]
  %v335 = vld [vmem:[%s1 + $0x330] sm:$0xf]
  %v336 = vld [vmem:[%s1 + $0x334] sm:$0xf]
  %v337 = vld [vmem:[%s1 + $0x338] sm:$0xf]
  %v338 = vld [vmem:[%s1 + $0x33c] sm:$0xf]
  %v339 = vld [vmem:[%s1 + $0x340] sm:$0xf]
  %v340 = vld [vmem:[%s1 + $0x344] sm:$0xf]
  %v341 = vld [vmem:[%s1 + $0x348] sm:$0xf]
  %v342 = vld [vmem:[%s1 + $0x34c] sm:$0xf]
  %v343 = vld [vmem:[%s1 + $0x350] sm:$0xf]
  %v344 = vld [vmem:[%s1 + $0x354] sm:$0xf]
  %v345 = vld [vmem:[%s1 + $0x358] sm:$0xf]
  %v346 = vld [vmem:[%s1 + $0x35c] sm:$0xf]
  %v347 = vld [vmem:[%s1 + $0x360] sm:$0xf]
  %v348 = vld [vmem:[%s1 + $0x364] sm:$0xf]
  %v349 = vld [vmem:[%s1 + $0x368] sm:$0xf]
  %v350 = vld [vmem:[%s1 + $0x36c] sm:$0xf]
  %v351 = vld [vmem:[%s1 + $0x370] sm:$0xf]
  %v352 = vld [vmem:[%s1 + $0x374] sm:$0xf]
  %v353 = vld [vmem:[%s1 + $0x378] sm:$0xf]
  %v354 = vld [vmem:[%s1 + $0x37c] sm:$0xf]
  %v355 = vld [vmem:[%s1 + $0x380] sm:$0xf]
  %v356 = vld [vmem:[%s1 + $0x384] sm:$0xf]
  %v357 = vld [vmem:[%s1 + $0x388] sm:$0xf]
  %v358 = vld [vmem:[%s1 + $0x38c] sm:$0xf]
  %v359 = vld [vmem:[%s1 + $0x390] sm:$0xf]
  %v360 = vld [vmem:[%s1 + $0x394] sm:$0xf]
  %v361 = vld [vmem:[%s1 + $0x398] sm:$0xf]
  %v362 = vld [vmem:[%s1 + $0x39c] sm:$0xf]
  %v363 = vld [vmem:[%s1 + $0x3a0] sm:$0xf]
  %v364 = vld [vmem:[%s1 + $0x3a4] sm:$0xf]
  %v365 = vld [vmem:[%s1 + $0x3a8] sm:$0xf]
  %v366 = vld [vmem:[%s1 + $0x3ac] sm:$0xf]
  %v367 = vld [vmem:[%s1 + $0x3b0] sm:$0xf]
  %v368 = vld [vmem:[%s1 + $0x3b4] sm:$0xf]
  %v369 = vld [vmem:[%s1 + $0x3b8] sm:$0xf]
  %v370 = vld [vmem:[%s1 + $0x3bc] sm:$0xf]
  %v371 = vld [vmem:[%s1 + $0x3c0] sm:$0xf]
  %v372 = vld [vmem:[%s1 + $0x3c4] sm:$0xf]
  %v373 = vld [vmem:[%s1 + $0x3c8] sm:$0xf]
  %v374 = vld [vmem:[%s1 + $0x3cc] sm:$0xf]
  %v375 = vld [vmem:[%s1 + $0x3d0] sm:$0xf]
  %v376 = vld [vmem:[%s1 + $0x3d4] sm:$0xf]
  %v377 = vld [vmem:[%s1 + $0x3d8] sm:$0xf]
  %v378 = vld [vmem:[%s1 + $0x3dc] sm:$0xf]
  %v379 = vld [vmem:[%s1 + $0x3e0] sm:$0xf]
  %v380 = vld [vmem:[%s1 + $0x3e4] sm:$0xf]
  %v381 = vld [vmem:[%s1 + $0x3e8] sm:$0xf]
  %v382 = vld [vmem:[%s1 + $0x3ec] sm:$0xf]
  %v383 = vld [vmem:[%s1 + $0x3f0] sm:$0xf]
  %v384 = vld [vmem:[%s1 + $0x3f4] sm:$0xf]
  %v385 = vld [vmem:[%s1 + $0x3f8] sm:$0xf]
  %v386 = vld [vmem:[%s1 + $0x3fc] sm:$0xf]
  %v387 = vld [vmem:[%s1 + $0x400] sm:$0xf]
  %v388 = vld [vmem:[%s1 + $0x404] sm:$0xf]
  %v389 = vld [vmem:[%s1 + $0x408] sm:$0xf]
  %v390 = vld [vmem:[%s1 + $0x40c] sm:$0xf]
  %v391 = vld [vmem:[%s1 + $0x410] sm:$0xf]
  %v392 = vld [vmem:[%s1 + $0x414] sm:$0xf]
  %v393 = vld [vmem:[%s1 + $0x418] sm:$0xf]
  %v394 = vld [vmem:[%s1 + $0x41c] sm:$0xf]
  %v395 = vld [vmem:[%s1 + $0x420] sm:$0xf]
  %v396 = vld [vmem:[%s1 + $0x424] sm:$0xf]
  %v397 = vld [vmem:[%s1 + $0x428] sm:$0xf]
  %v398 = vld [vmem:[%s1 + $0x42c] sm:$0xf]
  %v399 = vld [vmem:[%s1 + $0x430] sm:$0xf]
  %v400 = vld [vmem:[%s1 + $0x434] sm:$0xf]
  %v401 = vld [vmem:[%s1 + $0x438] sm:$0xf]
  %v402 = vld [vmem:[%s1 + $0x43c] sm:$0xf]
  %v403 = vld [vmem:[%s1 + $0x440] sm:$0xf]
  %v404 = vld [vmem:[%s1 + $0x444] sm:$0xf]
  %v405 = vld [vmem:[%s1 + $0x448] sm:$0xf]
  %v406 = vld [vmem:[%s1 + $0x44c] sm:$0xf]
  %v407 = vld [vmem:[%s1 + $0x450] sm:$0xf]
  %v408 = vld [vmem:[%s1 + $0x454] sm:$0xf]
  %v409 = vld [vmem:[%s1 + $0x458] sm:$0xf]
  %v410 = vld [vmem:[%s1 + $0x45c] sm:$0xf]
  %v411 = vld [vmem:[%s1 + $0x460] sm:$0xf]
  %v412 = vld [vmem:[%s1 + $0x464] sm:$0xf]
  %v413 = vld [vmem:[%s1 + $0x468] sm:$0xf]
  %v414 = vld [vmem:[%s1 + $0x46c] sm:$0xf]
  %v415 = vld [vmem:[%s1 + $0x470] sm:$0xf]
  %v416 = vld [vmem:[%s1 + $0x474] sm:$0xf]
  %v417 = vld [vmem:[%s1 + $0x478] sm:$0xf]
  %v418 = vld [vmem:[%s1 + $0x47c] sm:$0xf]
  %v419 = vld [vmem:[%s1 + $0x480] sm:$0xf]
  %v420 = vld [vmem:[%s1 + $0x484] sm:$0xf]
  %v421 = vld [vmem:[%s1 + $0x488] sm:$0xf]
  %v422 = vld [vmem:[%s1 + $0x48c] sm:$0xf]
  %v423 = vld [vmem:[%s1 + $0x490] sm:$0xf]
  %v424 = vld [vmem:[%s1 + $0x494] sm:$0xf]
  %v425 = vld [vmem:[%s1 + $0x498] sm:$0xf]
  %v426 = vld [vmem:[%s1 + $0x49c] sm:$0xf]
  %v427 = vld [vmem:[%s1 + $0x4a0] sm:$0xf]
  %v428 = vld [vmem:[%s1 + $0x4a4] sm:$0xf]
  %v429 = vld [vmem:[%s1 + $0x4a8] sm:$0xf]
  %v430 = vld [vmem:[%s1 + $0x4ac] sm:$0xf]
  %v431 = vld [vmem:[%s1 + $0x4b0] sm:$0xf]
  %v432 = vld [vmem:[%s1 + $0x4b4] sm:$0xf]
  %v433 = vld [vmem:[%s1 + $0x4b8] sm:$0xf]
  %v434 = vld [vmem:[%s1 + $0x4bc] sm:$0xf]
  %v435 = vld [vmem:[%s1 + $0x4c0] sm:$0xf]
  %v436 = vld [vmem:[%s1 + $0x4c4] sm:$0xf]
  %v437 = vld [vmem:[%s1 + $0x4c8] sm:$0xf]
  %v438 = vld [vmem:[%s1 + $0x4cc] sm:$0xf]
  %v439 = vld [vmem:[%s1 + $0x4d0] sm:$0xf]
  %v440 = vld [vmem:[%s1 + $0x4d4] sm:$0xf]
  %v441 = vld [vmem:[%s1 + $0x4d8] sm:$0xf]
  %v442 = vld [vmem:[%s1 + $0x4dc] sm:$0xf]
  %v443 = vld [vmem:[%s1 + $0x4e0] sm:$0xf]
  %v444 = vld [vmem:[%s1 + $0x4e4] sm:$0xf]
  %v445 = vld [vmem:[%s1 + $0x4e8] sm:$0xf]
  %v446 = vld [vmem:[%s1 + $0x4ec] sm:$0xf]
  %v447 = vld [vmem:[%s1 + $0x4f0] sm:$0xf]
  %v448 = vld [vmem:[%s1 + $0x4f4] sm:$0xf]
  %v449 = vld [vmem:[%s1 + $0x4f8] sm:$0xf]
  %v450 = vld [vmem:[%s1 + $0x4fc] sm:$0xf]
  %v451 = vld [vmem:[%s1 + $0x500] sm:$0xf]
  %v452 = vld [vmem:[%s1 + $0x504] sm:$0xf]
  %v453 = vld [vmem:[%s1 + $0x508] sm:$0xf]
  %v454 = vld [vmem:[%s1 + $0x50c] sm:$0xf]
  %v455 = vld [vmem:[%s1 + $0x510] sm:$0xf]
  %v456 = vld [vmem:[%s1 + $0x514] sm:$0xf]
  %v457 = vld [vmem:[%s1 + $0x518] sm:$0xf]
  %v458 = vld [vmem:[%s1 + $0x51c] sm:$0xf]
  %v459 = vld [vmem:[%s1 + $0x520] sm:$0xf]
  %v460 = vld [vmem:[%s1 + $0x524] sm:$0xf]
  %v461 = vld [vmem:[%s1 + $0x528] sm:$0xf]
  %v462 = vld [vmem:[%s1 + $0x52c] sm:$0xf]
  %v463 = vld [vmem:[%s1 + $0x530] sm:$0xf]
  %v464 = vld [vmem:[%s1 + $0x534] sm:$0xf]
  %v465 = vld [vmem:[%s1 + $0x538] sm:$0xf]
  %v466 = vld [vmem:[%s1 + $0x53c] sm:$0xf]
  %v467 = vld [vmem:[%s1 + $0x540] sm:$0xf]
  %v468 = vld [vmem:[%s1 + $0x544] sm:$0xf]
  %v469 = vld [vmem:[%s1 + $0x548] sm:$0xf]
  %v470 = vld [vmem:[%s1 + $0x54c] sm:$0xf]
  %v471 = vld [vmem:[%s1 + $0x550] sm:$0xf]
  %v472 = vld [vmem:[%s1 + $0x554] sm:$0xf]
  %v473 = vld [vmem:[%s1 + $0x558] sm:$0xf]
  %v474 = vld [vmem:[%s1 + $0x55c] sm:$0xf]
  %v475 = vld [vmem:[%s1 + $0x560] sm:$0xf]
  %v476 = vld [vmem:[%s1 + $0x564] sm:$0xf]
  %v477 = vld [vmem:[%s1 + $0x568] sm:$0xf]
  %v478 = vld [vmem:[%s1 + $0x56c] sm:$0xf]
  %v479 = vld [vmem:[%s1 + $0x570] sm:$0xf]
  %v480 = vld [vmem:[%s1 + $0x574] sm:$0xf]
  %v481 = vld [vmem:[%s1 + $0x578] sm:$0xf]
  %v482 = vld [vmem:[%s1 + $0x57c] sm:$0xf]
  %v483 = vld [vmem:[%s1 + $0x580] sm:$0xf]
  %v484 = vld [vmem:[%s1 + $0x584] sm:$0xf]
  %v485 = vld [vmem:[%s1 + $0x588] sm:$0xf]
  %v486 = vld [vmem:[%s1 + $0x58c] sm:$0xf]
  %v487 = vld [vmem:[%s1 + $0x590] sm:$0xf]
  %v488 = vld [vmem:[%s1 + $0x594] sm:$0xf]
  %v489 = vld [vmem:[%s1 + $0x598] sm:$0xf]
  %v490 = vld [vmem:[%s1 + $0x59c] sm:$0xf]
  %v491 = vld [vmem:[%s1 + $0x5a0] sm:$0xf]
  %v492 = vld [vmem:[%s1 + $0x5a4] sm:$0xf]
  %v493 = vld [vmem:[%s1 + $0x5a8] sm:$0xf]
  %v494 = vld [vmem:[%s1 + $0x5ac] sm:$0xf]
  %v495 = vld [vmem:[%s1 + $0x5b0] sm:$0xf]
  %v496 = vld [vmem:[%s1 + $0x5b4] sm:$0xf]
  %v497 = vld [vmem:[%s1 + $0x5b8] sm:$0xf]
  %v498 = vld [vmem:[%s1 + $0x5bc] sm:$0xf]
  %v499 = vld [vmem:[%s1 + $0x5c0] sm:$0xf]
  %v500 = vld [vmem:[%s1 + $0x5c4] sm:$0xf]
  %v501 = vld [vmem:[%s1 + $0x5c8] sm:$0xf]
  %v502 = vld [vmem:[%s1 + $0x5cc] sm:$0xf]
  %v503 = vld [vmem:[%s1 + $0x5d0] sm:$0xf]
  %v504 = vld [vmem:[%s1 + $0x5d4] sm:$0xf]
  %v505 = vld [vmem:[%s1 + $0x5d8] sm:$0xf]
  %v506 = vld [vmem:[%s1 + $0x5dc] sm:$0xf]
  %v507 = vld [vmem:[%s1 + $0x5e0] sm:$0xf]
  %v508 = vld [vmem:[%s1 + $0x5e4] sm:$0xf]
  %v509 = vld [vmem:[%s1 + $0x5e8] sm:$0xf]
  %v510 = vld [vmem:[%s1 + $0x5ec] sm:$0xf]
  %v511 = vld [vmem:[%s1 + $0x5f0] sm:$0xf]
  %v512 = vld [vmem:[%s1 + $0x5f4] sm:$0xf]
  %v513 = vld [vmem:[%s1 + $0x5f8] sm:$0xf]
  %v514 = vld [vmem:[%s1 + $0x5fc] sm:$0xf]
  %v515 = vld [vmem:[%s1 + $0x600] sm:$0xf]
  %v516 = vld [vmem:[%s1 + $0x604] sm:$0xf]
  %v517 = vld [vmem:[%s1 + $0x608] sm:$0xf]
  %v518 = vld [vmem:[%s1 + $0x60c] sm:$0xf]
  %v519 = vld [vmem:[%s1 + $0x610] sm:$0xf]
  %v520 = vld [vmem:[%s1 + $0x614] sm:$0xf]
  %v521 = vld [vmem:[%s1 + $0x618] sm:$0xf]
  %v522 = vld [vmem:[%s1 + $0x61c] sm:$0xf]
  %v523 = vld [vmem:[%s1 + $0x620] sm:$0xf]
  %v524 = vld [vmem:[%s1 + $0x624] sm:$0xf]
  %v525 = vld [vmem:[%s1 + $0x628] sm:$0xf]
  %v526 = vld [vmem:[%s1 + $0x62c] sm:$0xf]
  %v527 = vld [vmem:[%s1 + $0x630] sm:$0xf]
  %v528 = vld [vmem:[%s1 + $0x634] sm:$0xf]
  %v529 = vld [vmem:[%s1 + $0x638] sm:$0xf]
  %v530 = vld [vmem:[%s1 + $0x63c] sm:$0xf]
  %v531 = vld [vmem:[%s2] sm:$0x1]
  %v533 = vlaneseq
  %v534 = vshrl.u32 %v533, 7
  %v535 = vsub.s32 0, %v534
  %v536 = vrot.slane %v531, %v535
  %v642 = vunpack.c.l.b16 %v27
  %v643 = vunpack.c.h.b16 %v27
  %v644 = vunpack.c.l.b16 %v28
  %v645 = vunpack.c.h.b16 %v28
  %v646 = vunpack.c.l.b16 %v29
  %v647 = vunpack.c.h.b16 %v29
  %v648 = vunpack.c.l.b16 %v30
  %v649 = vunpack.c.h.b16 %v30
  %v650 = vunpack.c.l.b16 %v31
  %v651 = vunpack.c.h.b16 %v31
  %v652 = vunpack.c.l.b16 %v32
  %v653 = vunpack.c.h.b16 %v32
  %v654 = vunpack.c.l.b16 %v33
  %v655 = vunpack.c.h.b16 %v33
  %v656 = vunpack.c.l.b16 %v34
  %v657 = vunpack.c.h.b16 %v34
  %v658 = vunpack.c.l.b16 %v35
  %v659 = vunpack.c.h.b16 %v35
  %v660 = vunpack.c.l.b16 %v36
  %v661 = vunpack.c.h.b16 %v36
  %v662 = vunpack.c.l.b16 %v37
  %v663 = vunpack.c.h.b16 %v37
  %v664 = vunpack.c.l.b16 %v38
  %v665 = vunpack.c.h.b16 %v38
  %v666 = vunpack.c.l.b16 %v39
  %v667 = vunpack.c.l.b16 %v40
  %v668 = vunpack.c.h.b16 %v40
  %v669 = vunpack.c.l.b16 %v41
  %v670 = vunpack.c.h.b16 %v41
  %v671 = vunpack.c.l.b16 %v42
  %v672 = vunpack.c.h.b16 %v42
  %v673 = vunpack.c.l.b16 %v43
  %v674 = vunpack.c.h.b16 %v43
  %v675 = vunpack.c.l.b16 %v44
  %v676 = vunpack.c.h.b16 %v44
  %v677 = vunpack.c.l.b16 %v45
  %v678 = vunpack.c.h.b16 %v45
  %v679 = vunpack.c.l.b16 %v46
  %v680 = vunpack.c.h.b16 %v46
  %v681 = vunpack.c.l.b16 %v47
  %v682 = vunpack.c.h.b16 %v47
  %v683 = vunpack.c.l.b16 %v48
  %v684 = vunpack.c.h.b16 %v48
  %v685 = vunpack.c.l.b16 %v49
  %v686 = vunpack.c.h.b16 %v49
  %v687 = vunpack.c.l.b16 %v50
  %v688 = vunpack.c.h.b16 %v50
  %v689 = vunpack.c.l.b16 %v51
  %v690 = vunpack.c.h.b16 %v51
  %v691 = vunpack.c.l.b16 %v52
  %v692 = vunpack.c.l.b16 %v53
  %v693 = vunpack.c.h.b16 %v53
  %v694 = vunpack.c.l.b16 %v54
  %v695 = vunpack.c.h.b16 %v54
  %v696 = vunpack.c.l.b16 %v55
  %v697 = vunpack.c.h.b16 %v55
  %v698 = vunpack.c.l.b16 %v56
  %v699 = vunpack.c.h.b16 %v56
  %v700 = vunpack.c.l.b16 %v57
  %v701 = vunpack.c.h.b16 %v57
  %v702 = vunpack.c.l.b16 %v58
  %v703 = vunpack.c.h.b16 %v58
  %v704 = vunpack.c.l.b16 %v59
  %v705 = vunpack.c.h.b16 %v59
  %v706 = vunpack.c.l.b16 %v60
  %v707 = vunpack.c.h.b16 %v60
  %v708 = vunpack.c.l.b16 %v61
  %v709 = vunpack.c.h.b16 %v61
  %v710 = vunpack.c.l.b16 %v62
  %v711 = vunpack.c.h.b16 %v62
  %v712 = vunpack.c.l.b16 %v63
  %v713 = vunpack.c.h.b16 %v63
  %v714 = vunpack.c.l.b16 %v64
  %v715 = vunpack.c.h.b16 %v64
  %v716 = vunpack.c.l.b16 %v65
  %v717 = vunpack.c.l.b16 %v66
  %v718 = vunpack.c.h.b16 %v66
  %v719 = vunpack.c.l.b16 %v67
  %v720 = vunpack.c.h.b16 %v67
  %v721 = vunpack.c.l.b16 %v68
  %v722 = vunpack.c.h.b16 %v68
  %v723 = vunpack.c.l.b16 %v69
  %v724 = vunpack.c.h.b16 %v69
  %v725 = vunpack.c.l.b16 %v70
  %v726 = vunpack.c.h.b16 %v70
  %v727 = vunpack.c.l.b16 %v71
  %v728 = vunpack.c.h.b16 %v71
  %v729 = vunpack.c.l.b16 %v72
  %v730 = vunpack.c.h.b16 %v72
  %v731 = vunpack.c.l.b16 %v73
  %v732 = vunpack.c.h.b16 %v73
  %v733 = vunpack.c.l.b16 %v74
  %v734 = vunpack.c.h.b16 %v74
  %v735 = vunpack.c.l.b16 %v75
  %v736 = vunpack.c.h.b16 %v75
  %v737 = vunpack.c.l.b16 %v76
  %v738 = vunpack.c.h.b16 %v76
  %v739 = vunpack.c.l.b16 %v77
  %v740 = vunpack.c.h.b16 %v77
  %v741 = vunpack.c.l.b16 %v78
  %v742 = vunpack.c.l.b16 %v79
  %v743 = vunpack.c.h.b16 %v79
  %v744 = vunpack.c.l.b16 %v80
  %v745 = vunpack.c.h.b16 %v80
  %v746 = vunpack.c.l.b16 %v81
  %v747 = vunpack.c.h.b16 %v81
  %v748 = vunpack.c.l.b16 %v82
  %v749 = vunpack.c.h.b16 %v82
  %v750 = vunpack.c.l.b16 %v83
  %v751 = vunpack.c.h.b16 %v83
  %v752 = vunpack.c.l.b16 %v84
  %v753 = vunpack.c.h.b16 %v84
  %v754 = vunpack.c.l.b16 %v85
  %v755 = vunpack.c.h.b16 %v85
  %v756 = vunpack.c.l.b16 %v86
  %v757 = vunpack.c.h.b16 %v86
  %v758 = vunpack.c.l.b16 %v87
  %v759 = vunpack.c.h.b16 %v87
  %v760 = vunpack.c.l.b16 %v88
  %v761 = vunpack.c.h.b16 %v88
  %v762 = vunpack.c.l.b16 %v89
  %v763 = vunpack.c.h.b16 %v89
  %v764 = vunpack.c.l.b16 %v90
  %v765 = vunpack.c.h.b16 %v90
  %v766 = vunpack.c.l.b16 %v91
  %v767 = vunpack.c.l.b16 %v92
  %v768 = vunpack.c.h.b16 %v92
  %v769 = vunpack.c.l.b16 %v93
  %v770 = vunpack.c.h.b16 %v93
  %v771 = vunpack.c.l.b16 %v94
  %v772 = vunpack.c.h.b16 %v94
  %v773 = vunpack.c.l.b16 %v95
  %v774 = vunpack.c.h.b16 %v95
  %v775 = vunpack.c.l.b16 %v96
  %v776 = vunpack.c.h.b16 %v96
  %v777 = vunpack.c.l.b16 %v97
  %v778 = vunpack.c.h.b16 %v97
  %v779 = vunpack.c.l.b16 %v98
  %v780 = vunpack.c.h.b16 %v98
  %v781 = vunpack.c.l.b16 %v99
  %v782 = vunpack.c.h.b16 %v99
  %v783 = vunpack.c.l.b16 %v100
  %v784 = vunpack.c.h.b16 %v100
  %v785 = vunpack.c.l.b16 %v101
  %v786 = vunpack.c.h.b16 %v101
  %v787 = vunpack.c.l.b16 %v102
  %v788 = vunpack.c.h.b16 %v102
  %v789 = vunpack.c.l.b16 %v103
  %v790 = vunpack.c.h.b16 %v103
  %v791 = vunpack.c.l.b16 %v104
  %v792 = vunpack.c.l.b16 %v105
  %v793 = vunpack.c.h.b16 %v105
  %v794 = vunpack.c.l.b16 %v106
  %v795 = vunpack.c.h.b16 %v106
  %v796 = vunpack.c.l.b16 %v107
  %v797 = vunpack.c.h.b16 %v107
  %v798 = vunpack.c.l.b16 %v108
  %v799 = vunpack.c.h.b16 %v108
  %v800 = vunpack.c.l.b16 %v109
  %v801 = vunpack.c.h.b16 %v109
  %v802 = vunpack.c.l.b16 %v110
  %v803 = vunpack.c.h.b16 %v110
  %v804 = vunpack.c.l.b16 %v111
  %v805 = vunpack.c.h.b16 %v111
  %v806 = vunpack.c.l.b16 %v112
  %v807 = vunpack.c.h.b16 %v112
  %v808 = vunpack.c.l.b16 %v113
  %v809 = vunpack.c.h.b16 %v113
  %v810 = vunpack.c.l.b16 %v114
  %v811 = vunpack.c.h.b16 %v114
  %v812 = vunpack.c.l.b16 %v115
  %v813 = vunpack.c.h.b16 %v115
  %v814 = vunpack.c.l.b16 %v116
  %v815 = vunpack.c.h.b16 %v116
  %v816 = vunpack.c.l.b16 %v117
  %v817 = vunpack.c.l.b16 %v118
  %v818 = vunpack.c.h.b16 %v118
  %v819 = vunpack.c.l.b16 %v119
  %v820 = vunpack.c.h.b16 %v119
  %v821 = vunpack.c.l.b16 %v120
  %v822 = vunpack.c.h.b16 %v120
  %v823 = vunpack.c.l.b16 %v121
  %v824 = vunpack.c.h.b16 %v121
  %v825 = vunpack.c.l.b16 %v122
  %v826 = vunpack.c.h.b16 %v122
  %v827 = vunpack.c.l.b16 %v123
  %v828 = vunpack.c.h.b16 %v123
  %v829 = vunpack.c.l.b16 %v124
  %v830 = vunpack.c.h.b16 %v124
  %v831 = vunpack.c.l.b16 %v125
  %v832 = vunpack.c.h.b16 %v125
  %v833 = vunpack.c.l.b16 %v126
  %v834 = vunpack.c.h.b16 %v126
  %v835 = vunpack.c.l.b16 %v127
  %v836 = vunpack.c.h.b16 %v127
  %v837 = vunpack.c.l.b16 %v128
  %v838 = vunpack.c.h.b16 %v128
  %v839 = vunpack.c.l.b16 %v129
  %v840 = vunpack.c.h.b16 %v129
  %v841 = vunpack.c.l.b16 %v130
  %v842 = vpack.c.b16 %v667, %v642
  %v843 = vpack.c.b16 %v668, %v643
  %v844 = vpack.c.b16 %v669, %v644
  %v845 = vpack.c.b16 %v670, %v645
  %v846 = vpack.c.b16 %v671, %v646
  %v847 = vpack.c.b16 %v672, %v647
  %v848 = vpack.c.b16 %v673, %v648
  %v849 = vpack.c.b16 %v674, %v649
  %v850 = vpack.c.b16 %v675, %v650
  %v851 = vpack.c.b16 %v676, %v651
  %v852 = vpack.c.b16 %v677, %v652
  %v853 = vpack.c.b16 %v678, %v653
  %v854 = vpack.c.b16 %v679, %v654
  %v855 = vpack.c.b16 %v680, %v655
  %v856 = vpack.c.b16 %v681, %v656
  %v857 = vpack.c.b16 %v682, %v657
  %v858 = vpack.c.b16 %v683, %v658
  %v859 = vpack.c.b16 %v684, %v659
  %v860 = vpack.c.b16 %v685, %v660
  %v861 = vpack.c.b16 %v686, %v661
  %v862 = vpack.c.b16 %v687, %v662
  %v863 = vpack.c.b16 %v688, %v663
  %v864 = vpack.c.b16 %v689, %v664
  %v865 = vpack.c.b16 %v690, %v665
  %v866 = vpack.c.b16 %v691, %v666
  %v867 = vpack.c.b16 %v717, %v692
  %v868 = vpack.c.b16 %v718, %v693
  %v869 = vpack.c.b16 %v719, %v694
  %v870 = vpack.c.b16 %v720, %v695
  %v871 = vpack.c.b16 %v721, %v696
  %v872 = vpack.c.b16 %v722, %v697
  %v873 = vpack.c.b16 %v723, %v698
  %v874 = vpack.c.b16 %v724, %v699
  %v875 = vpack.c.b16 %v725, %v700
  %v876 = vpack.c.b16 %v726, %v701
  %v877 = vpack.c.b16 %v727, %v702
  %v878 = vpack.c.b16 %v728, %v703
  %v879 = vpack.c.b16 %v729, %v704
  %v880 = vpack.c.b16 %v730, %v705
  %v881 = vpack.c.b16 %v731, %v706
  %v882 = vpack.c.b16 %v732, %v707
  %v883 = vpack.c.b16 %v733, %v708
  %v884 = vpack.c.b16 %v734, %v709
  %v885 = vpack.c.b16 %v735, %v710
  %v886 = vpack.c.b16 %v736, %v711
  %v887 = vpack.c.b16 %v737, %v712
  %v888 = vpack.c.b16 %v738, %v713
  %v889 = vpack.c.b16 %v739, %v714
  %v890 = vpack.c.b16 %v740, %v715
  %v891 = vpack.c.b16 %v741, %v716
  %v892 = vpack.c.b16 %v767, %v742
  %v893 = vpack.c.b16 %v768, %v743
  %v894 = vpack.c.b16 %v769, %v744
  %v895 = vpack.c.b16 %v770, %v745
  %v896 = vpack.c.b16 %v771, %v746
  %v897 = vpack.c.b16 %v772, %v747
  %v898 = vpack.c.b16 %v773, %v748
  %v899 = vpack.c.b16 %v774, %v749
  %v900 = vpack.c.b16 %v775, %v750
  %v901 = vpack.c.b16 %v776, %v751
  %v902 = vpack.c.b16 %v777, %v752
  %v903 = vpack.c.b16 %v778, %v753
  %v904 = vpack.c.b16 %v779, %v754
  %v905 = vpack.c.b16 %v780, %v755
  %v906 = vpack.c.b16 %v781, %v756
  %v907 = vpack.c.b16 %v782, %v757
  %v908 = vpack.c.b16 %v783, %v758
  %v909 = vpack.c.b16 %v784, %v759
  %v910 = vpack.c.b16 %v785, %v760
  %v911 = vpack.c.b16 %v786, %v761
  %v912 = vpack.c.b16 %v787, %v762
  %v913 = vpack.c.b16 %v788, %v763
  %v914 = vpack.c.b16 %v789, %v764
  %v915 = vpack.c.b16 %v790, %v765
  %v916 = vpack.c.b16 %v791, %v766
  %v917 = vpack.c.b16 %v817, %v792
  %v918 = vpack.c.b16 %v818, %v793
  %v919 = vpack.c.b16 %v819, %v794
  %v920 = vpack.c.b16 %v820, %v795
  %v921 = vpack.c.b16 %v821, %v796
  %v922 = vpack.c.b16 %v822, %v797
  %v923 = vpack.c.b16 %v823, %v798
  %v924 = vpack.c.b16 %v824, %v799
  %v925 = vpack.c.b16 %v825, %v800
  %v926 = vpack.c.b16 %v826, %v801
  %v927 = vpack.c.b16 %v827, %v802
  %v928 = vpack.c.b16 %v828, %v803
  %v929 = vpack.c.b16 %v829, %v804
  %v930 = vpack.c.b16 %v830, %v805
  %v931 = vpack.c.b16 %v831, %v806
  %v932 = vpack.c.b16 %v832, %v807
  %v933 = vpack.c.b16 %v833, %v808
  %v934 = vpack.c.b16 %v834, %v809
  %v935 = vpack.c.b16 %v835, %v810
  %v936 = vpack.c.b16 %v836, %v811
  %v937 = vpack.c.b16 %v837, %v812
  %v938 = vpack.c.b16 %v838, %v813
  %v939 = vpack.c.b16 %v839, %v814
  %v940 = vpack.c.b16 %v840, %v815
  %v941 = vpack.c.b16 %v841, %v816
  %v1442 = vunpack.c.l.b16 %v131
  %v1443 = vunpack.c.l.b16 %v132
  %v1444 = vunpack.c.l.b16 %v133
  %v1445 = vunpack.c.l.b16 %v134
  %v1446 = vunpack.c.l.b16 %v135
  %v1447 = vunpack.c.l.b16 %v136
  %v1448 = vunpack.c.l.b16 %v137
  %v1449 = vunpack.c.l.b16 %v138
  %v1450 = vunpack.c.l.b16 %v139
  %v1451 = vunpack.c.l.b16 %v140
  %v1452 = vunpack.c.l.b16 %v141
  %v1453 = vunpack.c.l.b16 %v142
  %v1454 = vunpack.c.l.b16 %v143
  %v1455 = vunpack.c.l.b16 %v144
  %v1456 = vunpack.c.l.b16 %v145
  %v1457 = vunpack.c.l.b16 %v146
  %v1458 = vunpack.c.l.b16 %v147
  %v1459 = vunpack.c.l.b16 %v148
  %v1460 = vunpack.c.l.b16 %v149
  %v1461 = vunpack.c.l.b16 %v150
  %v1462 = vunpack.c.l.b16 %v151
  %v1463 = vunpack.c.l.b16 %v152
  %v1464 = vunpack.c.l.b16 %v153
  %v1465 = vunpack.c.l.b16 %v154
  %v1466 = vunpack.c.l.b16 %v155
  %v1467 = vunpack.c.l.b16 %v156
  %v1468 = vunpack.c.l.b16 %v157
  %v1469 = vunpack.c.l.b16 %v158
  %v1470 = vunpack.c.l.b16 %v159
  %v1471 = vunpack.c.l.b16 %v160
  %v1472 = vunpack.c.l.b16 %v161
  %v1473 = vunpack.c.l.b16 %v162
  %v1474 = vunpack.c.l.b16 %v163
  %v1475 = vunpack.c.l.b16 %v164
  %v1476 = vunpack.c.l.b16 %v165
  %v1477 = vunpack.c.l.b16 %v166
  %v1478 = vunpack.c.l.b16 %v167
  %v1479 = vunpack.c.l.b16 %v168
  %v1480 = vunpack.c.l.b16 %v169
  %v1481 = vunpack.c.l.b16 %v170
  %v1482 = vunpack.c.l.b16 %v171
  %v1483 = vunpack.c.l.b16 %v172
  %v1484 = vunpack.c.l.b16 %v173
  %v1485 = vunpack.c.l.b16 %v174
  %v1486 = vunpack.c.l.b16 %v175
  %v1487 = vunpack.c.l.b16 %v176
  %v1488 = vunpack.c.l.b16 %v177
  %v1489 = vunpack.c.l.b16 %v178
  %v1490 = vunpack.c.l.b16 %v179
  %v1491 = vunpack.c.l.b16 %v180
  %v1492 = vunpack.c.l.b16 %v181
  %v1493 = vunpack.c.l.b16 %v182
  %v1494 = vunpack.c.l.b16 %v183
  %v1495 = vunpack.c.l.b16 %v184
  %v1496 = vunpack.c.l.b16 %v185
  %v1497 = vunpack.c.l.b16 %v186
  %v1498 = vunpack.c.l.b16 %v187
  %v1499 = vunpack.c.l.b16 %v188
  %v1500 = vunpack.c.l.b16 %v189
  %v1501 = vunpack.c.l.b16 %v190
  %v1502 = vunpack.c.l.b16 %v191
  %v1503 = vunpack.c.l.b16 %v192
  %v1504 = vunpack.c.l.b16 %v193
  %v1505 = vunpack.c.l.b16 %v194
  %v1506 = vunpack.c.l.b16 %v195
  %v1507 = vunpack.c.l.b16 %v196
  %v1508 = vunpack.c.l.b16 %v197
  %v1509 = vunpack.c.l.b16 %v198
  %v1510 = vunpack.c.l.b16 %v199
  %v1511 = vunpack.c.l.b16 %v200
  %v1512 = vunpack.c.l.b16 %v201
  %v1513 = vunpack.c.l.b16 %v202
  %v1514 = vunpack.c.l.b16 %v203
  %v1515 = vunpack.c.l.b16 %v204
  %v1516 = vunpack.c.l.b16 %v205
  %v1517 = vunpack.c.l.b16 %v206
  %v1518 = vunpack.c.l.b16 %v207
  %v1519 = vunpack.c.l.b16 %v208
  %v1520 = vunpack.c.l.b16 %v209
  %v1521 = vunpack.c.l.b16 %v210
  %v1522 = vunpack.c.l.b16 %v211
  %v1523 = vunpack.c.l.b16 %v212
  %v1524 = vunpack.c.l.b16 %v213
  %v1525 = vunpack.c.l.b16 %v214
  %v1526 = vunpack.c.l.b16 %v215
  %v1527 = vunpack.c.l.b16 %v216
  %v1528 = vunpack.c.l.b16 %v217
  %v1529 = vunpack.c.l.b16 %v218
  %v1530 = vunpack.c.l.b16 %v219
  %v1531 = vunpack.c.l.b16 %v220
  %v1532 = vunpack.c.l.b16 %v221
  %v1533 = vunpack.c.l.b16 %v222
  %v1534 = vunpack.c.l.b16 %v223
  %v1535 = vunpack.c.l.b16 %v224
  %v1536 = vunpack.c.l.b16 %v225
  %v1537 = vunpack.c.l.b16 %v226
  %v1538 = vunpack.c.l.b16 %v227
  %v1539 = vunpack.c.l.b16 %v228
  %v1540 = vunpack.c.l.b16 %v229
  %v1541 = vunpack.c.l.b16 %v230
  %v1542 = vunpack.c.l.b16 %v231
  %v1543 = vunpack.c.l.b16 %v232
  %v1544 = vunpack.c.l.b16 %v233
  %v1545 = vunpack.c.l.b16 %v234
  %v1546 = vunpack.c.l.b16 %v235
  %v1547 = vunpack.c.l.b16 %v236
  %v1548 = vunpack.c.l.b16 %v237
  %v1549 = vunpack.c.l.b16 %v238
  %v1550 = vunpack.c.l.b16 %v239
  %v1551 = vunpack.c.l.b16 %v240
  %v1552 = vunpack.c.l.b16 %v241
  %v1553 = vunpack.c.l.b16 %v242
  %v1554 = vunpack.c.l.b16 %v243
  %v1555 = vunpack.c.l.b16 %v244
  %v1556 = vunpack.c.l.b16 %v245
  %v1557 = vunpack.c.l.b16 %v246
  %v1558 = vunpack.c.l.b16 %v247
  %v1559 = vunpack.c.l.b16 %v248
  %v1560 = vunpack.c.l.b16 %v249
  %v1561 = vunpack.c.l.b16 %v250
  %v1562 = vunpack.c.l.b16 %v251
  %v1563 = vunpack.c.l.b16 %v252
  %v1564 = vunpack.c.l.b16 %v253
  %v1565 = vunpack.c.l.b16 %v254
  %v1566 = vunpack.c.l.b16 %v255
  %v1567 = vunpack.c.l.b16 %v256
  %v1568 = vunpack.c.l.b16 %v257
  %v1569 = vunpack.c.l.b16 %v258
  %v1570 = vunpack.c.l.b16 %v259
  %v1571 = vunpack.c.l.b16 %v260
  %v1572 = vunpack.c.l.b16 %v261
  %v1573 = vunpack.c.l.b16 %v262
  %v1574 = vunpack.c.l.b16 %v263
  %v1575 = vunpack.c.l.b16 %v264
  %v1576 = vunpack.c.l.b16 %v265
  %v1577 = vunpack.c.l.b16 %v266
  %v1578 = vunpack.c.l.b16 %v267
  %v1579 = vunpack.c.l.b16 %v268
  %v1580 = vunpack.c.l.b16 %v269
  %v1581 = vunpack.c.l.b16 %v270
  %v1582 = vunpack.c.l.b16 %v271
  %v1583 = vunpack.c.l.b16 %v272
  %v1584 = vunpack.c.l.b16 %v273
  %v1585 = vunpack.c.l.b16 %v274
  %v1586 = vunpack.c.l.b16 %v275
  %v1587 = vunpack.c.l.b16 %v276
  %v1588 = vunpack.c.l.b16 %v277
  %v1589 = vunpack.c.l.b16 %v278
  %v1590 = vunpack.c.l.b16 %v279
  %v1591 = vunpack.c.l.b16 %v280
  %v1592 = vunpack.c.l.b16 %v281
  %v1593 = vunpack.c.l.b16 %v282
  %v1594 = vunpack.c.l.b16 %v283
  %v1595 = vunpack.c.l.b16 %v284
  %v1596 = vunpack.c.l.b16 %v285
  %v1597 = vunpack.c.l.b16 %v286
  %v1598 = vunpack.c.l.b16 %v287
  %v1599 = vunpack.c.l.b16 %v288
  %v1600 = vunpack.c.l.b16 %v289
  %v1601 = vunpack.c.l.b16 %v290
  %v1602 = vunpack.c.l.b16 %v291
  %v1603 = vunpack.c.l.b16 %v292
  %v1604 = vunpack.c.l.b16 %v293
  %v1605 = vunpack.c.l.b16 %v294
  %v1606 = vunpack.c.l.b16 %v295
  %v1607 = vunpack.c.l.b16 %v296
  %v1608 = vunpack.c.l.b16 %v297
  %v1609 = vunpack.c.l.b16 %v298
  %v1610 = vunpack.c.l.b16 %v299
  %v1611 = vunpack.c.l.b16 %v300
  %v1612 = vunpack.c.l.b16 %v301
  %v1613 = vunpack.c.l.b16 %v302
  %v1614 = vunpack.c.l.b16 %v303
  %v1615 = vunpack.c.l.b16 %v304
  %v1616 = vunpack.c.l.b16 %v305
  %v1617 = vunpack.c.l.b16 %v306
  %v1618 = vunpack.c.l.b16 %v307
  %v1619 = vunpack.c.l.b16 %v308
  %v1620 = vunpack.c.l.b16 %v309
  %v1621 = vunpack.c.l.b16 %v310
  %v1622 = vunpack.c.l.b16 %v311
  %v1623 = vunpack.c.l.b16 %v312
  %v1624 = vunpack.c.l.b16 %v313
  %v1625 = vunpack.c.l.b16 %v314
  %v1626 = vunpack.c.l.b16 %v315
  %v1627 = vunpack.c.l.b16 %v316
  %v1628 = vunpack.c.l.b16 %v317
  %v1629 = vunpack.c.l.b16 %v318
  %v1630 = vunpack.c.l.b16 %v319
  %v1631 = vunpack.c.l.b16 %v320
  %v1632 = vunpack.c.l.b16 %v321
  %v1633 = vunpack.c.l.b16 %v322
  %v1634 = vunpack.c.l.b16 %v323
  %v1635 = vunpack.c.l.b16 %v324
  %v1636 = vunpack.c.l.b16 %v325
  %v1637 = vunpack.c.l.b16 %v326
  %v1638 = vunpack.c.l.b16 %v327
  %v1639 = vunpack.c.l.b16 %v328
  %v1640 = vunpack.c.l.b16 %v329
  %v1641 = vunpack.c.l.b16 %v330
  %v1642 = vunpack.c.l.b16 %v331
  %v1643 = vunpack.c.l.b16 %v332
  %v1644 = vunpack.c.l.b16 %v333
  %v1645 = vunpack.c.l.b16 %v334
  %v1646 = vunpack.c.l.b16 %v335
  %v1647 = vunpack.c.l.b16 %v336
  %v1648 = vunpack.c.l.b16 %v337
  %v1649 = vunpack.c.l.b16 %v338
  %v1650 = vunpack.c.l.b16 %v339
  %v1651 = vunpack.c.l.b16 %v340
  %v1652 = vunpack.c.l.b16 %v341
  %v1653 = vunpack.c.l.b16 %v342
  %v1654 = vunpack.c.l.b16 %v343
  %v1655 = vunpack.c.l.b16 %v344
  %v1656 = vunpack.c.l.b16 %v345
  %v1657 = vunpack.c.l.b16 %v346
  %v1658 = vunpack.c.l.b16 %v347
  %v1659 = vunpack.c.l.b16 %v348
  %v1660 = vunpack.c.l.b16 %v349
  %v1661 = vunpack.c.l.b16 %v350
  %v1662 = vunpack.c.l.b16 %v351
  %v1663 = vunpack.c.l.b16 %v352
  %v1664 = vunpack.c.l.b16 %v353
  %v1665 = vunpack.c.l.b16 %v354
  %v1666 = vunpack.c.l.b16 %v355
  %v1667 = vunpack.c.l.b16 %v356
  %v1668 = vunpack.c.l.b16 %v357
  %v1669 = vunpack.c.l.b16 %v358
  %v1670 = vunpack.c.l.b16 %v359
  %v1671 = vunpack.c.l.b16 %v360
  %v1672 = vunpack.c.l.b16 %v361
  %v1673 = vunpack.c.l.b16 %v362
  %v1674 = vunpack.c.l.b16 %v363
  %v1675 = vunpack.c.l.b16 %v364
  %v1676 = vunpack.c.l.b16 %v365
  %v1677 = vunpack.c.l.b16 %v366
  %v1678 = vunpack.c.l.b16 %v367
  %v1679 = vunpack.c.l.b16 %v368
  %v1680 = vunpack.c.l.b16 %v369
  %v1681 = vunpack.c.l.b16 %v370
  %v1682 = vunpack.c.l.b16 %v371
  %v1683 = vunpack.c.l.b16 %v372
  %v1684 = vunpack.c.l.b16 %v373
  %v1685 = vunpack.c.l.b16 %v374
  %v1686 = vunpack.c.l.b16 %v375
  %v1687 = vunpack.c.l.b16 %v376
  %v1688 = vunpack.c.l.b16 %v377
  %v1689 = vunpack.c.l.b16 %v378
  %v1690 = vunpack.c.l.b16 %v379
  %v1691 = vunpack.c.l.b16 %v380
  %v1692 = vunpack.c.l.b16 %v381
  %v1693 = vunpack.c.l.b16 %v382
  %v1694 = vunpack.c.l.b16 %v383
  %v1695 = vunpack.c.l.b16 %v384
  %v1696 = vunpack.c.l.b16 %v385
  %v1697 = vunpack.c.l.b16 %v386
  %v1698 = vunpack.c.l.b16 %v387
  %v1699 = vunpack.c.l.b16 %v388
  %v1700 = vunpack.c.l.b16 %v389
  %v1701 = vunpack.c.l.b16 %v390
  %v1702 = vunpack.c.l.b16 %v391
  %v1703 = vunpack.c.l.b16 %v392
  %v1704 = vunpack.c.l.b16 %v393
  %v1705 = vunpack.c.l.b16 %v394
  %v1706 = vunpack.c.l.b16 %v395
  %v1707 = vunpack.c.l.b16 %v396
  %v1708 = vunpack.c.l.b16 %v397
  %v1709 = vunpack.c.l.b16 %v398
  %v1710 = vunpack.c.l.b16 %v399
  %v1711 = vunpack.c.l.b16 %v400
  %v1712 = vunpack.c.l.b16 %v401
  %v1713 = vunpack.c.l.b16 %v402
  %v1714 = vunpack.c.l.b16 %v403
  %v1715 = vunpack.c.l.b16 %v404
  %v1716 = vunpack.c.l.b16 %v405
  %v1717 = vunpack.c.l.b16 %v406
  %v1718 = vunpack.c.l.b16 %v407
  %v1719 = vunpack.c.l.b16 %v408
  %v1720 = vunpack.c.l.b16 %v409
  %v1721 = vunpack.c.l.b16 %v410
  %v1722 = vunpack.c.l.b16 %v411
  %v1723 = vunpack.c.l.b16 %v412
  %v1724 = vunpack.c.l.b16 %v413
  %v1725 = vunpack.c.l.b16 %v414
  %v1726 = vunpack.c.l.b16 %v415
  %v1727 = vunpack.c.l.b16 %v416
  %v1728 = vunpack.c.l.b16 %v417
  %v1729 = vunpack.c.l.b16 %v418
  %v1730 = vunpack.c.l.b16 %v419
  %v1731 = vunpack.c.l.b16 %v420
  %v1732 = vunpack.c.l.b16 %v421
  %v1733 = vunpack.c.l.b16 %v422
  %v1734 = vunpack.c.l.b16 %v423
  %v1735 = vunpack.c.l.b16 %v424
  %v1736 = vunpack.c.l.b16 %v425
  %v1737 = vunpack.c.l.b16 %v426
  %v1738 = vunpack.c.l.b16 %v427
  %v1739 = vunpack.c.l.b16 %v428
  %v1740 = vunpack.c.l.b16 %v429
  %v1741 = vunpack.c.l.b16 %v430
  %v1742 = vunpack.c.l.b16 %v431
  %v1743 = vunpack.c.l.b16 %v432
  %v1744 = vunpack.c.l.b16 %v433
  %v1745 = vunpack.c.l.b16 %v434
  %v1746 = vunpack.c.l.b16 %v435
  %v1747 = vunpack.c.l.b16 %v436
  %v1748 = vunpack.c.l.b16 %v437
  %v1749 = vunpack.c.l.b16 %v438
  %v1750 = vunpack.c.l.b16 %v439
  %v1751 = vunpack.c.l.b16 %v440
  %v1752 = vunpack.c.l.b16 %v441
  %v1753 = vunpack.c.l.b16 %v442
  %v1754 = vunpack.c.l.b16 %v443
  %v1755 = vunpack.c.l.b16 %v444
  %v1756 = vunpack.c.l.b16 %v445
  %v1757 = vunpack.c.l.b16 %v446
  %v1758 = vunpack.c.l.b16 %v447
  %v1759 = vunpack.c.l.b16 %v448
  %v1760 = vunpack.c.l.b16 %v449
  %v1761 = vunpack.c.l.b16 %v450
  %v1762 = vunpack.c.l.b16 %v451
  %v1763 = vunpack.c.l.b16 %v452
  %v1764 = vunpack.c.l.b16 %v453
  %v1765 = vunpack.c.l.b16 %v454
  %v1766 = vunpack.c.l.b16 %v455
  %v1767 = vunpack.c.l.b16 %v456
  %v1768 = vunpack.c.l.b16 %v457
  %v1769 = vunpack.c.l.b16 %v458
  %v1770 = vunpack.c.l.b16 %v459
  %v1771 = vunpack.c.l.b16 %v460
  %v1772 = vunpack.c.l.b16 %v461
  %v1773 = vunpack.c.l.b16 %v462
  %v1774 = vunpack.c.l.b16 %v463
  %v1775 = vunpack.c.l.b16 %v464
  %v1776 = vunpack.c.l.b16 %v465
  %v1777 = vunpack.c.l.b16 %v466
  %v1778 = vunpack.c.l.b16 %v467
  %v1779 = vunpack.c.l.b16 %v468
  %v1780 = vunpack.c.l.b16 %v469
  %v1781 = vunpack.c.l.b16 %v470
  %v1782 = vunpack.c.l.b16 %v471
  %v1783 = vunpack.c.l.b16 %v472
  %v1784 = vunpack.c.l.b16 %v473
  %v1785 = vunpack.c.l.b16 %v474
  %v1786 = vunpack.c.l.b16 %v475
  %v1787 = vunpack.c.l.b16 %v476
  %v1788 = vunpack.c.l.b16 %v477
  %v1789 = vunpack.c.l.b16 %v478
  %v1790 = vunpack.c.l.b16 %v479
  %v1791 = vunpack.c.l.b16 %v480
  %v1792 = vunpack.c.l.b16 %v481
  %v1793 = vunpack.c.l.b16 %v482
  %v1794 = vunpack.c.l.b16 %v483
  %v1795 = vunpack.c.l.b16 %v484
  %v1796 = vunpack.c.l.b16 %v485
  %v1797 = vunpack.c.l.b16 %v486
  %v1798 = vunpack.c.l.b16 %v487
  %v1799 = vunpack.c.l.b16 %v488
  %v1800 = vunpack.c.l.b16 %v489
  %v1801 = vunpack.c.l.b16 %v490
  %v1802 = vunpack.c.l.b16 %v491
  %v1803 = vunpack.c.l.b16 %v492
  %v1804 = vunpack.c.l.b16 %v493
  %v1805 = vunpack.c.l.b16 %v494
  %v1806 = vunpack.c.l.b16 %v495
  %v1807 = vunpack.c.l.b16 %v496
  %v1808 = vunpack.c.l.b16 %v497
  %v1809 = vunpack.c.l.b16 %v498
  %v1810 = vunpack.c.l.b16 %v499
  %v1811 = vunpack.c.l.b16 %v500
  %v1812 = vunpack.c.l.b16 %v501
  %v1813 = vunpack.c.l.b16 %v502
  %v1814 = vunpack.c.l.b16 %v503
  %v1815 = vunpack.c.l.b16 %v504
  %v1816 = vunpack.c.l.b16 %v505
  %v1817 = vunpack.c.l.b16 %v506
  %v1818 = vunpack.c.l.b16 %v507
  %v1819 = vunpack.c.l.b16 %v508
  %v1820 = vunpack.c.l.b16 %v509
  %v1821 = vunpack.c.l.b16 %v510
  %v1822 = vunpack.c.l.b16 %v511
  %v1823 = vunpack.c.l.b16 %v512
  %v1824 = vunpack.c.l.b16 %v513
  %v1825 = vunpack.c.l.b16 %v514
  %v1826 = vunpack.c.l.b16 %v515
  %v1827 = vunpack.c.l.b16 %v516
  %v1828 = vunpack.c.l.b16 %v517
  %v1829 = vunpack.c.l.b16 %v518
  %v1830 = vunpack.c.l.b16 %v519
  %v1831 = vunpack.c.l.b16 %v520
  %v1832 = vunpack.c.l.b16 %v521
  %v1833 = vunpack.c.l.b16 %v522
  %v1834 = vunpack.c.l.b16 %v523
  %v1835 = vunpack.c.l.b16 %v524
  %v1836 = vunpack.c.l.b16 %v525
  %v1837 = vunpack.c.l.b16 %v526
  %v1838 = vunpack.c.l.b16 %v527
  %v1839 = vunpack.c.l.b16 %v528
  %v1840 = vunpack.c.l.b16 %v529
  %v1841 = vunpack.c.l.b16 %v530
  %v1842 = vpack.c.b16 %v1443, %v1442
  %v1843 = vpack.c.b16 %v1445, %v1444
  %v1844 = vpack.c.b16 %v1447, %v1446
  %v1845 = vpack.c.b16 %v1449, %v1448
  %v1846 = vpack.c.b16 %v1451, %v1450
  %v1847 = vpack.c.b16 %v1453, %v1452
  %v1848 = vpack.c.b16 %v1455, %v1454
  %v1849 = vpack.c.b16 %v1457, %v1456
  %v1850 = vpack.c.b16 %v1459, %v1458
  %v1851 = vpack.c.b16 %v1461, %v1460
  %v1852 = vpack.c.b16 %v1463, %v1462
  %v1853 = vpack.c.b16 %v1465, %v1464
  %v1854 = vpack.c.b16 %v1467, %v1466
  %v1855 = vpack.c.b16 %v1469, %v1468
  %v1856 = vpack.c.b16 %v1471, %v1470
  %v1857 = vpack.c.b16 %v1473, %v1472
  %v1858 = vpack.c.b16 %v1475, %v1474
  %v1859 = vpack.c.b16 %v1477, %v1476
  %v1860 = vpack.c.b16 %v1479, %v1478
  %v1861 = vpack.c.b16 %v1481, %v1480
  %v1862 = vpack.c.b16 %v1483, %v1482
  %v1863 = vpack.c.b16 %v1485, %v1484
  %v1864 = vpack.c.b16 %v1487, %v1486
  %v1865 = vpack.c.b16 %v1489, %v1488
  %v1866 = vpack.c.b16 %v1491, %v1490
  %v1867 = vpack.c.b16 %v1493, %v1492
  %v1868 = vpack.c.b16 %v1495, %v1494
  %v1869 = vpack.c.b16 %v1497, %v1496
  %v1870 = vpack.c.b16 %v1499, %v1498
  %v1871 = vpack.c.b16 %v1501, %v1500
  %v1872 = vpack.c.b16 %v1503, %v1502
  %v1873 = vpack.c.b16 %v1505, %v1504
  %v1874 = vpack.c.b16 %v1507, %v1506
  %v1875 = vpack.c.b16 %v1509, %v1508
  %v1876 = vpack.c.b16 %v1511, %v1510
  %v1877 = vpack.c.b16 %v1513, %v1512
  %v1878 = vpack.c.b16 %v1515, %v1514
  %v1879 = vpack.c.b16 %v1517, %v1516
  %v1880 = vpack.c.b16 %v1519, %v1518
  %v1881 = vpack.c.b16 %v1521, %v1520
  %v1882 = vpack.c.b16 %v1523, %v1522
  %v1883 = vpack.c.b16 %v1525, %v1524
  %v1884 = vpack.c.b16 %v1527, %v1526
  %v1885 = vpack.c.b16 %v1529, %v1528
  %v1886 = vpack.c.b16 %v1531, %v1530
  %v1887 = vpack.c.b16 %v1533, %v1532
  %v1888 = vpack.c.b16 %v1535, %v1534
  %v1889 = vpack.c.b16 %v1537, %v1536
  %v1890 = vpack.c.b16 %v1539, %v1538
  %v1891 = vpack.c.b16 %v1541, %v1540
  %v1892 = vpack.c.b16 %v1543, %v1542
  %v1893 = vpack.c.b16 %v1545, %v1544
  %v1894 = vpack.c.b16 %v1547, %v1546
  %v1895 = vpack.c.b16 %v1549, %v1548
  %v1896 = vpack.c.b16 %v1551, %v1550
  %v1897 = vpack.c.b16 %v1553, %v1552
  %v1898 = vpack.c.b16 %v1555, %v1554
  %v1899 = vpack.c.b16 %v1557, %v1556
  %v1900 = vpack.c.b16 %v1559, %v1558
  %v1901 = vpack.c.b16 %v1561, %v1560
  %v1902 = vpack.c.b16 %v1563, %v1562
  %v1903 = vpack.c.b16 %v1565, %v1564
  %v1904 = vpack.c.b16 %v1567, %v1566
  %v1905 = vpack.c.b16 %v1569, %v1568
  %v1906 = vpack.c.b16 %v1571, %v1570
  %v1907 = vpack.c.b16 %v1573, %v1572
  %v1908 = vpack.c.b16 %v1575, %v1574
  %v1909 = vpack.c.b16 %v1577, %v1576
  %v1910 = vpack.c.b16 %v1579, %v1578
  %v1911 = vpack.c.b16 %v1581, %v1580
  %v1912 = vpack.c.b16 %v1583, %v1582
  %v1913 = vpack.c.b16 %v1585, %v1584
  %v1914 = vpack.c.b16 %v1587, %v1586
  %v1915 = vpack.c.b16 %v1589, %v1588
  %v1916 = vpack.c.b16 %v1591, %v1590
  %v1917 = vpack.c.b16 %v1593, %v1592
  %v1918 = vpack.c.b16 %v1595, %v1594
  %v1919 = vpack.c.b16 %v1597, %v1596
  %v1920 = vpack.c.b16 %v1599, %v1598
  %v1921 = vpack.c.b16 %v1601, %v1600
  %v1922 = vpack.c.b16 %v1603, %v1602
  %v1923 = vpack.c.b16 %v1605, %v1604
  %v1924 = vpack.c.b16 %v1607, %v1606
  %v1925 = vpack.c.b16 %v1609, %v1608
  %v1926 = vpack.c.b16 %v1611, %v1610
  %v1927 = vpack.c.b16 %v1613, %v1612
  %v1928 = vpack.c.b16 %v1615, %v1614
  %v1929 = vpack.c.b16 %v1617, %v1616
  %v1930 = vpack.c.b16 %v1619, %v1618
  %v1931 = vpack.c.b16 %v1621, %v1620
  %v1932 = vpack.c.b16 %v1623, %v1622
  %v1933 = vpack.c.b16 %v1625, %v1624
  %v1934 = vpack.c.b16 %v1627, %v1626
  %v1935 = vpack.c.b16 %v1629, %v1628
  %v1936 = vpack.c.b16 %v1631, %v1630
  %v1937 = vpack.c.b16 %v1633, %v1632
  %v1938 = vpack.c.b16 %v1635, %v1634
  %v1939 = vpack.c.b16 %v1637, %v1636
  %v1940 = vpack.c.b16 %v1639, %v1638
  %v1941 = vpack.c.b16 %v1641, %v1640
  %v1942 = vpack.c.b16 %v1643, %v1642
  %v1943 = vpack.c.b16 %v1645, %v1644
  %v1944 = vpack.c.b16 %v1647, %v1646
  %v1945 = vpack.c.b16 %v1649, %v1648
  %v1946 = vpack.c.b16 %v1651, %v1650
  %v1947 = vpack.c.b16 %v1653, %v1652
  %v1948 = vpack.c.b16 %v1655, %v1654
  %v1949 = vpack.c.b16 %v1657, %v1656
  %v1950 = vpack.c.b16 %v1659, %v1658
  %v1951 = vpack.c.b16 %v1661, %v1660
  %v1952 = vpack.c.b16 %v1663, %v1662
  %v1953 = vpack.c.b16 %v1665, %v1664
  %v1954 = vpack.c.b16 %v1667, %v1666
  %v1955 = vpack.c.b16 %v1669, %v1668
  %v1956 = vpack.c.b16 %v1671, %v1670
  %v1957 = vpack.c.b16 %v1673, %v1672
  %v1958 = vpack.c.b16 %v1675, %v1674
  %v1959 = vpack.c.b16 %v1677, %v1676
  %v1960 = vpack.c.b16 %v1679, %v1678
  %v1961 = vpack.c.b16 %v1681, %v1680
  %v1962 = vpack.c.b16 %v1683, %v1682
  %v1963 = vpack.c.b16 %v1685, %v1684
  %v1964 = vpack.c.b16 %v1687, %v1686
  %v1965 = vpack.c.b16 %v1689, %v1688
  %v1966 = vpack.c.b16 %v1691, %v1690
  %v1967 = vpack.c.b16 %v1693, %v1692
  %v1968 = vpack.c.b16 %v1695, %v1694
  %v1969 = vpack.c.b16 %v1697, %v1696
  %v1970 = vpack.c.b16 %v1699, %v1698
  %v1971 = vpack.c.b16 %v1701, %v1700
  %v1972 = vpack.c.b16 %v1703, %v1702
  %v1973 = vpack.c.b16 %v1705, %v1704
  %v1974 = vpack.c.b16 %v1707, %v1706
  %v1975 = vpack.c.b16 %v1709, %v1708
  %v1976 = vpack.c.b16 %v1711, %v1710
  %v1977 = vpack.c.b16 %v1713, %v1712
  %v1978 = vpack.c.b16 %v1715, %v1714
  %v1979 = vpack.c.b16 %v1717, %v1716
  %v1980 = vpack.c.b16 %v1719, %v1718
  %v1981 = vpack.c.b16 %v1721, %v1720
  %v1982 = vpack.c.b16 %v1723, %v1722
  %v1983 = vpack.c.b16 %v1725, %v1724
  %v1984 = vpack.c.b16 %v1727, %v1726
  %v1985 = vpack.c.b16 %v1729, %v1728
  %v1986 = vpack.c.b16 %v1731, %v1730
  %v1987 = vpack.c.b16 %v1733, %v1732
  %v1988 = vpack.c.b16 %v1735, %v1734
  %v1989 = vpack.c.b16 %v1737, %v1736
  %v1990 = vpack.c.b16 %v1739, %v1738
  %v1991 = vpack.c.b16 %v1741, %v1740
  %v1992 = vpack.c.b16 %v1743, %v1742
  %v1993 = vpack.c.b16 %v1745, %v1744
  %v1994 = vpack.c.b16 %v1747, %v1746
  %v1995 = vpack.c.b16 %v1749, %v1748
  %v1996 = vpack.c.b16 %v1751, %v1750
  %v1997 = vpack.c.b16 %v1753, %v1752
  %v1998 = vpack.c.b16 %v1755, %v1754
  %v1999 = vpack.c.b16 %v1757, %v1756
  %v2000 = vpack.c.b16 %v1759, %v1758
  %v2001 = vpack.c.b16 %v1761, %v1760
  %v2002 = vpack.c.b16 %v1763, %v1762
  %v2003 = vpack.c.b16 %v1765, %v1764
  %v2004 = vpack.c.b16 %v1767, %v1766
  %v2005 = vpack.c.b16 %v1769, %v1768
  %v2006 = vpack.c.b16 %v1771, %v1770
  %v2007 = vpack.c.b16 %v1773, %v1772
  %v2008 = vpack.c.b16 %v1775, %v1774
  %v2009 = vpack.c.b16 %v1777, %v1776
  %v2010 = vpack.c.b16 %v1779, %v1778
  %v2011 = vpack.c.b16 %v1781, %v1780
  %v2012 = vpack.c.b16 %v1783, %v1782
  %v2013 = vpack.c.b16 %v1785, %v1784
  %v2014 = vpack.c.b16 %v1787, %v1786
  %v2015 = vpack.c.b16 %v1789, %v1788
  %v2016 = vpack.c.b16 %v1791, %v1790
  %v2017 = vpack.c.b16 %v1793, %v1792
  %v2018 = vpack.c.b16 %v1795, %v1794
  %v2019 = vpack.c.b16 %v1797, %v1796
  %v2020 = vpack.c.b16 %v1799, %v1798
  %v2021 = vpack.c.b16 %v1801, %v1800
  %v2022 = vpack.c.b16 %v1803, %v1802
  %v2023 = vpack.c.b16 %v1805, %v1804
  %v2024 = vpack.c.b16 %v1807, %v1806
  %v2025 = vpack.c.b16 %v1809, %v1808
  %v2026 = vpack.c.b16 %v1811, %v1810
  %v2027 = vpack.c.b16 %v1813, %v1812
  %v2028 = vpack.c.b16 %v1815, %v1814
  %v2029 = vpack.c.b16 %v1817, %v1816
  %v2030 = vpack.c.b16 %v1819, %v1818
  %v2031 = vpack.c.b16 %v1821, %v1820
  %v2032 = vpack.c.b16 %v1823, %v1822
  %v2033 = vpack.c.b16 %v1825, %v1824
  %v2034 = vpack.c.b16 %v1827, %v1826
  %v2035 = vpack.c.b16 %v1829, %v1828
  %v2036 = vpack.c.b16 %v1831, %v1830
  %v2037 = vpack.c.b16 %v1833, %v1832
  %v2038 = vpack.c.b16 %v1835, %v1834
  %v2039 = vpack.c.b16 %v1837, %v1836
  %v2040 = vpack.c.b16 %v1839, %v1838
  %v2041 = vpack.c.b16 %v1841, %v1840
  %2242 = vmatprep.subr.bf16.mxu0 0
  %2243 = vmatpush1.bf16.msra.mxu0 %v1842
  %2244 = vmatprep.subr.bf16.mxu0 0
  %2245 = vmatpush1.bf16.msra.mxu0 %v1843
  %2246 = vmatprep.subr.bf16.mxu0 0
  %2247 = vmatpush1.bf16.msra.mxu0 %v1844
  %2248 = vmatprep.subr.bf16.mxu0 0
  %2249 = vmatpush1.bf16.msra.mxu0 %v1845
  %2250 = vmatprep.subr.bf16.mxu0 0
  %2251 = vmatpush1.bf16.msra.mxu0 %v1846
  %2252 = vmatprep.subr.bf16.mxu0 0
  %2253 = vmatpush1.bf16.msra.mxu0 %v1847
  %2254 = vmatprep.subr.bf16.mxu0 0
  %2255 = vmatpush1.bf16.msra.mxu0 %v1848
  %2256 = vmatprep.subr.bf16.mxu0 0
  %2257 = vmatpush1.bf16.msra.mxu0 %v1849
  %2258 = vmatprep.subr.bf16.mxu0 0
  %2259 = vmatpush1.bf16.msra.mxu0 %v1850
  %2260 = vmatprep.subr.bf16.mxu0 0
  %2261 = vmatpush1.bf16.msra.mxu0 %v1851
  %2262 = vmatprep.subr.bf16.mxu0 0
  %2263 = vmatpush1.bf16.msra.mxu0 %v1852
  %2264 = vmatprep.subr.bf16.mxu0 0
  %2265 = vmatpush1.bf16.msra.mxu0 %v1853
  %2266 = vmatprep.subr.bf16.mxu0 0
  %2267 = vmatpush1.bf16.msra.mxu0 %v1854
  %2268 = vmatprep.subr.bf16.mxu0 0
  %2269 = vmatpush1.bf16.msra.mxu0 %v1855
  %2270 = vmatprep.subr.bf16.mxu0 0
  %2271 = vmatpush1.bf16.msra.mxu0 %v1856
  %2272 = vmatprep.subr.bf16.mxu0 0
  %2273 = vmatpush1.bf16.msra.mxu0 %v1857
  %2274 = vmatprep.mubr.bf16.mxu0 %v843
  %2275 = vmatmul.mubr.bf16.gmra.mrb[0].mxu0 %v842
  %v2276 = vpop.f32.mrb[0].mxu0
  %v2277 = vadd.f32 %v536, %v2276
  %v2278 = vpop.f32.mrb[0].mxu0
  %v2279 = vpop.f32.mrb[0].mxu0
  %v2280 = vadd.f32 %v536, %v2279
  %v2281 = vpop.f32.mrb[0].mxu0
  %2282 = vmatprep.mubr.bf16.mxu0 %v868
  %2283 = vmatmul.mubr.bf16.gmra.mrb[0].mxu0 %v867
  %v2284 = vpop.f32.mrb[0].mxu0
  %v2285 = vadd.f32 %v536, %v2284
  %v2286 = vpop.f32.mrb[0].mxu0
  %v2287 = vpop.f32.mrb[0].mxu0
  %v2288 = vadd.f32 %v536, %v2287
  %v2289 = vpop.f32.mrb[0].mxu0
  %2290 = vmatprep.mubr.bf16.mxu0 %v893
  %2291 = vmatmul.mubr.bf16.gmra.mrb[0].mxu0 %v892
  %v2292 = vpop.f32.mrb[0].mxu0
  %v2293 = vadd.f32 %v536, %v2292
  %v2294 = vpop.f32.mrb[0].mxu0
  %v2295 = vpop.f32.mrb[0].mxu0
  %v2296 = vadd.f32 %v536, %v2295
  %v2297 = vpop.f32.mrb[0].mxu0
  %2298 = vmatprep.mubr.bf16.mxu0 %v918
  %2299 = vmatmul.mubr.bf16.gmra.mrb[0].mxu0 %v917
  %v2300 = vpop.f32.mrb[0].mxu0
  %v2301 = vadd.f32 %v536, %v2300
  %v2302 = vpop.f32.mrb[0].mxu0
  %v2303 = vpop.f32.mrb[0].mxu0
  %v2304 = vadd.f32 %v536, %v2303
  %v2305 = vpop.f32.mrb[0].mxu0
  %2306 = vdwg.mxu0
  %2307 = vmatprep.subr.bf16.mxu0 0
  %2308 = vmatpush1.bf16.msra.mxu0 %v1858
  %2309 = vmatprep.subr.bf16.mxu0 0
  %2310 = vmatpush1.bf16.msra.mxu0 %v1859
  %2311 = vmatprep.subr.bf16.mxu0 0
  %2312 = vmatpush1.bf16.msra.mxu0 %v1860
  %2313 = vmatprep.subr.bf16.mxu0 0
  %2314 = vmatpush1.bf16.msra.mxu0 %v1861
  %2315 = vmatprep.subr.bf16.mxu0 0
  %2316 = vmatpush1.bf16.msra.mxu0 %v1862
  %2317 = vmatprep.subr.bf16.mxu0 0
  %2318 = vmatpush1.bf16.msra.mxu0 %v1863
  %2319 = vmatprep.subr.bf16.mxu0 0
  %2320 = vmatpush1.bf16.msra.mxu0 %v1864
  %2321 = vmatprep.subr.bf16.mxu0 0
  %2322 = vmatpush1.bf16.msra.mxu0 %v1865
  %2323 = vmatprep.subr.bf16.mxu0 0
  %2324 = vmatpush1.bf16.msra.mxu0 %v1866
  %2325 = vmatprep.subr.bf16.mxu0 0
  %2326 = vmatpush1.bf16.msra.mxu0 %v1867
  %2327 = vmatprep.subr.bf16.mxu0 0
  %2328 = vmatpush1.bf16.msra.mxu0 %v1868
  %2329 = vmatprep.subr.bf16.mxu0 0
  %2330 = vmatpush1.bf16.msra.mxu0 %v1869
  %2331 = vmatprep.subr.bf16.mxu0 0
  %2332 = vmatpush1.bf16.msra.mxu0 %v1870
  %2333 = vmatprep.subr.bf16.mxu0 0
  %2334 = vmatpush1.bf16.msra.mxu0 %v1871
  %2335 = vmatprep.subr.bf16.mxu0 0
  %2336 = vmatpush1.bf16.msra.mxu0 %v1872
  %2337 = vmatprep.subr.bf16.mxu0 0
  %2338 = vmatpush1.bf16.msra.mxu0 %v1873
  %2339 = vmatprep.mubr.bf16.mxu0 %v845
  %2340 = vmatmul.mubr.bf16.gmra.mrb[0].mxu0 %v844
  %v2341 = vpop.f32.mrb[0].mxu0
  %v2342 = vadd.f32 %v2277, %v2341
  %v2343 = vpop.f32.mrb[0].mxu0
  %v2344 = vpop.f32.mrb[0].mxu0
  %v2345 = vadd.f32 %v2280, %v2344
  %v2346 = vpop.f32.mrb[0].mxu0
  %2347 = vmatprep.mubr.bf16.mxu0 %v870
  %2348 = vmatmul.mubr.bf16.gmra.mrb[0].mxu0 %v869
  %v2349 = vpop.f32.mrb[0].mxu0
  %v2350 = vadd.f32 %v2285, %v2349
  %v2351 = vpop.f32.mrb[0].mxu0
  %v2352 = vpop.f32.mrb[0].mxu0
  %v2353 = vadd.f32 %v2288, %v2352
  %v2354 = vpop.f32.mrb[0].mxu0
  %2355 = vmatprep.mubr.bf16.mxu0 %v895
  %2356 = vmatmul.mubr.bf16.gmra.mrb[0].mxu0 %v894
  %v2357 = vpop.f32.mrb[0].mxu0
  %v2358 = vadd.f32 %v2293, %v2357
  %v2359 = vpop.f32.mrb[0].mxu0
  %v2360 = vpop.f32.mrb[0].mxu0
  %v2361 = vadd.f32 %v2296, %v2360
  %v2362 = vpop.f32.mrb[0].mxu0
  %2363 = vmatprep.mubr.bf16.mxu0 %v920
  %2364 = vmatmul.mubr.bf16.gmra.mrb[0].mxu0 %v919
  %v2365 = vpop.f32.mrb[0].mxu0
  %v2366 = vadd.f32 %v2301, %v2365
  %v2367 = vpop.f32.mrb[0].mxu0
  %v2368 = vpop.f32.mrb[0].mxu0
  %v2369 = vadd.f32 %v2304, %v2368
  %v2370 = vpop.f32.mrb[0].mxu0
  %2371 = vdwg.mxu0
  %2372 = vmatprep.subr.bf16.mxu0 0
  %2373 = vmatpush1.bf16.msra.mxu0 %v1874
  %2374 = vmatprep.subr.bf16.mxu0 0
  %2375 = vmatpush1.bf16.msra.mxu0 %v1875
  %2376 = vmatprep.subr.bf16.mxu0 0
  %2377 = vmatpush1.bf16.msra.mxu0 %v1876
  %2378 = vmatprep.subr.bf16.mxu0 0
  %2379 = vmatpush1.bf16.msra.mxu0 %v1877
  %2380 = vmatprep.subr.bf16.mxu0 0
  %2381 = vmatpush1.bf16.msra.mxu0 %v1878
  %2382 = vmatprep.subr.bf16.mxu0 0
  %2383 = vmatpush1.bf16.msra.mxu0 %v1879
  %2384 = vmatprep.subr.bf16.mxu0 0
  %2385 = vmatpush1.bf16.msra.mxu0 %v1880
  %2386 = vmatprep.subr.bf16.mxu0 0
  %2387 = vmatpush1.bf16.msra.mxu0 %v1881
  %2388 = vmatprep.subr.bf16.mxu0 0
  %2389 = vmatpush1.bf16.msra.mxu0 %v1882
  %2390 = vmatprep.subr.bf16.mxu0 0
  %2391 = vmatpush1.bf16.msra.mxu0 %v1883
  %2392 = vmatprep.subr.bf16.mxu0 0
  %2393 = vmatpush1.bf16.msra.mxu0 %v1884
  %2394 = vmatprep.subr.bf16.mxu0 0
  %2395 = vmatpush1.bf16.msra.mxu0 %v1885
  %2396 = vmatprep.subr.bf16.mxu0 0
  %2397 = vmatpush1.bf16.msra.mxu0 %v1886
  %2398 = vmatprep.subr.bf16.mxu0 0
  %2399 = vmatpush1.bf16.msra.mxu0 %v1887
  %2400 = vmatprep.subr.bf16.mxu0 0
  %2401 = vmatpush1.bf16.msra.mxu0 %v1888
  %2402 = vmatprep.subr.bf16.mxu0 0
  %2403 = vmatpush1.bf16.msra.mxu0 %v1889
  %2404 = vmatprep.mubr.bf16.mxu0 %v847
  %2405 = vmatmul.mubr.bf16.gmra.mrb[0].mxu0 %v846
  %v2406 = vpop.f32.mrb[0].mxu0
  %v2407 = vadd.f32 %v2342, %v2406
  %v2408 = vpop.f32.mrb[0].mxu0
  %v2409 = vpop.f32.mrb[0].mxu0
  %v2410 = vadd.f32 %v2345, %v2409
  %v2411 = vpop.f32.mrb[0].mxu0
  %2412 = vmatprep.mubr.bf16.mxu0 %v872
  %2413 = vmatmul.mubr.bf16.gmra.mrb[0].mxu0 %v871
  %v2414 = vpop.f32.mrb[0].mxu0
  %v2415 = vadd.f32 %v2350, %v2414
  %v2416 = vpop.f32.mrb[0].mxu0
  %v2417 = vpop.f32.mrb[0].mxu0
  %v2418 = vadd.f32 %v2353, %v2417
  %v2419 = vpop.f32.mrb[0].mxu0
  %2420 = vmatprep.mubr.bf16.mxu0 %v897
  %2421 = vmatmul.mubr.bf16.gmra.mrb[0].mxu0 %v896
  %v2422 = vpop.f32.mrb[0].mxu0
  %v2423 = vadd.f32 %v2358, %v2422
  %v2424 = vpop.f32.mrb[0].mxu0
  %v2425 = vpop.f32.mrb[0].mxu0
  %v2426 = vadd.f32 %v2361, %v2425
  %v2427 = vpop.f32.mrb[0].mxu0
  %2428 = vmatprep.mubr.bf16.mxu0 %v922
  %2429 = vmatmul.mubr.bf16.gmra.mrb[0].mxu0 %v921
  %v2430 = vpop.f32.mrb[0].mxu0
  %v2431 = vadd.f32 %v2366, %v2430
  %v2432 = vpop.f32.mrb[0].mxu0
  %v2433 = vpop.f32.mrb[0].mxu0
  %v2434 = vadd.f32 %v2369, %v2433
  %v2435 = vpop.f32.mrb[0].mxu0
  %2436 = vdwg.mxu0
  %2437 = vmatprep.subr.bf16.mxu0 0
  %2438 = vmatpush1.bf16.msra.mxu0 %v1890
  %2439 = vmatprep.subr.bf16.mxu0 0
  %2440 = vmatpush1.bf16.msra.mxu0 %v1891
  %2441 = vmatprep.subr.bf16.mxu0 0
  %2442 = vmatpush1.bf16.msra.mxu0 %v1892
  %2443 = vmatprep.subr.bf16.mxu0 0
  %2444 = vmatpush1.bf16.msra.mxu0 %v1893
  %2445 = vmatprep.subr.bf16.mxu0 0
  %2446 = vmatpush1.bf16.msra.mxu0 %v1894
  %2447 = vmatprep.subr.bf16.mxu0 0
  %2448 = vmatpush1.bf16.msra.mxu0 %v1895
  %2449 = vmatprep.subr.bf16.mxu0 0
  %2450 = vmatpush1.bf16.msra.mxu0 %v1896
  %2451 = vmatprep.subr.bf16.mxu0 0
  %2452 = vmatpush1.bf16.msra.mxu0 %v1897
  %2453 = vmatprep.subr.bf16.mxu0 0
  %2454 = vmatpush1.bf16.msra.mxu0 %v1898
  %2455 = vmatprep.subr.bf16.mxu0 0
  %2456 = vmatpush1.bf16.msra.mxu0 %v1899
  %2457 = vmatprep.subr.bf16.mxu0 0
  %2458 = vmatpush1.bf16.msra.mxu0 %v1900
  %2459 = vmatprep.subr.bf16.mxu0 0
  %2460 = vmatpush1.bf16.msra.mxu0 %v1901
  %2461 = vmatprep.subr.bf16.mxu0 0
  %2462 = vmatpush1.bf16.msra.mxu0 %v1902
  %2463 = vmatprep.subr.bf16.mxu0 0
  %2464 = vmatpush1.bf16.msra.mxu0 %v1903
  %2465 = vmatprep.subr.bf16.mxu0 0
  %2466 = vmatpush1.bf16.msra.mxu0 %v1904
  %2467 = vmatprep.subr.bf16.mxu0 0
  %2468 = vmatpush1.bf16.msra.mxu0 %v1905
  %2469 = vmatprep.mubr.bf16.mxu0 %v849
  %2470 = vmatmul.mubr.bf16.gmra.mrb[0].mxu0 %v848
  %v2471 = vpop.f32.mrb[0].mxu0
  %v2472 = vadd.f32 %v2407, %v2471
  %v2473 = vpop.f32.mrb[0].mxu0
  %v2474 = vpop.f32.mrb[0].mxu0
  %v2475 = vadd.f32 %v2410, %v2474
  %v2476 = vpop.f32.mrb[0].mxu0
  %2477 = vmatprep.mubr.bf16.mxu0 %v874
  %2478 = vmatmul.mubr.bf16.gmra.mrb[0].mxu0 %v873
  %v2479 = vpop.f32.mrb[0].mxu0
  %v2480 = vadd.f32 %v2415, %v2479
  %v2481 = vpop.f32.mrb[0].mxu0
  %v2482 = vpop.f32.mrb[0].mxu0
  %v2483 = vadd.f32 %v2418, %v2482
  %v2484 = vpop.f32.mrb[0].mxu0
  %2485 = vmatprep.mubr.bf16.mxu0 %v899
  %2486 = vmatmul.mubr.bf16.gmra.mrb[0].mxu0 %v898
  %v2487 = vpop.f32.mrb[0].mxu0
  %v2488 = vadd.f32 %v2423, %v2487
  %v2489 = vpop.f32.mrb[0].mxu0
  %v2490 = vpop.f32.mrb[0].mxu0
  %v2491 = vadd.f32 %v2426, %v2490
  %v2492 = vpop.f32.mrb[0].mxu0
  %2493 = vmatprep.mubr.bf16.mxu0 %v924
  %2494 = vmatmul.mubr.bf16.gmra.mrb[0].mxu0 %v923
  %v2495 = vpop.f32.mrb[0].mxu0
  %v2496 = vadd.f32 %v2431, %v2495
  %v2497 = vpop.f32.mrb[0].mxu0
  %v2498 = vpop.f32.mrb[0].mxu0
  %v2499 = vadd.f32 %v2434, %v2498
  %v2500 = vpop.f32.mrb[0].mxu0
  %2501 = vdwg.mxu0
  %2502 = vmatprep.subr.bf16.mxu0 0
  %2503 = vmatpush1.bf16.msra.mxu0 %v1906
  %2504 = vmatprep.subr.bf16.mxu0 0
  %2505 = vmatpush1.bf16.msra.mxu0 %v1907
  %2506 = vmatprep.subr.bf16.mxu0 0
  %2507 = vmatpush1.bf16.msra.mxu0 %v1908
  %2508 = vmatprep.subr.bf16.mxu0 0
  %2509 = vmatpush1.bf16.msra.mxu0 %v1909
  %2510 = vmatprep.subr.bf16.mxu0 0
  %2511 = vmatpush1.bf16.msra.mxu0 %v1910
  %2512 = vmatprep.subr.bf16.mxu0 0
  %2513 = vmatpush1.bf16.msra.mxu0 %v1911
  %2514 = vmatprep.subr.bf16.mxu0 0
  %2515 = vmatpush1.bf16.msra.mxu0 %v1912
  %2516 = vmatprep.subr.bf16.mxu0 0
  %2517 = vmatpush1.bf16.msra.mxu0 %v1913
  %2518 = vmatprep.subr.bf16.mxu0 0
  %2519 = vmatpush1.bf16.msra.mxu0 %v1914
  %2520 = vmatprep.subr.bf16.mxu0 0
  %2521 = vmatpush1.bf16.msra.mxu0 %v1915
  %2522 = vmatprep.subr.bf16.mxu0 0
  %2523 = vmatpush1.bf16.msra.mxu0 %v1916
  %2524 = vmatprep.subr.bf16.mxu0 0
  %2525 = vmatpush1.bf16.msra.mxu0 %v1917
  %2526 = vmatprep.subr.bf16.mxu0 0
  %2527 = vmatpush1.bf16.msra.mxu0 %v1918
  %2528 = vmatprep.subr.bf16.mxu0 0
  %2529 = vmatpush1.bf16.msra.mxu0 %v1919
  %2530 = vmatprep.subr.bf16.mxu0 0
  %2531 = vmatpush1.bf16.msra.mxu0 %v1920
  %2532 = vmatprep.subr.bf16.mxu0 0
  %2533 = vmatpush1.bf16.msra.mxu0 %v1921
  %2534 = vmatprep.mubr.bf16.mxu0 %v851
  %2535 = vmatmul.mubr.bf16.gmra.mrb[0].mxu0 %v850
  %v2536 = vpop.f32.mrb[0].mxu0
  %v2537 = vadd.f32 %v2472, %v2536
  %v2538 = vpop.f32.mrb[0].mxu0
  %v2539 = vpop.f32.mrb[0].mxu0
  %v2540 = vadd.f32 %v2475, %v2539
  %v2541 = vpop.f32.mrb[0].mxu0
  %2542 = vmatprep.mubr.bf16.mxu0 %v876
  %2543 = vmatmul.mubr.bf16.gmra.mrb[0].mxu0 %v875
  %v2544 = vpop.f32.mrb[0].mxu0
  %v2545 = vadd.f32 %v2480, %v2544
  %v2546 = vpop.f32.mrb[0].mxu0
  %v2547 = vpop.f32.mrb[0].mxu0
  %v2548 = vadd.f32 %v2483, %v2547
  %v2549 = vpop.f32.mrb[0].mxu0
  %2550 = vmatprep.mubr.bf16.mxu0 %v901
  %2551 = vmatmul.mubr.bf16.gmra.mrb[0].mxu0 %v900
  %v2552 = vpop.f32.mrb[0].mxu0
  %v2553 = vadd.f32 %v2488, %v2552
  %v2554 = vpop.f32.mrb[0].mxu0
  %v2555 = vpop.f32.mrb[0].mxu0
  %v2556 = vadd.f32 %v2491, %v2555
  %v2557 = vpop.f32.mrb[0].mxu0
  %2558 = vmatprep.mubr.bf16.mxu0 %v926
  %2559 = vmatmul.mubr.bf16.gmra.mrb[0].mxu0 %v925
  %v2560 = vpop.f32.mrb[0].mxu0
  %v2561 = vadd.f32 %v2496, %v2560
  %v2562 = vpop.f32.mrb[0].mxu0
  %v2563 = vpop.f32.mrb[0].mxu0
  %v2564 = vadd.f32 %v2499, %v2563
  %v2565 = vpop.f32.mrb[0].mxu0
  %2566 = vdwg.mxu0
  %2567 = vmatprep.subr.bf16.mxu0 0
  %2568 = vmatpush1.bf16.msra.mxu0 %v1922
  %2569 = vmatprep.subr.bf16.mxu0 0
  %2570 = vmatpush1.bf16.msra.mxu0 %v1923
  %2571 = vmatprep.subr.bf16.mxu0 0
  %2572 = vmatpush1.bf16.msra.mxu0 %v1924
  %2573 = vmatprep.subr.bf16.mxu0 0
  %2574 = vmatpush1.bf16.msra.mxu0 %v1925
  %2575 = vmatprep.subr.bf16.mxu0 0
  %2576 = vmatpush1.bf16.msra.mxu0 %v1926
  %2577 = vmatprep.subr.bf16.mxu0 0
  %2578 = vmatpush1.bf16.msra.mxu0 %v1927
  %2579 = vmatprep.subr.bf16.mxu0 0
  %2580 = vmatpush1.bf16.msra.mxu0 %v1928
  %2581 = vmatprep.subr.bf16.mxu0 0
  %2582 = vmatpush1.bf16.msra.mxu0 %v1929
  %2583 = vmatprep.subr.bf16.mxu0 0
  %2584 = vmatpush1.bf16.msra.mxu0 %v1930
  %2585 = vmatprep.subr.bf16.mxu0 0
  %2586 = vmatpush1.bf16.msra.mxu0 %v1931
  %2587 = vmatprep.subr.bf16.mxu0 0
  %2588 = vmatpush1.bf16.msra.mxu0 %v1932
  %2589 = vmatprep.subr.bf16.mxu0 0
  %2590 = vmatpush1.bf16.msra.mxu0 %v1933
  %2591 = vmatprep.subr.bf16.mxu0 0
  %2592 = vmatpush1.bf16.msra.mxu0 %v1934
  %2593 = vmatprep.subr.bf16.mxu0 0
  %2594 = vmatpush1.bf16.msra.mxu0 %v1935
  %2595 = vmatprep.subr.bf16.mxu0 0
  %2596 = vmatpush1.bf16.msra.mxu0 %v1936
  %2597 = vmatprep.subr.bf16.mxu0 0
  %2598 = vmatpush1.bf16.msra.mxu0 %v1937
  %2599 = vmatprep.mubr.bf16.mxu0 %v853
  %2600 = vmatmul.mubr.bf16.gmra.mrb[0].mxu0 %v852
  %v2601 = vpop.f32.mrb[0].mxu0
  %v2602 = vadd.f32 %v2537, %v2601
  %v2603 = vpop.f32.mrb[0].mxu0
  %v2604 = vpop.f32.mrb[0].mxu0
  %v2605 = vadd.f32 %v2540, %v2604
  %v2606 = vpop.f32.mrb[0].mxu0
  %2607 = vmatprep.mubr.bf16.mxu0 %v878
  %2608 = vmatmul.mubr.bf16.gmra.mrb[0].mxu0 %v877
  %v2609 = vpop.f32.mrb[0].mxu0
  %v2610 = vadd.f32 %v2545, %v2609
  %v2611 = vpop.f32.mrb[0].mxu0
  %v2612 = vpop.f32.mrb[0].mxu0
  %v2613 = vadd.f32 %v2548, %v2612
  %v2614 = vpop.f32.mrb[0].mxu0
  %2615 = vmatprep.mubr.bf16.mxu0 %v903
  %2616 = vmatmul.mubr.bf16.gmra.mrb[0].mxu0 %v902
  %v2617 = vpop.f32.mrb[0].mxu0
  %v2618 = vadd.f32 %v2553, %v2617
  %v2619 = vpop.f32.mrb[0].mxu0
  %v2620 = vpop.f32.mrb[0].mxu0
  %v2621 = vadd.f32 %v2556, %v2620
  %v2622 = vpop.f32.mrb[0].mxu0
  %2623 = vmatprep.mubr.bf16.mxu0 %v928
  %2624 = vmatmul.mubr.bf16.gmra.mrb[0].mxu0 %v927
  %v2625 = vpop.f32.mrb[0].mxu0
  %v2626 = vadd.f32 %v2561, %v2625
  %v2627 = vpop.f32.mrb[0].mxu0
  %v2628 = vpop.f32.mrb[0].mxu0
  %v2629 = vadd.f32 %v2564, %v2628
  %v2630 = vpop.f32.mrb[0].mxu0
  %2631 = vdwg.mxu0
  %2632 = vmatprep.subr.bf16.mxu0 0
  %2633 = vmatpush1.bf16.msra.mxu0 %v1938
  %2634 = vmatprep.subr.bf16.mxu0 0
  %2635 = vmatpush1.bf16.msra.mxu0 %v1939
  %2636 = vmatprep.subr.bf16.mxu0 0
  %2637 = vmatpush1.bf16.msra.mxu0 %v1940
  %2638 = vmatprep.subr.bf16.mxu0 0
  %2639 = vmatpush1.bf16.msra.mxu0 %v1941
  %2640 = vmatprep.subr.bf16.mxu0 0
  %2641 = vmatpush1.bf16.msra.mxu0 %v1942
  %2642 = vmatprep.subr.bf16.mxu0 0
  %2643 = vmatpush1.bf16.msra.mxu0 %v1943
  %2644 = vmatprep.subr.bf16.mxu0 0
  %2645 = vmatpush1.bf16.msra.mxu0 %v1944
  %2646 = vmatprep.subr.bf16.mxu0 0
  %2647 = vmatpush1.bf16.msra.mxu0 %v1945
  %2648 = vmatprep.subr.bf16.mxu0 0
  %2649 = vmatpush1.bf16.msra.mxu0 %v1946
  %2650 = vmatprep.subr.bf16.mxu0 0
  %2651 = vmatpush1.bf16.msra.mxu0 %v1947
  %2652 = vmatprep.subr.bf16.mxu0 0
  %2653 = vmatpush1.bf16.msra.mxu0 %v1948
  %2654 = vmatprep.subr.bf16.mxu0 0
  %2655 = vmatpush1.bf16.msra.mxu0 %v1949
  %2656 = vmatprep.subr.bf16.mxu0 0
  %2657 = vmatpush1.bf16.msra.mxu0 %v1950
  %2658 = vmatprep.subr.bf16.mxu0 0
  %2659 = vmatpush1.bf16.msra.mxu0 %v1951
  %2660 = vmatprep.subr.bf16.mxu0 0
  %2661 = vmatpush1.bf16.msra.mxu0 %v1952
  %2662 = vmatprep.subr.bf16.mxu0 0
  %2663 = vmatpush1.bf16.msra.mxu0 %v1953
  %2664 = vmatprep.mubr.bf16.mxu0 %v855
  %2665 = vmatmul.mubr.bf16.gmra.mrb[0].mxu0 %v854
  %v2666 = vpop.f32.mrb[0].mxu0
  %v2667 = vadd.f32 %v2602, %v2666
  %v2668 = vpop.f32.mrb[0].mxu0
  %v2669 = vpop.f32.mrb[0].mxu0
  %v2670 = vadd.f32 %v2605, %v2669
  %v2671 = vpop.f32.mrb[0].mxu0
  %2672 = vmatprep.mubr.bf16.mxu0 %v880
  %2673 = vmatmul.mubr.bf16.gmra.mrb[0].mxu0 %v879
  %v2674 = vpop.f32.mrb[0].mxu0
  %v2675 = vadd.f32 %v2610, %v2674
  %v2676 = vpop.f32.mrb[0].mxu0
  %v2677 = vpop.f32.mrb[0].mxu0
  %v2678 = vadd.f32 %v2613, %v2677
  %v2679 = vpop.f32.mrb[0].mxu0
  %2680 = vmatprep.mubr.bf16.mxu0 %v905
  %2681 = vmatmul.mubr.bf16.gmra.mrb[0].mxu0 %v904
  %v2682 = vpop.f32.mrb[0].mxu0
  %v2683 = vadd.f32 %v2618, %v2682
  %v2684 = vpop.f32.mrb[0].mxu0
  %v2685 = vpop.f32.mrb[0].mxu0
  %v2686 = vadd.f32 %v2621, %v2685
  %v2687 = vpop.f32.mrb[0].mxu0
  %2688 = vmatprep.mubr.bf16.mxu0 %v930
  %2689 = vmatmul.mubr.bf16.gmra.mrb[0].mxu0 %v929
  %v2690 = vpop.f32.mrb[0].mxu0
  %v2691 = vadd.f32 %v2626, %v2690
  %v2692 = vpop.f32.mrb[0].mxu0
  %v2693 = vpop.f32.mrb[0].mxu0
  %v2694 = vadd.f32 %v2629, %v2693
  %v2695 = vpop.f32.mrb[0].mxu0
  %2696 = vdwg.mxu0
  %2697 = vmatprep.subr.bf16.mxu0 0
  %2698 = vmatpush1.bf16.msra.mxu0 %v1954
  %2699 = vmatprep.subr.bf16.mxu0 0
  %2700 = vmatpush1.bf16.msra.mxu0 %v1955
  %2701 = vmatprep.subr.bf16.mxu0 0
  %2702 = vmatpush1.bf16.msra.mxu0 %v1956
  %2703 = vmatprep.subr.bf16.mxu0 0
  %2704 = vmatpush1.bf16.msra.mxu0 %v1957
  %2705 = vmatprep.subr.bf16.mxu0 0
  %2706 = vmatpush1.bf16.msra.mxu0 %v1958
  %2707 = vmatprep.subr.bf16.mxu0 0
  %2708 = vmatpush1.bf16.msra.mxu0 %v1959
  %2709 = vmatprep.subr.bf16.mxu0 0
  %2710 = vmatpush1.bf16.msra.mxu0 %v1960
  %2711 = vmatprep.subr.bf16.mxu0 0
  %2712 = vmatpush1.bf16.msra.mxu0 %v1961
  %2713 = vmatprep.subr.bf16.mxu0 0
  %2714 = vmatpush1.bf16.msra.mxu0 %v1962
  %2715 = vmatprep.subr.bf16.mxu0 0
  %2716 = vmatpush1.bf16.msra.mxu0 %v1963
  %2717 = vmatprep.subr.bf16.mxu0 0
  %2718 = vmatpush1.bf16.msra.mxu0 %v1964
  %2719 = vmatprep.subr.bf16.mxu0 0
  %2720 = vmatpush1.bf16.msra.mxu0 %v1965
  %2721 = vmatprep.subr.bf16.mxu0 0
  %2722 = vmatpush1.bf16.msra.mxu0 %v1966
  %2723 = vmatprep.subr.bf16.mxu0 0
  %2724 = vmatpush1.bf16.msra.mxu0 %v1967
  %2725 = vmatprep.subr.bf16.mxu0 0
  %2726 = vmatpush1.bf16.msra.mxu0 %v1968
  %2727 = vmatprep.subr.bf16.mxu0 0
  %2728 = vmatpush1.bf16.msra.mxu0 %v1969
  %2729 = vmatprep.mubr.bf16.mxu0 %v857
  %2730 = vmatmul.mubr.bf16.gmra.mrb[0].mxu0 %v856
  %v2731 = vpop.f32.mrb[0].mxu0
  %v2732 = vadd.f32 %v2667, %v2731
  %v2733 = vpop.f32.mrb[0].mxu0
  %v2734 = vpop.f32.mrb[0].mxu0
  %v2735 = vadd.f32 %v2670, %v2734
  %v2736 = vpop.f32.mrb[0].mxu0
  %2737 = vmatprep.mubr.bf16.mxu0 %v882
  %2738 = vmatmul.mubr.bf16.gmra.mrb[0].mxu0 %v881
  %v2739 = vpop.f32.mrb[0].mxu0
  %v2740 = vadd.f32 %v2675, %v2739
  %v2741 = vpop.f32.mrb[0].mxu0
  %v2742 = vpop.f32.mrb[0].mxu0
  %v2743 = vadd.f32 %v2678, %v2742
  %v2744 = vpop.f32.mrb[0].mxu0
  %2745 = vmatprep.mubr.bf16.mxu0 %v907
  %2746 = vmatmul.mubr.bf16.gmra.mrb[0].mxu0 %v906
  %v2747 = vpop.f32.mrb[0].mxu0
  %v2748 = vadd.f32 %v2683, %v2747
  %v2749 = vpop.f32.mrb[0].mxu0
  %v2750 = vpop.f32.mrb[0].mxu0
  %v2751 = vadd.f32 %v2686, %v2750
  %v2752 = vpop.f32.mrb[0].mxu0
  %2753 = vmatprep.mubr.bf16.mxu0 %v932
  %2754 = vmatmul.mubr.bf16.gmra.mrb[0].mxu0 %v931
  %v2755 = vpop.f32.mrb[0].mxu0
  %v2756 = vadd.f32 %v2691, %v2755
  %v2757 = vpop.f32.mrb[0].mxu0
  %v2758 = vpop.f32.mrb[0].mxu0
  %v2759 = vadd.f32 %v2694, %v2758
  %v2760 = vpop.f32.mrb[0].mxu0
  %2761 = vdwg.mxu0
  %2762 = vmatprep.subr.bf16.mxu0 0
  %2763 = vmatpush1.bf16.msra.mxu0 %v1970
  %2764 = vmatprep.subr.bf16.mxu0 0
  %2765 = vmatpush1.bf16.msra.mxu0 %v1971
  %2766 = vmatprep.subr.bf16.mxu0 0
  %2767 = vmatpush1.bf16.msra.mxu0 %v1972
  %2768 = vmatprep.subr.bf16.mxu0 0
  %2769 = vmatpush1.bf16.msra.mxu0 %v1973
  %2770 = vmatprep.subr.bf16.mxu0 0
  %2771 = vmatpush1.bf16.msra.mxu0 %v1974
  %2772 = vmatprep.subr.bf16.mxu0 0
  %2773 = vmatpush1.bf16.msra.mxu0 %v1975
  %2774 = vmatprep.subr.bf16.mxu0 0
  %2775 = vmatpush1.bf16.msra.mxu0 %v1976
  %2776 = vmatprep.subr.bf16.mxu0 0
  %2777 = vmatpush1.bf16.msra.mxu0 %v1977
  %2778 = vmatprep.subr.bf16.mxu0 0
  %2779 = vmatpush1.bf16.msra.mxu0 %v1978
  %2780 = vmatprep.subr.bf16.mxu0 0
  %2781 = vmatpush1.bf16.msra.mxu0 %v1979
  %2782 = vmatprep.subr.bf16.mxu0 0
  %2783 = vmatpush1.bf16.msra.mxu0 %v1980
  %2784 = vmatprep.subr.bf16.mxu0 0
  %2785 = vmatpush1.bf16.msra.mxu0 %v1981
  %2786 = vmatprep.subr.bf16.mxu0 0
  %2787 = vmatpush1.bf16.msra.mxu0 %v1982
  %2788 = vmatprep.subr.bf16.mxu0 0
  %2789 = vmatpush1.bf16.msra.mxu0 %v1983
  %2790 = vmatprep.subr.bf16.mxu0 0
  %2791 = vmatpush1.bf16.msra.mxu0 %v1984
  %2792 = vmatprep.subr.bf16.mxu0 0
  %2793 = vmatpush1.bf16.msra.mxu0 %v1985
  %2794 = vmatprep.mubr.bf16.mxu0 %v859
  %2795 = vmatmul.mubr.bf16.gmra.mrb[0].mxu0 %v858
  %v2796 = vpop.f32.mrb[0].mxu0
  %v2797 = vadd.f32 %v2732, %v2796
  %v2798 = vpop.f32.mrb[0].mxu0
  %v2799 = vpop.f32.mrb[0].mxu0
  %v2800 = vadd.f32 %v2735, %v2799
  %v2801 = vpop.f32.mrb[0].mxu0
  %2802 = vmatprep.mubr.bf16.mxu0 %v884
  %2803 = vmatmul.mubr.bf16.gmra.mrb[0].mxu0 %v883
  %v2804 = vpop.f32.mrb[0].mxu0
  %v2805 = vadd.f32 %v2740, %v2804
  %v2806 = vpop.f32.mrb[0].mxu0
  %v2807 = vpop.f32.mrb[0].mxu0
  %v2808 = vadd.f32 %v2743, %v2807
  %v2809 = vpop.f32.mrb[0].mxu0
  %2810 = vmatprep.mubr.bf16.mxu0 %v909
  %2811 = vmatmul.mubr.bf16.gmra.mrb[0].mxu0 %v908
  %v2812 = vpop.f32.mrb[0].mxu0
  %v2813 = vadd.f32 %v2748, %v2812
  %v2814 = vpop.f32.mrb[0].mxu0
  %v2815 = vpop.f32.mrb[0].mxu0
  %v2816 = vadd.f32 %v2751, %v2815
  %v2817 = vpop.f32.mrb[0].mxu0
  %2818 = vmatprep.mubr.bf16.mxu0 %v934
  %2819 = vmatmul.mubr.bf16.gmra.mrb[0].mxu0 %v933
  %v2820 = vpop.f32.mrb[0].mxu0
  %v2821 = vadd.f32 %v2756, %v2820
  %v2822 = vpop.f32.mrb[0].mxu0
  %v2823 = vpop.f32.mrb[0].mxu0
  %v2824 = vadd.f32 %v2759, %v2823
  %v2825 = vpop.f32.mrb[0].mxu0
  %2826 = vdwg.mxu0
  %2827 = vmatprep.subr.bf16.mxu0 0
  %2828 = vmatpush1.bf16.msra.mxu0 %v1986
  %2829 = vmatprep.subr.bf16.mxu0 0
  %2830 = vmatpush1.bf16.msra.mxu0 %v1987
  %2831 = vmatprep.subr.bf16.mxu0 0
  %2832 = vmatpush1.bf16.msra.mxu0 %v1988
  %2833 = vmatprep.subr.bf16.mxu0 0
  %2834 = vmatpush1.bf16.msra.mxu0 %v1989
  %2835 = vmatprep.subr.bf16.mxu0 0
  %2836 = vmatpush1.bf16.msra.mxu0 %v1990
  %2837 = vmatprep.subr.bf16.mxu0 0
  %2838 = vmatpush1.bf16.msra.mxu0 %v1991
  %2839 = vmatprep.subr.bf16.mxu0 0
  %2840 = vmatpush1.bf16.msra.mxu0 %v1992
  %2841 = vmatprep.subr.bf16.mxu0 0
  %2842 = vmatpush1.bf16.msra.mxu0 %v1993
  %2843 = vmatprep.subr.bf16.mxu0 0
  %2844 = vmatpush1.bf16.msra.mxu0 %v1994
  %2845 = vmatprep.subr.bf16.mxu0 0
  %2846 = vmatpush1.bf16.msra.mxu0 %v1995
  %2847 = vmatprep.subr.bf16.mxu0 0
  %2848 = vmatpush1.bf16.msra.mxu0 %v1996
  %2849 = vmatprep.subr.bf16.mxu0 0
  %2850 = vmatpush1.bf16.msra.mxu0 %v1997
  %2851 = vmatprep.subr.bf16.mxu0 0
  %2852 = vmatpush1.bf16.msra.mxu0 %v1998
  %2853 = vmatprep.subr.bf16.mxu0 0
  %2854 = vmatpush1.bf16.msra.mxu0 %v1999
  %2855 = vmatprep.subr.bf16.mxu0 0
  %2856 = vmatpush1.bf16.msra.mxu0 %v2000
  %2857 = vmatprep.subr.bf16.mxu0 0
  %2858 = vmatpush1.bf16.msra.mxu0 %v2001
  %2859 = vmatprep.mubr.bf16.mxu0 %v861
  %2860 = vmatmul.mubr.bf16.gmra.mrb[0].mxu0 %v860
  %v2861 = vpop.f32.mrb[0].mxu0
  %v2862 = vadd.f32 %v2797, %v2861
  %v2863 = vpop.f32.mrb[0].mxu0
  %v2864 = vpop.f32.mrb[0].mxu0
  %v2865 = vadd.f32 %v2800, %v2864
  %v2866 = vpop.f32.mrb[0].mxu0
  %2867 = vmatprep.mubr.bf16.mxu0 %v886
  %2868 = vmatmul.mubr.bf16.gmra.mrb[0].mxu0 %v885
  %v2869 = vpop.f32.mrb[0].mxu0
  %v2870 = vadd.f32 %v2805, %v2869
  %v2871 = vpop.f32.mrb[0].mxu0
  %v2872 = vpop.f32.mrb[0].mxu0
  %v2873 = vadd.f32 %v2808, %v2872
  %v2874 = vpop.f32.mrb[0].mxu0
  %2875 = vmatprep.mubr.bf16.mxu0 %v911
  %2876 = vmatmul.mubr.bf16.gmra.mrb[0].mxu0 %v910
  %v2877 = vpop.f32.mrb[0].mxu0
  %v2878 = vadd.f32 %v2813, %v2877
  %v2879 = vpop.f32.mrb[0].mxu0
  %v2880 = vpop.f32.mrb[0].mxu0
  %v2881 = vadd.f32 %v2816, %v2880
  %v2882 = vpop.f32.mrb[0].mxu0
  %2883 = vmatprep.mubr.bf16.mxu0 %v936
  %2884 = vmatmul.mubr.bf16.gmra.mrb[0].mxu0 %v935
  %v2885 = vpop.f32.mrb[0].mxu0
  %v2886 = vadd.f32 %v2821, %v2885
  %v2887 = vpop.f32.mrb[0].mxu0
  %v2888 = vpop.f32.mrb[0].mxu0
  %v2889 = vadd.f32 %v2824, %v2888
  %v2890 = vpop.f32.mrb[0].mxu0
  %2891 = vdwg.mxu0
  %2892 = vmatprep.subr.bf16.mxu0 0
  %2893 = vmatpush1.bf16.msra.mxu0 %v2002
  %2894 = vmatprep.subr.bf16.mxu0 0
  %2895 = vmatpush1.bf16.msra.mxu0 %v2003
  %2896 = vmatprep.subr.bf16.mxu0 0
  %2897 = vmatpush1.bf16.msra.mxu0 %v2004
  %2898 = vmatprep.subr.bf16.mxu0 0
  %2899 = vmatpush1.bf16.msra.mxu0 %v2005
  %2900 = vmatprep.subr.bf16.mxu0 0
  %2901 = vmatpush1.bf16.msra.mxu0 %v2006
  %2902 = vmatprep.subr.bf16.mxu0 0
  %2903 = vmatpush1.bf16.msra.mxu0 %v2007
  %2904 = vmatprep.subr.bf16.mxu0 0
  %2905 = vmatpush1.bf16.msra.mxu0 %v2008
  %2906 = vmatprep.subr.bf16.mxu0 0
  %2907 = vmatpush1.bf16.msra.mxu0 %v2009
  %2908 = vmatprep.subr.bf16.mxu0 0
  %2909 = vmatpush1.bf16.msra.mxu0 %v2010
  %2910 = vmatprep.subr.bf16.mxu0 0
  %2911 = vmatpush1.bf16.msra.mxu0 %v2011
  %2912 = vmatprep.subr.bf16.mxu0 0
  %2913 = vmatpush1.bf16.msra.mxu0 %v2012
  %2914 = vmatprep.subr.bf16.mxu0 0
  %2915 = vmatpush1.bf16.msra.mxu0 %v2013
  %2916 = vmatprep.subr.bf16.mxu0 0
  %2917 = vmatpush1.bf16.msra.mxu0 %v2014
  %2918 = vmatprep.subr.bf16.mxu0 0
  %2919 = vmatpush1.bf16.msra.mxu0 %v2015
  %2920 = vmatprep.subr.bf16.mxu0 0
  %2921 = vmatpush1.bf16.msra.mxu0 %v2016
  %2922 = vmatprep.subr.bf16.mxu0 0
  %2923 = vmatpush1.bf16.msra.mxu0 %v2017
  %2924 = vmatprep.mubr.bf16.mxu0 %v863
  %2925 = vmatmul.mubr.bf16.gmra.mrb[0].mxu0 %v862
  %v2926 = vpop.f32.mrb[0].mxu0
  %v2927 = vadd.f32 %v2862, %v2926
  %v2928 = vpop.f32.mrb[0].mxu0
  %v2929 = vpop.f32.mrb[0].mxu0
  %v2930 = vadd.f32 %v2865, %v2929
  %v2931 = vpop.f32.mrb[0].mxu0
  %2932 = vmatprep.mubr.bf16.mxu0 %v888
  %2933 = vmatmul.mubr.bf16.gmra.mrb[0].mxu0 %v887
  %v2934 = vpop.f32.mrb[0].mxu0
  %v2935 = vadd.f32 %v2870, %v2934
  %v2936 = vpop.f32.mrb[0].mxu0
  %v2937 = vpop.f32.mrb[0].mxu0
  %v2938 = vadd.f32 %v2873, %v2937
  %v2939 = vpop.f32.mrb[0].mxu0
  %2940 = vmatprep.mubr.bf16.mxu0 %v913
  %2941 = vmatmul.mubr.bf16.gmra.mrb[0].mxu0 %v912
  %v2942 = vpop.f32.mrb[0].mxu0
  %v2943 = vadd.f32 %v2878, %v2942
  %v2944 = vpop.f32.mrb[0].mxu0
  %v2945 = vpop.f32.mrb[0].mxu0
  %v2946 = vadd.f32 %v2881, %v2945
  %v2947 = vpop.f32.mrb[0].mxu0
  %2948 = vmatprep.mubr.bf16.mxu0 %v938
  %2949 = vmatmul.mubr.bf16.gmra.mrb[0].mxu0 %v937
  %v2950 = vpop.f32.mrb[0].mxu0
  %v2951 = vadd.f32 %v2886, %v2950
  %v2952 = vpop.f32.mrb[0].mxu0
  %v2953 = vpop.f32.mrb[0].mxu0
  %v2954 = vadd.f32 %v2889, %v2953
  %v2955 = vpop.f32.mrb[0].mxu0
  %2956 = vdwg.mxu0
  %2957 = vmatprep.subr.bf16.mxu0 0
  %2958 = vmatpush1.bf16.msra.mxu0 %v2018
  %2959 = vmatprep.subr.bf16.mxu0 0
  %2960 = vmatpush1.bf16.msra.mxu0 %v2019
  %2961 = vmatprep.subr.bf16.mxu0 0
  %2962 = vmatpush1.bf16.msra.mxu0 %v2020
  %2963 = vmatprep.subr.bf16.mxu0 0
  %2964 = vmatpush1.bf16.msra.mxu0 %v2021
  %2965 = vmatprep.subr.bf16.mxu0 0
  %2966 = vmatpush1.bf16.msra.mxu0 %v2022
  %2967 = vmatprep.subr.bf16.mxu0 0
  %2968 = vmatpush1.bf16.msra.mxu0 %v2023
  %2969 = vmatprep.subr.bf16.mxu0 0
  %2970 = vmatpush1.bf16.msra.mxu0 %v2024
  %2971 = vmatprep.subr.bf16.mxu0 0
  %2972 = vmatpush1.bf16.msra.mxu0 %v2025
  %2973 = vmatprep.subr.bf16.mxu0 0
  %2974 = vmatpush1.bf16.msra.mxu0 %v2026
  %2975 = vmatprep.subr.bf16.mxu0 0
  %2976 = vmatpush1.bf16.msra.mxu0 %v2027
  %2977 = vmatprep.subr.bf16.mxu0 0
  %2978 = vmatpush1.bf16.msra.mxu0 %v2028
  %2979 = vmatprep.subr.bf16.mxu0 0
  %2980 = vmatpush1.bf16.msra.mxu0 %v2029
  %2981 = vmatprep.subr.bf16.mxu0 0
  %2982 = vmatpush1.bf16.msra.mxu0 %v2030
  %2983 = vmatprep.subr.bf16.mxu0 0
  %2984 = vmatpush1.bf16.msra.mxu0 %v2031
  %2985 = vmatprep.subr.bf16.mxu0 0
  %2986 = vmatpush1.bf16.msra.mxu0 %v2032
  %2987 = vmatprep.subr.bf16.mxu0 0
  %2988 = vmatpush1.bf16.msra.mxu0 %v2033
  %2989 = vmatprep.mubr.bf16.mxu0 %v865
  %2990 = vmatmul.mubr.bf16.gmra.mrb[0].mxu0 %v864
  %v2991 = vpop.f32.mrb[0].mxu0
  %v2992 = vadd.f32 %v2927, %v2991
  %v2993 = vpop.f32.mrb[0].mxu0
  %v2994 = vpop.f32.mrb[0].mxu0
  %v2995 = vadd.f32 %v2930, %v2994
  %v2996 = vpop.f32.mrb[0].mxu0
  %2997 = vmatprep.mubr.bf16.mxu0 %v890
  %2998 = vmatmul.mubr.bf16.gmra.mrb[0].mxu0 %v889
  %v2999 = vpop.f32.mrb[0].mxu0
  %v3000 = vadd.f32 %v2935, %v2999
  %v3001 = vpop.f32.mrb[0].mxu0
  %v3002 = vpop.f32.mrb[0].mxu0
  %v3003 = vadd.f32 %v2938, %v3002
  %v3004 = vpop.f32.mrb[0].mxu0
  %3005 = vmatprep.mubr.bf16.mxu0 %v915
  %3006 = vmatmul.mubr.bf16.gmra.mrb[0].mxu0 %v914
  %v3007 = vpop.f32.mrb[0].mxu0
  %v3008 = vadd.f32 %v2943, %v3007
  %v3009 = vpop.f32.mrb[0].mxu0
  %v3010 = vpop.f32.mrb[0].mxu0
  %v3011 = vadd.f32 %v2946, %v3010
  %v3012 = vpop.f32.mrb[0].mxu0
  %3013 = vmatprep.mubr.bf16.mxu0 %v940
  %3014 = vmatmul.mubr.bf16.gmra.mrb[0].mxu0 %v939
  %v3015 = vpop.f32.mrb[0].mxu0
  %v3016 = vadd.f32 %v2951, %v3015
  %v3017 = vpop.f32.mrb[0].mxu0
  %v3018 = vpop.f32.mrb[0].mxu0
  %v3019 = vadd.f32 %v2954, %v3018
  %v3020 = vpop.f32.mrb[0].mxu0
  %3021 = vdwg.mxu0
  %3022 = vmatprep.subr.bf16.mxu0 0
  %3023 = vmatpush1.bf16.msra.mxu0 %v2034
  %3024 = vmatprep.subr.bf16.mxu0 0
  %3025 = vmatpush1.bf16.msra.mxu0 %v2035
  %3026 = vmatprep.subr.bf16.mxu0 0
  %3027 = vmatpush1.bf16.msra.mxu0 %v2036
  %3028 = vmatprep.subr.bf16.mxu0 0
  %3029 = vmatpush1.bf16.msra.mxu0 %v2037
  %3030 = vmatprep.subr.bf16.mxu0 0
  %3031 = vmatpush1.bf16.msra.mxu0 %v2038
  %3032 = vmatprep.subr.bf16.mxu0 0
  %3033 = vmatpush1.bf16.msra.mxu0 %v2039
  %3034 = vmatprep.subr.bf16.mxu0 0
  %3035 = vmatpush1.bf16.msra.mxu0 %v2040
  %3036 = vmatprep.subr.bf16.mxu0 0
  %3037 = vmatpush1.bf16.msra.mxu0 %v2041
  %3038 = vmatprep.subr.bf16.mxu0 0
  %3039 = vmatpush1.bf16.msra.mxu0 0
  %3040 = vmatprep.subr.bf16.mxu0 0
  %3041 = vmatpush1.bf16.msra.mxu0 0
  %3042 = vmatprep.subr.bf16.mxu0 0
  %3043 = vmatpush1.bf16.msra.mxu0 0
  %3044 = vmatprep.subr.bf16.mxu0 0
  %3045 = vmatpush1.bf16.msra.mxu0 0
  %3046 = vmatprep.subr.bf16.mxu0 0
  %3047 = vmatpush1.bf16.msra.mxu0 0
  %3048 = vmatprep.subr.bf16.mxu0 0
  %3049 = vmatpush1.bf16.msra.mxu0 0
  %3050 = vmatprep.subr.bf16.mxu0 0
  %3051 = vmatpush1.bf16.msra.mxu0 0
  %3052 = vmatprep.subr.bf16.mxu0 0
  %3053 = vmatpush1.bf16.msra.mxu0 0
  %3054 = vmatprep.mubr.bf16.mxu0 0
  %3055 = vmatmul.mubr.bf16.gmra.mrb[0].mxu0 %v866
  %v3056 = vpop.f32.mrb[0].mxu0
  %v3057 = vadd.f32 %v2992, %v3056
  %v3058 = vpop.f32.mrb[0].mxu0
  %v3059 = vpop.f32.mrb[0].mxu0
  %v3060 = vadd.f32 %v2995, %v3059
  %v3061 = vpop.f32.mrb[0].mxu0
  %3062 = vmatprep.mubr.bf16.mxu0 0
  %3063 = vmatmul.mubr.bf16.gmra.mrb[0].mxu0 %v891
  %v3064 = vpop.f32.mrb[0].mxu0
  %v3065 = vadd.f32 %v3000, %v3064
  %v3066 = vpop.f32.mrb[0].mxu0
  %v3067 = vpop.f32.mrb[0].mxu0
  %v3068 = vadd.f32 %v3003, %v3067
  %v3069 = vpop.f32.mrb[0].mxu0
  %3070 = vmatprep.mubr.bf16.mxu0 0
  %3071 = vmatmul.mubr.bf16.gmra.mrb[0].mxu0 %v916
  %v3072 = vpop.f32.mrb[0].mxu0
  %v3073 = vadd.f32 %v3008, %v3072
  %v3074 = vpop.f32.mrb[0].mxu0
  %v3075 = vpop.f32.mrb[0].mxu0
  %v3076 = vadd.f32 %v3011, %v3075
  %v3077 = vpop.f32.mrb[0].mxu0
  %3078 = vmatprep.mubr.bf16.mxu0 0
  %3079 = vmatmul.mubr.bf16.gmra.mrb[0].mxu0 %v941
  %v3080 = vpop.f32.mrb[0].mxu0
  %v3081 = vadd.f32 %v3016, %v3080
  %v3082 = vpop.f32.mrb[0].mxu0
  %v3083 = vpop.f32.mrb[0].mxu0
  %v3084 = vadd.f32 %v3019, %v3083
  %v3085 = vpop.f32.mrb[0].mxu0
  %3086 = vdwg.mxu0
  %v3087 = vmax.f32 %v3057, 0.0
  %v3088 = vmax.f32 %v3060, 0.0
  %v3089 = vmax.f32 %v3065, 0.0
  %v3090 = vmax.f32 %v3068, 0.0
  %v3091 = vmax.f32 %v3073, 0.0
  %v3092 = vmax.f32 %v3076, 0.0
  %v3093 = vmax.f32 %v3081, 0.0
  %v3094 = vmax.f32 %v3084, 0.0
  %v3095 = vpack.c.bf16 %v3088, %v3087
  %v3096 = vpack.c.bf16 %v3090, %v3089
  %v3097 = vpack.c.bf16 %v3092, %v3091
  %v3098 = vpack.c.bf16 %v3094, %v3093
  %v3099 = vld [vmem:[%s3] sm:$0xf]
  %v3100 = vld [vmem:[%s3 + $0x4] sm:$0xf]
  %v3101 = vld [vmem:[%s3 + $0x8] sm:$0xf]
  %v3102 = vld [vmem:[%s3 + $0xc] sm:$0xf]
  %v3103 = vld [vmem:[%s3 + $0x10] sm:$0xf]
  %v3104 = vld [vmem:[%s3 + $0x14] sm:$0xf]
  %v3105 = vld [vmem:[%s3 + $0x18] sm:$0xf]
  %v3106 = vld [vmem:[%s3 + $0x1c] sm:$0xf]
  %v3107 = vld [vmem:[%s3 + $0x20] sm:$0xf]
  %v3108 = vld [vmem:[%s3 + $0x24] sm:$0xf]
  %v3109 = vld [vmem:[%s3 + $0x28] sm:$0xf]
  %v3110 = vld [vmem:[%s3 + $0x2c] sm:$0xf]
  %v3111 = vld [vmem:[%s3 + $0x30] sm:$0xf]
  %v3112 = vld [vmem:[%s3 + $0x34] sm:$0xf]
  %v3113 = vld [vmem:[%s3 + $0x38] sm:$0xf]
  %v3114 = vld [vmem:[%s3 + $0x3c] sm:$0xf]
  %v3115 = vld [vmem:[%s4] sm:$0x1]
  %v3117 = vlaneseq
  %v3118 = vshrl.u32 %v3117, 7
  %v3119 = vsub.s32 0, %v3118
  %v3120 = vrot.slane %v3115, %v3119
  %v3138 = vunpack.c.l.b16 %v3099
  %v3139 = vunpack.c.l.b16 %v3100
  %v3140 = vunpack.c.l.b16 %v3101
  %v3141 = vunpack.c.l.b16 %v3102
  %v3142 = vunpack.c.l.b16 %v3103
  %v3143 = vunpack.c.l.b16 %v3104
  %v3144 = vunpack.c.l.b16 %v3105
  %v3145 = vunpack.c.l.b16 %v3106
  %v3146 = vunpack.c.l.b16 %v3107
  %v3147 = vunpack.c.l.b16 %v3108
  %v3148 = vunpack.c.l.b16 %v3109
  %v3149 = vunpack.c.l.b16 %v3110
  %v3150 = vunpack.c.l.b16 %v3111
  %v3151 = vunpack.c.l.b16 %v3112
  %v3152 = vunpack.c.l.b16 %v3113
  %v3153 = vunpack.c.l.b16 %v3114
  %v3154 = vpack.c.b16 %v3139, %v3138
  %v3155 = vpack.c.b16 %v3141, %v3140
  %v3156 = vpack.c.b16 %v3143, %v3142
  %v3157 = vpack.c.b16 %v3145, %v3144
  %v3158 = vpack.c.b16 %v3147, %v3146
  %v3159 = vpack.c.b16 %v3149, %v3148
  %v3160 = vpack.c.b16 %v3151, %v3150
  %v3161 = vpack.c.b16 %v3153, %v3152
  %3170 = vmatprep.subr.bf16.mxu0 0
  %3171 = vmatpush1.bf16.msra.mxu0 %v3154
  %3172 = vmatprep.subr.bf16.mxu0 0
  %3173 = vmatpush1.bf16.msra.mxu0 %v3155
  %3174 = vmatprep.subr.bf16.mxu0 0
  %3175 = vmatpush1.bf16.msra.mxu0 %v3156
  %3176 = vmatprep.subr.bf16.mxu0 0
  %3177 = vmatpush1.bf16.msra.mxu0 %v3157
  %3178 = vmatprep.subr.bf16.mxu0 0
  %3179 = vmatpush1.bf16.msra.mxu0 %v3158
  %3180 = vmatprep.subr.bf16.mxu0 0
  %3181 = vmatpush1.bf16.msra.mxu0 %v3159
  %3182 = vmatprep.subr.bf16.mxu0 0
  %3183 = vmatpush1.bf16.msra.mxu0 %v3160
  %3184 = vmatprep.subr.bf16.mxu0 0
  %3185 = vmatpush1.bf16.msra.mxu0 %v3161
  %3186 = vmatprep.subr.bf16.mxu0 0
  %3187 = vmatpush1.bf16.msra.mxu0 0
  %3188 = vmatprep.subr.bf16.mxu0 0
  %3189 = vmatpush1.bf16.msra.mxu0 0
  %3190 = vmatprep.subr.bf16.mxu0 0
  %3191 = vmatpush1.bf16.msra.mxu0 0
  %3192 = vmatprep.subr.bf16.mxu0 0
  %3193 = vmatpush1.bf16.msra.mxu0 0
  %3194 = vmatprep.subr.bf16.mxu0 0
  %3195 = vmatpush1.bf16.msra.mxu0 0
  %3196 = vmatprep.subr.bf16.mxu0 0
  %3197 = vmatpush1.bf16.msra.mxu0 0
  %3198 = vmatprep.subr.bf16.mxu0 0
  %3199 = vmatpush1.bf16.msra.mxu0 0
  %3200 = vmatprep.subr.bf16.mxu0 0
  %3201 = vmatpush1.bf16.msra.mxu0 0
  %3202 = vmatprep.mubr.bf16.mxu0 0
  %3203 = vmatmul.mubr.bf16.gmra.mrb[0].mxu0 %v3095
  %v3204 = vpop.f32.mrb[0].mxu0
  %v3205 = vadd.f32 %v3120, %v3204
  %v3206 = vpop.f32.mrb[0].mxu0
  %v3207 = vpop.f32.mrb[0].mxu0
  %v3208 = vadd.f32 %v3120, %v3207
  %v3209 = vpop.f32.mrb[0].mxu0
  %3210 = vmatprep.mubr.bf16.mxu0 0
  %3211 = vmatmul.mubr.bf16.gmra.mrb[0].mxu0 %v3096
  %v3212 = vpop.f32.mrb[0].mxu0
  %v3213 = vadd.f32 %v3120, %v3212
  %v3214 = vpop.f32.mrb[0].mxu0
  %v3215 = vpop.f32.mrb[0].mxu0
  %v3216 = vadd.f32 %v3120, %v3215
  %v3217 = vpop.f32.mrb[0].mxu0
  %3218 = vmatprep.mubr.bf16.mxu0 0
  %3219 = vmatmul.mubr.bf16.gmra.mrb[0].mxu0 %v3097
  %v3220 = vpop.f32.mrb[0].mxu0
  %v3221 = vadd.f32 %v3120, %v3220
  %v3222 = vpop.f32.mrb[0].mxu0
  %v3223 = vpop.f32.mrb[0].mxu0
  %v3224 = vadd.f32 %v3120, %v3223
  %v3225 = vpop.f32.mrb[0].mxu0
  %3226 = vmatprep.mubr.bf16.mxu0 0
  %3227 = vmatmul.mubr.bf16.gmra.mrb[0].mxu0 %v3098
  %v3228 = vpop.f32.mrb[0].mxu0
  %v3229 = vadd.f32 %v3120, %v3228
  %v3230 = vpop.f32.mrb[0].mxu0
  %v3231 = vpop.f32.mrb[0].mxu0
  %v3232 = vadd.f32 %v3120, %v3231
  %v3233 = vpop.f32.mrb[0].mxu0
  %3234 = vdwg.mxu0
  %v3235 = vmax.f32 %v3205, 0.0
  %v3236 = vmax.f32 %v3208, 0.0
  %v3237 = vmax.f32 %v3213, 0.0
  %v3238 = vmax.f32 %v3216, 0.0
  %v3239 = vmax.f32 %v3221, 0.0
  %v3240 = vmax.f32 %v3224, 0.0
  %v3241 = vmax.f32 %v3229, 0.0
  %v3242 = vmax.f32 %v3232, 0.0
  %v3243 = vpack.c.bf16 %v3236, %v3235
  %v3244 = vpack.c.bf16 %v3238, %v3237
  %v3245 = vpack.c.bf16 %v3240, %v3239
  %v3246 = vpack.c.bf16 %v3242, %v3241
  %v3247 = vld [vmem:[%s5] sm:$0xf]
  %v3248 = vld [vmem:[%s5 + $0x4] sm:$0xf]
  %v3249 = vld [vmem:[%s5 + $0x8] sm:$0xf]
  %v3250 = vld [vmem:[%s5 + $0xc] sm:$0xf]
  %v3251 = vld [vmem:[%s5 + $0x10] sm:$0xf]
  %v3252 = vld [vmem:[%s5 + $0x14] sm:$0xf]
  %v3253 = vld [vmem:[%s5 + $0x18] sm:$0xf]
  %v3254 = vld [vmem:[%s5 + $0x1c] sm:$0xf]
  %v3255 = vld [vmem:[%s5 + $0x20] sm:$0xf]
  %v3256 = vld [vmem:[%s5 + $0x24] sm:$0xf]
  %v3257 = vld [vmem:[%s5 + $0x28] sm:$0xf]
  %v3258 = vld [vmem:[%s5 + $0x2c] sm:$0xf]
  %v3259 = vld [vmem:[%s5 + $0x30] sm:$0xf]
  %v3260 = vld [vmem:[%s5 + $0x34] sm:$0xf]
  %v3261 = vld [vmem:[%s5 + $0x38] sm:$0xf]
  %v3262 = vld [vmem:[%s5 + $0x3c] sm:$0xf]
  %v3263 = vld [vmem:[%s6] sm:$0x1]
  %v3265 = vlaneseq
  %v3266 = vshrl.u32 %v3265, 7
  %v3267 = vsub.s32 0, %v3266
  %v3268 = vrot.slane %v3263, %v3267
  %v3286 = vunpack.c.l.b16 %v3247
  %v3287 = vunpack.c.l.b16 %v3248
  %v3288 = vunpack.c.l.b16 %v3249
  %v3289 = vunpack.c.l.b16 %v3250
  %v3290 = vunpack.c.l.b16 %v3251
  %v3291 = vunpack.c.l.b16 %v3252
  %v3292 = vunpack.c.l.b16 %v3253
  %v3293 = vunpack.c.l.b16 %v3254
  %v3294 = vunpack.c.l.b16 %v3255
  %v3295 = vunpack.c.l.b16 %v3256
  %v3296 = vunpack.c.l.b16 %v3257
  %v3297 = vunpack.c.l.b16 %v3258
  %v3298 = vunpack.c.l.b16 %v3259
  %v3299 = vunpack.c.l.b16 %v3260
  %v3300 = vunpack.c.l.b16 %v3261
  %v3301 = vunpack.c.l.b16 %v3262
  %v3302 = vpack.c.b16 %v3287, %v3286
  %v3303 = vpack.c.b16 %v3289, %v3288
  %v3304 = vpack.c.b16 %v3291, %v3290
  %v3305 = vpack.c.b16 %v3293, %v3292
  %v3306 = vpack.c.b16 %v3295, %v3294
  %v3307 = vpack.c.b16 %v3297, %v3296
  %v3308 = vpack.c.b16 %v3299, %v3298
  %v3309 = vpack.c.b16 %v3301, %v3300
  %3318 = vmatprep.subr.bf16.mxu0 0
  %3319 = vmatpush1.bf16.msra.mxu0 %v3302
  %3320 = vmatprep.subr.bf16.mxu0 0
  %3321 = vmatpush1.bf16.msra.mxu0 %v3303
  %3322 = vmatprep.subr.bf16.mxu0 0
  %3323 = vmatpush1.bf16.msra.mxu0 %v3304
  %3324 = vmatprep.subr.bf16.mxu0 0
  %3325 = vmatpush1.bf16.msra.mxu0 %v3305
  %3326 = vmatprep.subr.bf16.mxu0 0
  %3327 = vmatpush1.bf16.msra.mxu0 %v3306
  %3328 = vmatprep.subr.bf16.mxu0 0
  %3329 = vmatpush1.bf16.msra.mxu0 %v3307
  %3330 = vmatprep.subr.bf16.mxu0 0
  %3331 = vmatpush1.bf16.msra.mxu0 %v3308
  %3332 = vmatprep.subr.bf16.mxu0 0
  %3333 = vmatpush1.bf16.msra.mxu0 %v3309
  %3334 = vmatprep.subr.bf16.mxu0 0
  %3335 = vmatpush1.bf16.msra.mxu0 0
  %3336 = vmatprep.subr.bf16.mxu0 0
  %3337 = vmatpush1.bf16.msra.mxu0 0
  %3338 = vmatprep.subr.bf16.mxu0 0
  %3339 = vmatpush1.bf16.msra.mxu0 0
  %3340 = vmatprep.subr.bf16.mxu0 0
  %3341 = vmatpush1.bf16.msra.mxu0 0
  %3342 = vmatprep.subr.bf16.mxu0 0
  %3343 = vmatpush1.bf16.msra.mxu0 0
  %3344 = vmatprep.subr.bf16.mxu0 0
  %3345 = vmatpush1.bf16.msra.mxu0 0
  %3346 = vmatprep.subr.bf16.mxu0 0
  %3347 = vmatpush1.bf16.msra.mxu0 0
  %3348 = vmatprep.subr.bf16.mxu0 0
  %3349 = vmatpush1.bf16.msra.mxu0 0
  %3350 = vmatprep.mubr.bf16.mxu0 0
  %3351 = vmatmul.mubr.bf16.gmra.mrb[0].mxu0 %v3243
  %v3352 = vpop.f32.mrb[0].mxu0
  %v3353 = vadd.f32 %v3268, %v3352
  %v3354 = vpop.f32.mrb[0].mxu0
  %v3355 = vpop.f32.mrb[0].mxu0
  %v3356 = vadd.f32 %v3268, %v3355
  %v3357 = vpop.f32.mrb[0].mxu0
  %3358 = vmatprep.mubr.bf16.mxu0 0
  %3359 = vmatmul.mubr.bf16.gmra.mrb[0].mxu0 %v3244
  %v3360 = vpop.f32.mrb[0].mxu0
  %v3361 = vadd.f32 %v3268, %v3360
  %v3362 = vpop.f32.mrb[0].mxu0
  %v3363 = vpop.f32.mrb[0].mxu0
  %v3364 = vadd.f32 %v3268, %v3363
  %v3365 = vpop.f32.mrb[0].mxu0
  %3366 = vmatprep.mubr.bf16.mxu0 0
  %3367 = vmatmul.mubr.bf16.gmra.mrb[0].mxu0 %v3245
  %v3368 = vpop.f32.mrb[0].mxu0
  %v3369 = vadd.f32 %v3268, %v3368
  %v3370 = vpop.f32.mrb[0].mxu0
  %v3371 = vpop.f32.mrb[0].mxu0
  %v3372 = vadd.f32 %v3268, %v3371
  %v3373 = vpop.f32.mrb[0].mxu0
  %3374 = vmatprep.mubr.bf16.mxu0 0
  %3375 = vmatmul.mubr.bf16.gmra.mrb[0].mxu0 %v3246
  %v3376 = vpop.f32.mrb[0].mxu0
  %v3377 = vadd.f32 %v3268, %v3376
  %v3378 = vpop.f32.mrb[0].mxu0
  %v3379 = vpop.f32.mrb[0].mxu0
  %v3380 = vadd.f32 %v3268, %v3379
  %v3381 = vpop.f32.mrb[0].mxu0
  %3382 = vdwg.mxu0
  %3383 = vst [vmem:[%s7] sm:$0xff] %v3353
  %3384 = vst [vmem:[%s7 + $0x8] sm:$0xff] %v3356
  %3385 = vst [vmem:[%s7 + $0x10] sm:$0xff] %v3361
  %3386 = vst [vmem:[%s7 + $0x18] sm:$0xff] %v3364
  %3387 = vst [vmem:[%s7 + $0x20] sm:$0xff] %v3369
  %3388 = vst [vmem:[%s7 + $0x28] sm:$0xff] %v3372
  %3389 = vst [vmem:[%s7 + $0x30] sm:$0xff] %v3377
  %3390 = vst [vmem:[%s7 + $0x38] sm:$0xff] %v3380
  // Predicated region
  $region30: #{net_forward.5} parent=0 // pred_check
    _
  $region31: #{net_forward.5} parent=0 // pred_check_branch
    %3392 = sbr.rel (0) target = $region33
  $region32: #{net_forward.5} parent=0 // pred_region
    _
  $region33: #{net_forward.5} parent=0 // pred_fallthru
    _
  // Predicated region
  $region34: #{net_forward.5} parent=0 // pred_check
    _
  $region35: #{net_forward.5} parent=0 // pred_check_branch
    %3394 = sbr.rel (0) target = $region37
  $region36: #{net_forward.5} parent=0 // pred_region
    _
  $region37: #{net_forward.5} parent=0 // pred_fallthru
    _

</llo_original>
